<compile_context>
chip_gen: v5e
topology: v5e:2x2
jax: 0.10.0
libtpu: 0.0.40
codegen_flags: <defaults>
</compile_context>

<pallas_src>
import functools

import jax
import jax.numpy as jnp
from jax import lax
from jax.experimental import pallas as pl
from jax.experimental.pallas import tpu as pltpu


def _round_up(a, b):
    return (a + b - 1) // b * b


# ---------------------------------------------------------------------------
# Kernel A: fused im2col conv (9 shifted dots) + masked per-tile channel stats
# ---------------------------------------------------------------------------
def _conv_stats_kernel(xm_ref, xh_ref, w_ref, mask_ref,
                       y_ref, psum_ref, psq_ref, *, offs):
    tm, cout_p = y_ref.shape
    # rows [i*tm, i*tm + tm + halo) of the flattened padded input, in VMEM.
    xfull = jnp.concatenate([xm_ref[...], xh_ref[...]], axis=0)   # (tm+halo, Cin) bf16

    acc = jnp.zeros((tm, cout_p), jnp.float32)
    for t, off in enumerate(offs):                 # static unroll over k*k taps
        acc = acc + jnp.dot(xfull[off:off + tm, :], w_ref[t],
                            preferred_element_type=jnp.float32)

    y_ref[...] = acc.astype(y_ref.dtype)           # bf16 intermediate to HBM

    # BatchNorm batch statistics over valid output positions only.
    m = mask_ref[...]                              # (tm, 1) f32, 0/1
    masked = acc * m
    psum_ref[0] = jnp.sum(masked, axis=0, keepdims=True)
    psq_ref[0] = jnp.sum(masked * acc, axis=0, keepdims=True)   # mask * y * y


# ---------------------------------------------------------------------------
# Kernel B: y * scale + shift (+ ReLU), scale/shift precomputed in the wrapper
# ---------------------------------------------------------------------------
def _bn_act_kernel(y_ref, scale_ref, shift_ref, o_ref, *, act):
    o = y_ref[...].astype(jnp.float32) * scale_ref[...] + shift_ref[...]
    if act:
        o = jnp.maximum(o, 0.0)
    o_ref[...] = o


# ---------------------------------------------------------------------------
# Wrapper
# ---------------------------------------------------------------------------
def conv2d_bn_relu(x, weight, gamma, beta, *, padding=1, dilation=1, act=True,
                   eps=1e-5, tm_target=512, compute_dtype=jnp.bfloat16):
    """Forward pass of the PyTorch Conv2D module. x: NCHW, weight: OIHW."""
    N, Cin, H, W = x.shape
    Cout, Cin2, kH, kW = weight.shape
    assert Cin2 == Cin and kH == kW, "square kernels only"
    k, d, p = kH, dilation, padding
    Ho = H + 2 * p - d * (k - 1)
    Wo = W + 2 * p - d * (k - 1)
    Hp, Wp = H + 2 * p, W + 2 * p
    assert Ho > 0 and Wo > 0

    # NCHW -> NHWC (channels = lane dim), spatial zero-pad, bf16 operands.
    x_nhwc = jnp.transpose(x, (0, 2, 3, 1))
    xp = jnp.pad(x_nhwc, ((0, 0), (p, p), (p, p), (0, 0))).astype(compute_dtype)

    # Flattened padded slab + tiling parameters.
    M0 = N * Hp * Wp                                # rows actually produced
    max_off = (k - 1) * d * (Wp + 1)                # largest tap shift (elements)
    halo = _round_up(max(max_off, 8), 8)            # extra rows needed per tile
    tm = min(tm_target, _round_up(M0, 8))
    tm = _round_up(tm, halo)                        # halo must divide tm
    M = _round_up(M0, tm)
    G = M // tm

    X = xp.reshape(M0, Cin)
    X = jnp.pad(X, ((0, M + halo - M0), (0, 0)))    # zero tail: pad rows + halo

    # Weights: OIHW -> (k*k, Cin, Cout_p) with lane-dense (padded) Cout.
    Cout_p = _round_up(Cout, 128)
    w_t = jnp.transpose(weight, (2, 3, 1, 0)).reshape(k * k, Cin, Cout)
    w_t = jnp.pad(w_t, ((0, 0), (0, 0), (0, Cout_p - Cout))).astype(compute_dtype)

    # Validity mask (1 on the Ho x Wo crop of each padded image) for the stats.
    mask = jnp.pad(jnp.ones((N, Ho, Wo), jnp.float32),
                   ((0, 0), (0, Hp - Ho), (0, Wp - Wo))).reshape(M0, 1)
    mask = jnp.pad(mask, ((0, M - M0), (0, 0)))

    # Per-tap flat offsets (python ints -> static slices inside the kernel).
    offs = tuple((ky * Wp + kx) * d for ky in range(k) for kx in range(k))

    cparams = pltpu.CompilerParams(dimension_semantics=("parallel",),
                                   vmem_limit_bytes=32 * 1024 * 1024)

    # --- Pallas call 1: conv + per-tile partial channel statistics ----------
    kern_a = functools.partial(_conv_stats_kernel, offs=offs)
    y, psum, psq = pl.pallas_call(
        kern_a,
        out_shape=(jax.ShapeDtypeStruct((M, Cout_p), compute_dtype),
                   jax.ShapeDtypeStruct((G, 1, Cout_p), jnp.float32),
                   jax.ShapeDtypeStruct((G, 1, Cout_p), jnp.float32)),
        grid_spec=pltpu.PrefetchScalarGridSpec(
            num_scalar_prefetch=0, grid=(G,),
            in_specs=[
                pl.BlockSpec((tm, Cin), lambda i: (i, 0)),                      # main rows
                pl.BlockSpec((halo, Cin), lambda i: ((i + 1) * (tm // halo), 0)),  # halo rows
                pl.BlockSpec((k * k, Cin, Cout_p), lambda i: (0, 0, 0)),        # weights
                pl.BlockSpec((tm, 1), lambda i: (i, 0)),                        # stats mask
            ],
            out_specs=[
                pl.BlockSpec((tm, Cout_p), lambda i: (i, 0)),
                pl.BlockSpec((1, 1, Cout_p), lambda i: (i, 0, 0)),
                pl.BlockSpec((1, 1, Cout_p), lambda i: (i, 0, 0)),
            ]),
        compiler_params=cparams,
    )(X, X, w_t, mask)

    # --- Tiny (1, Cout) BN parameter math in the wrapper ---------------------
    cnt = float(N * Ho * Wo)
    s = jnp.sum(psum, axis=0)                       # (1, Cout_p)
    sq = jnp.sum(psq, axis=0)
    mean = s / cnt
    # E[y^2]-E[y]^2 can go slightly negative from cancellation; clamp.
    var = jnp.maximum(sq / cnt - mean * mean, 0.0)
    inv = lax.rsqrt(var + eps)
    gamma_p = jnp.pad(gamma.astype(jnp.float32).reshape(1, Cout),
                      ((0, 0), (0, Cout_p - Cout)))
    beta_p = jnp.pad(beta.astype(jnp.float32).reshape(1, Cout),
                     ((0, 0), (0, Cout_p - Cout)))
    scale = gamma_p * inv
    shift = beta_p - mean * scale

    # --- Pallas call 2: fused normalize-affine-ReLU --------------------------
    kern_b = functools.partial(_bn_act_kernel, act=act)
    o = pl.pallas_call(
        kern_b,
        out_shape=jax.ShapeDtypeStruct((M, Cout_p), jnp.float32),
        grid_spec=pltpu.PrefetchScalarGridSpec(
            num_scalar_prefetch=0, grid=(G,),
            in_specs=[pl.BlockSpec((tm, Cout_p), lambda i: (i, 0)),
                      pl.BlockSpec((1, Cout_p), lambda i: (0, 0)),
                      pl.BlockSpec((1, Cout_p), lambda i: (0, 0))],
            out_specs=pl.BlockSpec((tm, Cout_p), lambda i: (i, 0))),
        compiler_params=cparams,
    )(y, scale, shift)

    # Crop padded resolution / padded channels, back to NCHW.
    out = o[:M0].reshape(N, Hp, Wp, Cout_p)[:, :Ho, :Wo, :Cout]
    # TODO(synk): BatchNorm2d running_mean/running_var buffer updates (a
    # training-time side effect, not part of the returned activation) are not
    # reproduced here.
    return jnp.transpose(out, (0, 3, 1, 2))


# ---------------------------------------------------------------------------
# Pure-JAX reference (PyTorch Conv2d + BatchNorm2d(training) + ReLU semantics)
# ---------------------------------------------------------------------------
def _reference(x, weight, gamma, beta, *, padding, dilation, act, eps):
    y = lax.conv_general_dilated(
        x.astype(jnp.float32), weight.astype(jnp.float32),
        window_strides=(1, 1),
        padding=[(padding, padding), (padding, padding)],
        rhs_dilation=(dilation, dilation),
        dimension_numbers=("NCHW", "OIHW", "NCHW"))
    mean = y.mean(axis=(0, 2, 3), keepdims=True)
    var = y.var(axis=(0, 2, 3), keepdims=True)      # biased, as BN training uses
    yn = (y - mean) * lax.rsqrt(var + eps)
    yn = yn * gamma.reshape(1, -1, 1, 1) + beta.reshape(1, -1, 1, 1)
    if act:
        yn = jnp.maximum(yn, 0.0)
    return yn


if __name__ == "__main__":
    key = jax.random.PRNGKey(0)
    k_x, k_w = jax.random.split(key)

    N, in_c, out_c, H, W = 2, 4, 8, 16, 16
    x = jax.random.normal(k_x, (N, in_c, H, W), dtype=jnp.float32)
    weight = 0.1 * jax.random.normal(k_w, (out_c, in_c, 3, 3), dtype=jnp.float32)
    gamma = jnp.ones((out_c,), dtype=jnp.float32)   # PyTorch BN default init
    beta = jnp.zeros((out_c,), dtype=jnp.float32)

    out = conv2d_bn_relu(x, weight, gamma, beta,
                         padding=1, dilation=1, act=True)
    out = jax.block_until_ready(out)

    # Compare against the f32 reference with bf16-rounded inputs so the check
    # isolates kernel math from the intentional bf16 operand quantization.
    x_q = x.astype(jnp.bfloat16).astype(jnp.float32)
    w_q = weight.astype(jnp.bfloat16).astype(jnp.float32)
    ref = _reference(x_q, w_q, gamma, beta,
                     padding=1, dilation=1, act=True, eps=1e-5)

    assert out.shape == (N, out_c, H, W), out.shape
    max_err = float(jnp.max(jnp.abs(out - ref)))
    assert jnp.allclose(out, ref, atol=2e-2, rtol=2e-2), max_err

    print("KERNEL_OK")
</pallas_src>

<mosaic_0001>
module attributes {stable_mosaic.version = 11 : i64} {
  func.func @_conv_stats_kernel(%arg0: i32, %arg1: memref<520x4xbf16, #tpu.memory_space<vmem>>, %arg2: memref<40x4xbf16, #tpu.memory_space<vmem>>, %arg3: memref<9x4x128xbf16, #tpu.memory_space<vmem>>, %arg4: memref<520x1xf32, #tpu.memory_space<vmem>>, %arg5: memref<520x128xbf16, #tpu.memory_space<vmem>>, %arg6: memref<1x1x128xf32, #tpu.memory_space<vmem>>, %arg7: memref<1x1x128xf32, #tpu.memory_space<vmem>>) attributes {dimension_semantics = [#tpu.dimension_semantics<parallel>], iteration_bounds = array<i64: 2>, scalar_prefetch = 0 : i64, scratch_operands = 0 : i64, tpu.core_type = #tpu.core_type<tc>, window_params = [{transform_indices = @transform_0, window_bounds = array<i64: 520, 4>}, {transform_indices = @transform_1, window_bounds = array<i64: 40, 4>}, {pipeline_mode = #tpu.pipeline_mode<synchronous>, transform_indices = @transform_2, window_bounds = array<i64: 9, 4, 128>}, {transform_indices = @transform_3, window_bounds = array<i64: 520, 1>}, {transform_indices = @transform_4, window_bounds = array<i64: 520, 128>}, {transform_indices = @transform_5, window_bounds = array<i64: 1, 1, 128>}, {transform_indices = @transform_6, window_bounds = array<i64: 1, 1, 128>}]} {
    %c0 = arith.constant 0 : index
    %c0_0 = arith.constant 0 : index
    %0 = vector.load %arg1[%c0, %c0_0] : memref<520x4xbf16, #tpu.memory_space<vmem>>, vector<520x4xbf16>
    %c0_1 = arith.constant 0 : index
    %c0_2 = arith.constant 0 : index
    %1 = vector.load %arg2[%c0_1, %c0_2] : memref<40x4xbf16, #tpu.memory_space<vmem>>, vector<40x4xbf16>
    %2 = tpu.concatenate %0, %1 in 0 : vector<520x4xbf16>, vector<40x4xbf16> -> vector<560x4xbf16>
    %cst = arith.constant 0.000000e+00 : f32
    %3 = vector.broadcast %cst : f32 to vector<520x128xf32>
    %4 = vector.extract_strided_slice %2 {offsets = [0, 0], sizes = [520, 4], strides = [1, 1]} : vector<560x4xbf16> to vector<520x4xbf16>
    %c0_3 = arith.constant 0 : index
    %c0_4 = arith.constant 0 : index
    %c0_5 = arith.constant 0 : index
    %5 = vector.load %arg3[%c0_3, %c0_4, %c0_5] : memref<9x4x128xbf16, #tpu.memory_space<vmem>>, vector<1x4x128xbf16>
    %6 = vector.shape_cast %5 : vector<1x4x128xbf16> to vector<4x128xbf16>
    %cst_6 = arith.constant dense<0.000000e+00> : vector<520x128xf32>
    %7 = tpu.matmul %4, %6, %cst_6 {dimension_numbers = #tpu.dot_dimension_numbers<[1], [0], [0], [1], [0, 0, 1, 1], [], []>} : vector<520x4xbf16>, vector<4x128xbf16>, vector<520x128xf32> -> vector<520x128xf32>
    %8 = arith.addf %3, %7 : vector<520x128xf32>
    %9 = vector.extract_strided_slice %2 {offsets = [1, 0], sizes = [520, 4], strides = [1, 1]} : vector<560x4xbf16> to vector<520x4xbf16>
    %c1 = arith.constant 1 : index
    %c0_7 = arith.constant 0 : index
    %c0_8 = arith.constant 0 : index
    %10 = vector.load %arg3[%c1, %c0_7, %c0_8] : memref<9x4x128xbf16, #tpu.memory_space<vmem>>, vector<1x4x128xbf16>
    %11 = vector.shape_cast %10 : vector<1x4x128xbf16> to vector<4x128xbf16>
    %cst_9 = arith.constant dense<0.000000e+00> : vector<520x128xf32>
    %12 = tpu.matmul %9, %11, %cst_9 {dimension_numbers = #tpu.dot_dimension_numbers<[1], [0], [0], [1], [0, 0, 1, 1], [], []>} : vector<520x4xbf16>, vector<4x128xbf16>, vector<520x128xf32> -> vector<520x128xf32>
    %13 = arith.addf %8, %12 : vector<520x128xf32>
    %14 = vector.extract_strided_slice %2 {offsets = [2, 0], sizes = [520, 4], strides = [1, 1]} : vector<560x4xbf16> to vector<520x4xbf16>
    %c2 = arith.constant 2 : index
    %c0_10 = arith.constant 0 : index
    %c0_11 = arith.constant 0 : index
    %15 = vector.load %arg3[%c2, %c0_10, %c0_11] : memref<9x4x128xbf16, #tpu.memory_space<vmem>>, vector<1x4x128xbf16>
    %16 = vector.shape_cast %15 : vector<1x4x128xbf16> to vector<4x128xbf16>
    %cst_12 = arith.constant dense<0.000000e+00> : vector<520x128xf32>
    %17 = tpu.matmul %14, %16, %cst_12 {dimension_numbers = #tpu.dot_dimension_numbers<[1], [0], [0], [1], [0, 0, 1, 1], [], []>} : vector<520x4xbf16>, vector<4x128xbf16>, vector<520x128xf32> -> vector<520x128xf32>
    %18 = arith.addf %13, %17 : vector<520x128xf32>
    %19 = vector.extract_strided_slice %2 {offsets = [18, 0], sizes = [520, 4], strides = [1, 1]} : vector<560x4xbf16> to vector<520x4xbf16>
    %c3 = arith.constant 3 : index
    %c0_13 = arith.constant 0 : index
    %c0_14 = arith.constant 0 : index
    %20 = vector.load %arg3[%c3, %c0_13, %c0_14] : memref<9x4x128xbf16, #tpu.memory_space<vmem>>, vector<1x4x128xbf16>
    %21 = vector.shape_cast %20 : vector<1x4x128xbf16> to vector<4x128xbf16>
    %cst_15 = arith.constant dense<0.000000e+00> : vector<520x128xf32>
    %22 = tpu.matmul %19, %21, %cst_15 {dimension_numbers = #tpu.dot_dimension_numbers<[1], [0], [0], [1], [0, 0, 1, 1], [], []>} : vector<520x4xbf16>, vector<4x128xbf16>, vector<520x128xf32> -> vector<520x128xf32>
    %23 = arith.addf %18, %22 : vector<520x128xf32>
    %24 = vector.extract_strided_slice %2 {offsets = [19, 0], sizes = [520, 4], strides = [1, 1]} : vector<560x4xbf16> to vector<520x4xbf16>
    %c4 = arith.constant 4 : index
    %c0_16 = arith.constant 0 : index
    %c0_17 = arith.constant 0 : index
    %25 = vector.load %arg3[%c4, %c0_16, %c0_17] : memref<9x4x128xbf16, #tpu.memory_space<vmem>>, vector<1x4x128xbf16>
    %26 = vector.shape_cast %25 : vector<1x4x128xbf16> to vector<4x128xbf16>
    %cst_18 = arith.constant dense<0.000000e+00> : vector<520x128xf32>
    %27 = tpu.matmul %24, %26, %cst_18 {dimension_numbers = #tpu.dot_dimension_numbers<[1], [0], [0], [1], [0, 0, 1, 1], [], []>} : vector<520x4xbf16>, vector<4x128xbf16>, vector<520x128xf32> -> vector<520x128xf32>
    %28 = arith.addf %23, %27 : vector<520x128xf32>
    %29 = vector.extract_strided_slice %2 {offsets = [20, 0], sizes = [520, 4], strides = [1, 1]} : vector<560x4xbf16> to vector<520x4xbf16>
    %c5 = arith.constant 5 : index
    %c0_19 = arith.constant 0 : index
    %c0_20 = arith.constant 0 : index
    %30 = vector.load %arg3[%c5, %c0_19, %c0_20] : memref<9x4x128xbf16, #tpu.memory_space<vmem>>, vector<1x4x128xbf16>
    %31 = vector.shape_cast %30 : vector<1x4x128xbf16> to vector<4x128xbf16>
    %cst_21 = arith.constant dense<0.000000e+00> : vector<520x128xf32>
    %32 = tpu.matmul %29, %31, %cst_21 {dimension_numbers = #tpu.dot_dimension_numbers<[1], [0], [0], [1], [0, 0, 1, 1], [], []>} : vector<520x4xbf16>, vector<4x128xbf16>, vector<520x128xf32> -> vector<520x128xf32>
    %33 = arith.addf %28, %32 : vector<520x128xf32>
    %34 = vector.extract_strided_slice %2 {offsets = [36, 0], sizes = [520, 4], strides = [1, 1]} : vector<560x4xbf16> to vector<520x4xbf16>
    %c6 = arith.constant 6 : index
    %c0_22 = arith.constant 0 : index
    %c0_23 = arith.constant 0 : index
    %35 = vector.load %arg3[%c6, %c0_22, %c0_23] : memref<9x4x128xbf16, #tpu.memory_space<vmem>>, vector<1x4x128xbf16>
    %36 = vector.shape_cast %35 : vector<1x4x128xbf16> to vector<4x128xbf16>
    %cst_24 = arith.constant dense<0.000000e+00> : vector<520x128xf32>
    %37 = tpu.matmul %34, %36, %cst_24 {dimension_numbers = #tpu.dot_dimension_numbers<[1], [0], [0], [1], [0, 0, 1, 1], [], []>} : vector<520x4xbf16>, vector<4x128xbf16>, vector<520x128xf32> -> vector<520x128xf32>
    %38 = arith.addf %33, %37 : vector<520x128xf32>
    %39 = vector.extract_strided_slice %2 {offsets = [37, 0], sizes = [520, 4], strides = [1, 1]} : vector<560x4xbf16> to vector<520x4xbf16>
    %c7 = arith.constant 7 : index
    %c0_25 = arith.constant 0 : index
    %c0_26 = arith.constant 0 : index
    %40 = vector.load %arg3[%c7, %c0_25, %c0_26] : memref<9x4x128xbf16, #tpu.memory_space<vmem>>, vector<1x4x128xbf16>
    %41 = vector.shape_cast %40 : vector<1x4x128xbf16> to vector<4x128xbf16>
    %cst_27 = arith.constant dense<0.000000e+00> : vector<520x128xf32>
    %42 = tpu.matmul %39, %41, %cst_27 {dimension_numbers = #tpu.dot_dimension_numbers<[1], [0], [0], [1], [0, 0, 1, 1], [], []>} : vector<520x4xbf16>, vector<4x128xbf16>, vector<520x128xf32> -> vector<520x128xf32>
    %43 = arith.addf %38, %42 : vector<520x128xf32>
    %44 = vector.extract_strided_slice %2 {offsets = [38, 0], sizes = [520, 4], strides = [1, 1]} : vector<560x4xbf16> to vector<520x4xbf16>
    %c8 = arith.constant 8 : index
    %c0_28 = arith.constant 0 : index
    %c0_29 = arith.constant 0 : index
    %45 = vector.load %arg3[%c8, %c0_28, %c0_29] : memref<9x4x128xbf16, #tpu.memory_space<vmem>>, vector<1x4x128xbf16>
    %46 = vector.shape_cast %45 : vector<1x4x128xbf16> to vector<4x128xbf16>
    %cst_30 = arith.constant dense<0.000000e+00> : vector<520x128xf32>
    %47 = tpu.matmul %44, %46, %cst_30 {dimension_numbers = #tpu.dot_dimension_numbers<[1], [0], [0], [1], [0, 0, 1, 1], [], []>} : vector<520x4xbf16>, vector<4x128xbf16>, vector<520x128xf32> -> vector<520x128xf32>
    %48 = arith.addf %43, %47 : vector<520x128xf32>
    %49 = arith.truncf %48 : vector<520x128xf32> to vector<520x128xbf16>
    %c0_31 = arith.constant 0 : index
    %c0_32 = arith.constant 0 : index
    %50 = vector.load %arg5[%c0_31, %c0_32] : memref<520x128xbf16, #tpu.memory_space<vmem>>, vector<520x128xbf16>
    tpu.vector_store %arg5[%c0_31, %c0_32], %49 {strides = array<i32>} : memref<520x128xbf16, #tpu.memory_space<vmem>>, vector<520x128xbf16>,
    %c0_33 = arith.constant 0 : index
    %c0_34 = arith.constant 0 : index
    %51 = vector.load %arg4[%c0_33, %c0_34] : memref<520x1xf32, #tpu.memory_space<vmem>>, vector<520x1xf32>
    %52 = vector.broadcast %51 : vector<520x1xf32> to vector<520x128xf32>
    %53 = arith.mulf %48, %52 : vector<520x128xf32>
    %cst_35 = arith.constant dense<0.000000e+00> : vector<128xf32>
    %54 = vector.multi_reduction <add>, %53, %cst_35 [0] : vector<520x128xf32> to vector<128xf32>
    %55 = vector.shape_cast %54 : vector<128xf32> to vector<1x128xf32>
    %c0_36 = arith.constant 0 : index
    %c0_37 = arith.constant 0 : index
    %c0_38 = arith.constant 0 : index
    %56 = vector.load %arg6[%c0_36, %c0_37, %c0_38] : memref<1x1x128xf32, #tpu.memory_space<vmem>>, vector<1x1x128xf32>
    %57 = vector.shape_cast %56 : vector<1x1x128xf32> to vector<1x128xf32>
    %58 = vector.shape_cast %55 : vector<1x128xf32> to vector<1x1x128xf32>
    tpu.vector_store %arg6[%c0_36, %c0_37, %c0_38], %58 {strides = array<i32>} : memref<1x1x128xf32, #tpu.memory_space<vmem>>, vector<1x1x128xf32>,
    %59 = arith.mulf %53, %48 : vector<520x128xf32>
    %cst_39 = arith.constant dense<0.000000e+00> : vector<128xf32>
    %60 = vector.multi_reduction <add>, %59, %cst_39 [0] : vector<520x128xf32> to vector<128xf32>
    %61 = vector.shape_cast %60 : vector<128xf32> to vector<1x128xf32>
    %c0_40 = arith.constant 0 : index
    %c0_41 = arith.constant 0 : index
    %c0_42 = arith.constant 0 : index
    %62 = vector.load %arg7[%c0_40, %c0_41, %c0_42] : memref<1x1x128xf32, #tpu.memory_space<vmem>>, vector<1x1x128xf32>
    %63 = vector.shape_cast %62 : vector<1x1x128xf32> to vector<1x128xf32>
    %64 = vector.shape_cast %61 : vector<1x128xf32> to vector<1x1x128xf32>
    tpu.vector_store %arg7[%c0_40, %c0_41, %c0_42], %64 {strides = array<i32>} : memref<1x1x128xf32, #tpu.memory_space<vmem>>, vector<1x1x128xf32>,
    return
  }
  func.func @transform_0(%arg0: i32) -> (i32, i32) {
    %c0_i32 = arith.constant 0 : i32
    %c0_i32_0 = arith.constant 0 : i32
    return %arg0, %c0_i32 : i32, i32
  }
  func.func @transform_1(%arg0: i32) -> (i32, i32) {
    %c1_i32 = arith.constant 1 : i32
    %0 = arith.addi %arg0, %c1_i32 : i32
    %c13_i32 = arith.constant 13 : i32
    %1 = arith.muli %0, %c13_i32 : i32
    %c0_i32 = arith.constant 0 : i32
    %c0_i32_0 = arith.constant 0 : i32
    return %1, %c0_i32 : i32, i32
  }
  func.func @transform_2(%arg0: i32) -> (i32, i32, i32) {
    %c0_i32 = arith.constant 0 : i32
    %c0_i32_0 = arith.constant 0 : i32
    %c0_i32_1 = arith.constant 0 : i32
    %c0_i32_2 = arith.constant 0 : i32
    return %c0_i32, %c0_i32_0, %c0_i32_1 : i32, i32, i32
  }
  func.func @transform_3(%arg0: i32) -> (i32, i32) {
    %c0_i32 = arith.constant 0 : i32
    %c0_i32_0 = arith.constant 0 : i32
    return %arg0, %c0_i32 : i32, i32
  }
  func.func @transform_4(%arg0: i32) -> (i32, i32) {
    %c0_i32 = arith.constant 0 : i32
    %c0_i32_0 = arith.constant 0 : i32
    return %arg0, %c0_i32 : i32, i32
  }
  func.func @transform_5(%arg0: i32) -> (i32, i32, i32) {
    %c0_i32 = arith.constant 0 : i32
    %c0_i32_0 = arith.constant 0 : i32
    %c0_i32_1 = arith.constant 0 : i32
    return %arg0, %c0_i32, %c0_i32_0 : i32, i32, i32
  }
  func.func @transform_6(%arg0: i32) -> (i32, i32, i32) {
    %c0_i32 = arith.constant 0 : i32
    %c0_i32_0 = arith.constant 0 : i32
    %c0_i32_1 = arith.constant 0 : i32
    return %arg0, %c0_i32, %c0_i32_0 : i32, i32, i32
  }
}

</mosaic_0001>

<llo_original>
// kernel: tpu_custom_call.1
$region0: #{tpu_custom_call.1}
  #allocation0 [shape = 'u32[]', space=smem, size = 0x4, offset = 0x4, fixed_abs, tag = 'smem constant byte address 0x4 - core index']
  #allocation1 [shape = 'u32[72,128]{1,0:T(1,128)}', space=vmem, size = 0x9000, scoped, tag = 'internal scratch']
  %s0 = inlined_call_operand.vmem [shape: bf16[1080,4], index: 0, kind: input, shape index: {}]
  %s1 = inlined_call_operand.vmem [shape: bf16[1080,4], index: 1, kind: input, shape index: {}]
  %s2 = inlined_call_operand.vmem [shape: bf16[9,4,128], index: 2, kind: input, shape index: {}]
  %s3 = inlined_call_operand.vmem [shape: f32[1040,1], index: 3, kind: input, shape index: {}]
  %s4 = inlined_call_operand.hbm [shape: bf16[1040,128], index: 4, kind: output, shape index: {0}]
  %s5 = inlined_call_operand.hbm [shape: f32[2,1,128], index: 5, kind: output, shape index: {1}]
  %s6 = inlined_call_operand.hbm [shape: f32[2,1,128], index: 6, kind: output, shape index: {2}]
  %7 = xla_tuple %s4, %s5, %s6
  %s8 = sld [smem:[#allocation0]]
  $region65: #{tpu_custom_call.1} parent=0
    _
  %s10 = ssub.s32 1, %s8
  %s11 = scalar_select 0, %s10, %s8
  $region1: #{tpu_custom_call.1} parent=0
    #allocation2 [shape = 'u8[266240]{0}', space=vmem, size = 0x41000, scoped, tag = 'output window, operand 0']
    #allocation3 [shape = 's32[2]{0}', space=sflag, size = 0x8, scoped, tag = 'scoped memory for tpu_custom_call.1']
    #allocation4 [shape = 'u8[1024]{0}', space=vmem, size = 0x400, scoped, tag = 'output window, operand 1']
    #allocation5 [shape = 's32[2]{0}', space=sflag, size = 0x8, scoped, tag = 'scoped memory for tpu_custom_call.1']
    #allocation6 [shape = 'u8[1024]{0}', space=vmem, size = 0x400, scoped, tag = 'output window, operand 2']
    %12 = vsyncpa [#allocation3], 0
    %s13 = scalar_lea.sflag [#allocation3], 1
    %14 = vsyncpa %s13, 0
    %15 = vsyncpa [#allocation5], 0
    %s16 = scalar_lea.sflag [#allocation5], 1
    %17 = vsyncpa %s16, 0
    loop: start=0, step=1, limit=4
    $region2: #{tpu_custom_call.1} parent=1 // loop_pre_header
      _
    $region3: #{tpu_custom_call.1} parent=1 // loop_header
      %s19 = sphi 0, %s23
      %p20 = scmp.ge.s32.totalorder %s19, 4
      %s29 = sphi 0, %s31
      %s32 = sphi 0, %s29
      %s33 = sphi 0, %s32
      %s49 = sphi 0, %s33
      %s59 = sphi 0, %s61
      %s62 = sphi 0, %s59
      %s63 = sphi 0, %s62
      %s79 = sphi 0, %s63
      %s83 = sphi 0, %s83
      %s85 = sphi 0, %s83
      %s86 = sphi 0, %s85
      %s100 = sphi 0, %s86
      %s106 = sphi 0, %s108
      %s109 = sphi 0, %s106
      %s110 = sphi 0, %s109
      %s126 = sphi 0, %s110
      %s132 = sphi 0, %s134
      %s135 = sphi 0, %s132
      %s136 = sphi 0, %s135
      %s152 = sphi 0, %s136
      %s158 = sphi 0, %s160
      %s161 = sphi 0, %s158
      %s162 = sphi 0, %s161
      %s178 = sphi 0, %s162
      %s184 = sphi 0, %s186
      %s187 = sphi 0, %s184
      %s188 = sphi 0, %s187
      %s204 = sphi 0, %s188
    $region4: #{tpu_custom_call.1} parent=1 // loop_header_branch
      %22 = sbr.rel (%p20) target = $region8
    $region5: #{tpu_custom_call.1} parent=1 // loop_body
      %s24 = ssub.s32 %s19, 1
      %s25 = ssub.s32 %s19, 2
      %s26 = sadd.s32 %s19, 1
      %s27 = ssub.s32 %s19, %s26
      %p28 = scmp.eq.s32.totalorder %s27, 0
      %s30 = sadd.s32 %s29, 1
      %s31 = scalar_select %p28, %s29, %s30
      %p34 = pneg %p28
      %p35 = scmp.eq.s32.totalorder %s19, 1
      %p36 = por %p34, %p35
      %p37 = scmp.ne.s32.totalorder %s29, %s32
      %p38 = scmp.eq.s32.totalorder %s19, 0
      %p39 = por %p37, %p38
      %p40 = scmp.ne.s32.totalorder %s29, %s32
      %p41 = scmp.eq.s32.totalorder %s24, 1
      %p42 = por %p40, %p41
      %p43 = scmp.ne.s32.totalorder %s32, %s33
      %p44 = scmp.eq.s32.totalorder %s24, 0
      %p45 = por %p43, %p44
      %p46 = scmp.ne.s32.totalorder %s32, %s33
      %p47 = scmp.eq.s32.totalorder %s25, 1
      %p48 = por %p46, %p47
      %p50 = scmp.ne.s32.totalorder %s33, %s49
      %p51 = scmp.eq.s32.totalorder %s25, 0
      %p52 = por %p50, %p51
      %s53 = sadd.s32 %s19, 1
      %s54 = smul.u32 %s53, 13
      %s55 = sadd.s32 %s26, 1
      %s56 = smul.u32 %s55, 13
      %s57 = ssub.s32 %s54, %s56
      %p58 = scmp.eq.s32.totalorder %s57, 0
      %s60 = sadd.s32 %s59, 1
      %s61 = scalar_select %p58, %s59, %s60
      %p64 = pneg %p58
      %p65 = scmp.eq.s32.totalorder %s19, 1
      %p66 = por %p64, %p65
      %p67 = scmp.ne.s32.totalorder %s59, %s62
      %p68 = scmp.eq.s32.totalorder %s19, 0
      %p69 = por %p67, %p68
      %p70 = scmp.ne.s32.totalorder %s59, %s62
      %p71 = scmp.eq.s32.totalorder %s24, 1
      %p72 = por %p70, %p71
      %p73 = scmp.ne.s32.totalorder %s62, %s63
      %p74 = scmp.eq.s32.totalorder %s24, 0
      %p75 = por %p73, %p74
      %p76 = scmp.ne.s32.totalorder %s62, %s63
      %p77 = scmp.eq.s32.totalorder %s25, 1
      %p78 = por %p76, %p77
      %p80 = scmp.ne.s32.totalorder %s63, %s79
      %p81 = scmp.eq.s32.totalorder %s25, 0
      %p82 = por %p80, %p81
      %s84 = sadd.s32 %s83, 1
      %p87 = scmp.eq.s32.totalorder %s19, 1
      %p88 = scmp.ne.s32.totalorder %s83, %s85
      %p89 = scmp.eq.s32.totalorder %s19, 0
      %p90 = por %p88, %p89
      %p91 = scmp.ne.s32.totalorder %s83, %s85
      %p92 = scmp.eq.s32.totalorder %s24, 1
      %p93 = por %p91, %p92
      %p94 = scmp.ne.s32.totalorder %s85, %s86
      %p95 = scmp.eq.s32.totalorder %s24, 0
      %p96 = por %p94, %p95
      %p97 = scmp.ne.s32.totalorder %s85, %s86
      %p98 = scmp.eq.s32.totalorder %s25, 1
      %p99 = por %p97, %p98
      %p101 = scmp.ne.s32.totalorder %s86, %s100
      %p102 = scmp.eq.s32.totalorder %s25, 0
      %p103 = por %p101, %p102
      %s104 = ssub.s32 %s19, %s26
      %p105 = scmp.eq.s32.totalorder %s104, 0
      %s107 = sadd.s32 %s106, 1
      %s108 = scalar_select %p105, %s106, %s107
      %p111 = pneg %p105
      %p112 = scmp.eq.s32.totalorder %s19, 1
      %p113 = por %p111, %p112
      %p114 = scmp.ne.s32.totalorder %s106, %s109
      %p115 = scmp.eq.s32.totalorder %s19, 0
      %p116 = por %p114, %p115
      %p117 = scmp.ne.s32.totalorder %s106, %s109
      %p118 = scmp.eq.s32.totalorder %s24, 1
      %p119 = por %p117, %p118
      %p120 = scmp.ne.s32.totalorder %s109, %s110
      %p121 = scmp.eq.s32.totalorder %s24, 0
      %p122 = por %p120, %p121
      %p123 = scmp.ne.s32.totalorder %s109, %s110
      %p124 = scmp.eq.s32.totalorder %s25, 1
      %p125 = por %p123, %p124
      %p127 = scmp.ne.s32.totalorder %s110, %s126
      %p128 = scmp.eq.s32.totalorder %s25, 0
      %p129 = por %p127, %p128
      %s130 = ssub.s32 %s19, %s26
      %p131 = scmp.eq.s32.totalorder %s130, 0
      %s133 = sadd.s32 %s132, 1
      %s134 = scalar_select %p131, %s132, %s133
      %p137 = pneg %p131
      %p138 = scmp.eq.s32.totalorder %s19, 1
      %p139 = por %p137, %p138
      %p140 = scmp.ne.s32.totalorder %s132, %s135
      %p141 = scmp.eq.s32.totalorder %s19, 0
      %p142 = por %p140, %p141
      %p143 = scmp.ne.s32.totalorder %s132, %s135
      %p144 = scmp.eq.s32.totalorder %s24, 1
      %p145 = por %p143, %p144
      %p146 = scmp.ne.s32.totalorder %s135, %s136
      %p147 = scmp.eq.s32.totalorder %s24, 0
      %p148 = por %p146, %p147
      %p149 = scmp.ne.s32.totalorder %s135, %s136
      %p150 = scmp.eq.s32.totalorder %s25, 1
      %p151 = por %p149, %p150
      %p153 = scmp.ne.s32.totalorder %s136, %s152
      %p154 = scmp.eq.s32.totalorder %s25, 0
      %p155 = por %p153, %p154
      %s156 = ssub.s32 %s19, %s26
      %p157 = scmp.eq.s32.totalorder %s156, 0
      %s159 = sadd.s32 %s158, 1
      %s160 = scalar_select %p157, %s158, %s159
      %p163 = pneg %p157
      %p164 = scmp.eq.s32.totalorder %s19, 1
      %p165 = por %p163, %p164
      %p166 = scmp.ne.s32.totalorder %s158, %s161
      %p167 = scmp.eq.s32.totalorder %s19, 0
      %p168 = por %p166, %p167
      %p169 = scmp.ne.s32.totalorder %s158, %s161
      %p170 = scmp.eq.s32.totalorder %s24, 1
      %p171 = por %p169, %p170
      %p172 = scmp.ne.s32.totalorder %s161, %s162
      %p173 = scmp.eq.s32.totalorder %s24, 0
      %p174 = por %p172, %p173
      %p175 = scmp.ne.s32.totalorder %s161, %s162
      %p176 = scmp.eq.s32.totalorder %s25, 1
      %p177 = por %p175, %p176
      %p179 = scmp.ne.s32.totalorder %s162, %s178
      %p180 = scmp.eq.s32.totalorder %s25, 0
      %p181 = por %p179, %p180
      %s182 = ssub.s32 %s19, %s26
      %p183 = scmp.eq.s32.totalorder %s182, 0
      %s185 = sadd.s32 %s184, 1
      %s186 = scalar_select %p183, %s184, %s185
      %p189 = pneg %p183
      %p190 = scmp.eq.s32.totalorder %s19, 1
      %p191 = por %p189, %p190
      %p192 = scmp.ne.s32.totalorder %s184, %s187
      %p193 = scmp.eq.s32.totalorder %s19, 0
      %p194 = por %p192, %p193
      %p195 = scmp.ne.s32.totalorder %s184, %s187
      %p196 = scmp.eq.s32.totalorder %s24, 1
      %p197 = por %p195, %p196
      %p198 = scmp.ne.s32.totalorder %s187, %s188
      %p199 = scmp.eq.s32.totalorder %s24, 0
      %p200 = por %p198, %p199
      %p201 = scmp.ne.s32.totalorder %s187, %s188
      %p202 = scmp.eq.s32.totalorder %s25, 1
      %p203 = por %p201, %p202
      %p205 = scmp.ne.s32.totalorder %s188, %s204
      %p206 = scmp.eq.s32.totalorder %s25, 0
      %p207 = por %p205, %p206
      %p208 = scmp.le.s32.totalorder 1, %s19
      %p209 = scmp.lt.s32.totalorder %s19, 3
      %p210 = pnand %p208, %p209
      %p211 = pneg %p210
      // Predicated region
      $region9: #{tpu_custom_call.1} parent=5 // pred_check
        _
      $region10: #{tpu_custom_call.1} parent=5 // pred_check_branch
        %213 = sbr.rel (%p210) target = $region12
      $region11: #{tpu_custom_call.1} parent=5 // pred_region
        %s214 = ssub.s32 %s19, 1
        // Predicated region
        $region13: #{tpu_custom_call.1} parent=11 // pred_check
          %p215 = pneg %p96
        $region14: #{tpu_custom_call.1} parent=11 // pred_check_branch
          %217 = sbr.rel (%p215) target = $region16
        $region15: #{tpu_custom_call.1} parent=11 // pred_region
          _
        $region16: #{tpu_custom_call.1} parent=11 // pred_fallthru
          _
      $region12: #{tpu_custom_call.1} parent=5 // pred_fallthru
        _
      %p218 = scmp.lt.s32.totalorder %s19, 2
      // Predicated region
      $region17: #{tpu_custom_call.1} parent=5 // pred_check
        %p219 = pneg %p218
      $region18: #{tpu_custom_call.1} parent=5 // pred_check_branch
        %221 = sbr.rel (%p219) target = $region20
      $region19: #{tpu_custom_call.1} parent=5 // pred_region
        // Predicated region
        $region21: #{tpu_custom_call.1} parent=19 // pred_check
          %p222 = pneg %p39
        $region22: #{tpu_custom_call.1} parent=19 // pred_check_branch
          %224 = sbr.rel (%p222) target = $region24
        $region23: #{tpu_custom_call.1} parent=19 // pred_region
          %s225 = smul.u32 65, %s19
          %s226 = ssub.s32 135, %s225
          %p227 = scmp.lt.s32.totalorder %s226, 65
          %s228 = scalar_select %p227, %s226, 65
          %s229 = smul.u32 4, %s228
          %p230 = scmp.lt.s32.totalorder %s225, 134
          %s231 = scalar_select %p230, %s225, 134
          %s232 = smul.addr %s231, 4
          %s233 = scalar_lea.vmem %s0, %s232
          %s234 = smul.u32 65, %s19
          %s235 = ssub.s32 135, %s234
          %p236 = scmp.lt.s32.totalorder %s235, 65
          %s237 = scalar_select %p236, %s235, 65
          %s238 = smul.u32 4, %s237
        $region24: #{tpu_custom_call.1} parent=19 // pred_fallthru
          _
        // Predicated region
        $region25: #{tpu_custom_call.1} parent=19 // pred_check
          %p239 = pneg %p69
        $region26: #{tpu_custom_call.1} parent=19 // pred_check_branch
          %241 = sbr.rel (%p239) target = $region28
        $region27: #{tpu_custom_call.1} parent=19 // pred_region
          %s242 = sadd.s32 %s19, 1
          %s243 = smul.u32 %s242, 13
          %s244 = smul.u32 5, %s243
          %p245 = scmp.lt.s32.totalorder %s244, 134
          %s246 = scalar_select %p245, %s244, 134
          %s247 = smul.addr %s246, 4
          %s248 = scalar_lea.vmem %s1, %s247
          %s249 = sadd.s32 %s19, 1
          %s250 = smul.u32 %s249, 13
          %s251 = smul.u32 5, %s250
        $region28: #{tpu_custom_call.1} parent=19 // pred_fallthru
          _
        // Predicated region
        $region29: #{tpu_custom_call.1} parent=19 // pred_check
          %p252 = pneg %p116
        $region30: #{tpu_custom_call.1} parent=19 // pred_check_branch
          %254 = sbr.rel (%p252) target = $region32
        $region31: #{tpu_custom_call.1} parent=19 // pred_region
          %s255 = smul.u32 65, %s19
          %p256 = scmp.lt.s32.totalorder %s255, 129
          %s257 = scalar_select %p256, %s255, 129
          %s258 = smul.addr %s257, 8
          %s259 = scalar_lea.vmem %s3, %s258
          %s260 = smul.u32 65, %s19
        $region32: #{tpu_custom_call.1} parent=19 // pred_fallthru
          _
      $region20: #{tpu_custom_call.1} parent=5 // pred_fallthru
        _
      %p261 = scmp.le.s32.totalorder 1, %s19
      %p262 = scmp.lt.s32.totalorder %s19, 3
      %p263 = pnand %p261, %p262
      %p264 = pneg %p263
      // Predicated region
      $region33: #{tpu_custom_call.1} parent=5 // pred_check
        _
      $region34: #{tpu_custom_call.1} parent=5 // pred_check_branch
        %266 = sbr.rel (%p263) target = $region36
      $region35: #{tpu_custom_call.1} parent=5 // pred_region
        %s267 = ssub.s32 %s19, 1
        %s268 = smul.u32 65, %s24
        %s269 = ssub.s32 135, %s268
        %p270 = scmp.lt.s32.totalorder %s269, 65
        %s271 = scalar_select %p270, %s269, 65
        %s272 = smul.u32 4, %s271
        %p273 = scmp.lt.s32.totalorder %s268, 134
        %s274 = scalar_select %p273, %s268, 134
        %s275 = smul.addr %s274, 4
        %s276 = scalar_lea.vmem %s0, %s275
        %p277 = pneg %p45
        %p278 = pneg %p42
        %s279 = sadd.s32 %s24, 1
        %s280 = smul.u32 %s279, 13
        %s281 = smul.u32 5, %s280
        %p282 = scmp.lt.s32.totalorder %s281, 134
        %s283 = scalar_select %p282, %s281, 134
        %s284 = smul.addr %s283, 4
        %s285 = scalar_lea.vmem %s1, %s284
        %p286 = pneg %p75
        %p287 = pneg %p72
        %p288 = pneg %p96
        %p289 = pneg %p93
        %s290 = smul.u32 65, %s24
        %p291 = scmp.lt.s32.totalorder %s290, 129
        %s292 = scalar_select %p291, %s290, 129
        %s293 = smul.addr %s292, 8
        %s294 = scalar_lea.vmem %s3, %s293
        %p295 = pneg %p122
        %p296 = pneg %p119
        %p297 = pneg %p148
        %p298 = pneg %p145
        %s299 = sand.u32 %s135, 1
        %s300 = scalar_lea.sflag [#allocation3], %s299
        %s301 = sand.u32 %s135, 1
        %s302 = smul.addr %s301, 260
        %s303 = scalar_lea.vmem [#allocation2], %s302
        %p304 = pneg %p174
        %p305 = pneg %p171
        %s306 = sand.u32 %s24, 1
        %s307 = scalar_lea.sflag [#allocation5], %s306
        %s308 = sand.u32 %s161, 1
        %s309 = scalar_lea.vmem [#allocation4], %s308
        %p310 = pneg %p200
        %p311 = pneg %p197
        %s312 = sand.u32 %s24, 1
        %s313 = scalar_lea.sflag [#allocation5], %s312
        %s314 = sand.u32 %s187, 1
        %s315 = scalar_lea.vmem [#allocation6], %s314
        %s316 = smul.u32 65, %s24
        %s317 = ssub.s32 135, %s316
        %p318 = scmp.lt.s32.totalorder %s317, 65
        %s319 = scalar_select %p318, %s317, 65
        %s320 = smul.u32 4, %s319
        %p321 = scmp.lt.s32.totalorder %s316, 134
        %s322 = scalar_select %p321, %s316, 134
        %s323 = smul.addr %s322, 4
        %s324 = scalar_lea.vmem %s0, %s323
        %s325 = smul.u32 65, %s24
        %s326 = ssub.s32 135, %s325
        %p327 = scmp.lt.s32.totalorder %s326, 65
        %s328 = scalar_select %p327, %s326, 65
        %s329 = smul.u32 4, %s328
        %s330 = sadd.s32 %s24, 1
        %s331 = smul.u32 %s330, 13
        %s332 = smul.u32 5, %s331
        %p333 = scmp.lt.s32.totalorder %s332, 134
        %s334 = scalar_select %p333, %s332, 134
        %s335 = smul.addr %s334, 4
        %s336 = scalar_lea.vmem %s1, %s335
        %s337 = sadd.s32 %s24, 1
        %s338 = smul.u32 %s337, 13
        %s339 = smul.u32 5, %s338
        %s340 = smul.u32 65, %s24
        %p341 = scmp.lt.s32.totalorder %s340, 129
        %s342 = scalar_select %p341, %s340, 129
        %s343 = smul.addr %s342, 8
        %s344 = scalar_lea.vmem %s3, %s343
        %s345 = smul.u32 65, %s24
        %s346 = smul.u32 65, %s24
        %v348 = vld [vmem:[%s324] sm:$0xf]
        %v349 = vld [vmem:[%s324 + $0x4] sm:$0xf]
        %v350 = vld [vmem:[%s324 + $0x8] sm:$0xf]
        %v351 = vld [vmem:[%s324 + $0xc] sm:$0xf]
        %v352 = vld [vmem:[%s324 + $0x10] sm:$0xf]
        %v353 = vld [vmem:[%s324 + $0x14] sm:$0xf]
        %v354 = vld [vmem:[%s324 + $0x18] sm:$0xf]
        %v355 = vld [vmem:[%s324 + $0x1c] sm:$0xf]
        %v356 = vld [vmem:[%s324 + $0x20] sm:$0xf]
        %v357 = vld [vmem:[%s324 + $0x24] sm:$0xf]
        %v358 = vld [vmem:[%s324 + $0x28] sm:$0xf]
        %v359 = vld [vmem:[%s324 + $0x2c] sm:$0xf]
        %v360 = vld [vmem:[%s324 + $0x30] sm:$0xf]
        %v361 = vld [vmem:[%s324 + $0x34] sm:$0xf]
        %v362 = vld [vmem:[%s324 + $0x38] sm:$0xf]
        %v363 = vld [vmem:[%s324 + $0x3c] sm:$0xf]
        %v364 = vld [vmem:[%s324 + $0x40] sm:$0xf]
        %v365 = vld [vmem:[%s324 + $0x44] sm:$0xf]
        %v366 = vld [vmem:[%s324 + $0x48] sm:$0xf]
        %v367 = vld [vmem:[%s324 + $0x4c] sm:$0xf]
        %v368 = vld [vmem:[%s324 + $0x50] sm:$0xf]
        %v369 = vld [vmem:[%s324 + $0x54] sm:$0xf]
        %v370 = vld [vmem:[%s324 + $0x58] sm:$0xf]
        %v371 = vld [vmem:[%s324 + $0x5c] sm:$0xf]
        %v372 = vld [vmem:[%s324 + $0x60] sm:$0xf]
        %v373 = vld [vmem:[%s324 + $0x64] sm:$0xf]
        %v374 = vld [vmem:[%s324 + $0x68] sm:$0xf]
        %v375 = vld [vmem:[%s324 + $0x6c] sm:$0xf]
        %v376 = vld [vmem:[%s324 + $0x70] sm:$0xf]
        %v377 = vld [vmem:[%s324 + $0x74] sm:$0xf]
        %v378 = vld [vmem:[%s324 + $0x78] sm:$0xf]
        %v379 = vld [vmem:[%s324 + $0x7c] sm:$0xf]
        %v380 = vld [vmem:[%s324 + $0x80] sm:$0xf]
        %v381 = vld [vmem:[%s324 + $0x84] sm:$0xf]
        %v382 = vld [vmem:[%s324 + $0x88] sm:$0xf]
        %v383 = vld [vmem:[%s324 + $0x8c] sm:$0xf]
        %v384 = vld [vmem:[%s324 + $0x90] sm:$0xf]
        %v385 = vld [vmem:[%s324 + $0x94] sm:$0xf]
        %v386 = vld [vmem:[%s324 + $0x98] sm:$0xf]
        %v387 = vld [vmem:[%s324 + $0x9c] sm:$0xf]
        %v388 = vld [vmem:[%s324 + $0xa0] sm:$0xf]
        %v389 = vld [vmem:[%s324 + $0xa4] sm:$0xf]
        %v390 = vld [vmem:[%s324 + $0xa8] sm:$0xf]
        %v391 = vld [vmem:[%s324 + $0xac] sm:$0xf]
        %v392 = vld [vmem:[%s324 + $0xb0] sm:$0xf]
        %v393 = vld [vmem:[%s324 + $0xb4] sm:$0xf]
        %v394 = vld [vmem:[%s324 + $0xb8] sm:$0xf]
        %v395 = vld [vmem:[%s324 + $0xbc] sm:$0xf]
        %v396 = vld [vmem:[%s324 + $0xc0] sm:$0xf]
        %v397 = vld [vmem:[%s324 + $0xc4] sm:$0xf]
        %v398 = vld [vmem:[%s324 + $0xc8] sm:$0xf]
        %v399 = vld [vmem:[%s324 + $0xcc] sm:$0xf]
        %v400 = vld [vmem:[%s324 + $0xd0] sm:$0xf]
        %v401 = vld [vmem:[%s324 + $0xd4] sm:$0xf]
        %v402 = vld [vmem:[%s324 + $0xd8] sm:$0xf]
        %v403 = vld [vmem:[%s324 + $0xdc] sm:$0xf]
        %v404 = vld [vmem:[%s324 + $0xe0] sm:$0xf]
        %v405 = vld [vmem:[%s324 + $0xe4] sm:$0xf]
        %v406 = vld [vmem:[%s324 + $0xe8] sm:$0xf]
        %v407 = vld [vmem:[%s324 + $0xec] sm:$0xf]
        %v408 = vld [vmem:[%s324 + $0xf0] sm:$0xf]
        %v409 = vld [vmem:[%s324 + $0xf4] sm:$0xf]
        %v410 = vld [vmem:[%s324 + $0xf8] sm:$0xf]
        %v411 = vld [vmem:[%s324 + $0xfc] sm:$0xf]
        %v412 = vld [vmem:[%s324 + $0x100] sm:$0xf]
        %v413 = vld [vmem:[%s336] sm:$0xf]
        %v414 = vld [vmem:[%s336 + $0x4] sm:$0xf]
        %v415 = vld [vmem:[%s336 + $0x8] sm:$0xf]
        %v416 = vld [vmem:[%s336 + $0xc] sm:$0xf]
        %v417 = vld [vmem:[%s336 + $0x10] sm:$0xf]
        %v483 = vunpack.c.l.b16 %v348
        %v484 = vunpack.c.l.b16 %v349
        %v485 = vunpack.c.l.b16 %v350
        %v486 = vunpack.c.l.b16 %v351
        %v487 = vunpack.c.l.b16 %v352
        %v488 = vunpack.c.l.b16 %v353
        %v489 = vunpack.c.l.b16 %v354
        %v490 = vunpack.c.l.b16 %v355
        %v491 = vunpack.c.l.b16 %v356
        %v492 = vunpack.c.l.b16 %v357
        %v493 = vunpack.c.l.b16 %v358
        %v494 = vunpack.c.l.b16 %v359
        %v495 = vunpack.c.l.b16 %v360
        %v496 = vunpack.c.l.b16 %v361
        %v497 = vunpack.c.l.b16 %v362
        %v498 = vunpack.c.l.b16 %v363
        %v499 = vunpack.c.l.b16 %v364
        %v500 = vunpack.c.l.b16 %v365
        %v501 = vunpack.c.l.b16 %v366
        %v502 = vunpack.c.l.b16 %v367
        %v503 = vunpack.c.l.b16 %v368
        %v504 = vunpack.c.l.b16 %v369
        %v505 = vunpack.c.l.b16 %v370
        %v506 = vunpack.c.l.b16 %v371
        %v507 = vunpack.c.l.b16 %v372
        %v508 = vunpack.c.l.b16 %v373
        %v509 = vunpack.c.l.b16 %v374
        %v510 = vunpack.c.l.b16 %v375
        %v511 = vunpack.c.l.b16 %v376
        %v512 = vunpack.c.l.b16 %v377
        %v513 = vunpack.c.l.b16 %v378
        %v514 = vunpack.c.l.b16 %v379
        %v515 = vunpack.c.l.b16 %v380
        %v516 = vunpack.c.l.b16 %v381
        %v517 = vunpack.c.l.b16 %v382
        %v518 = vunpack.c.l.b16 %v383
        %v519 = vunpack.c.l.b16 %v384
        %v520 = vunpack.c.l.b16 %v385
        %v521 = vunpack.c.l.b16 %v386
        %v522 = vunpack.c.l.b16 %v387
        %v523 = vunpack.c.l.b16 %v388
        %v524 = vunpack.c.l.b16 %v389
        %v525 = vunpack.c.l.b16 %v390
        %v526 = vunpack.c.l.b16 %v391
        %v527 = vunpack.c.l.b16 %v392
        %v528 = vunpack.c.l.b16 %v393
        %v529 = vunpack.c.l.b16 %v394
        %v530 = vunpack.c.l.b16 %v395
        %v531 = vunpack.c.l.b16 %v396
        %v532 = vunpack.c.l.b16 %v397
        %v533 = vunpack.c.l.b16 %v398
        %v534 = vunpack.c.l.b16 %v399
        %v535 = vunpack.c.l.b16 %v400
        %v536 = vunpack.c.l.b16 %v401
        %v537 = vunpack.c.l.b16 %v402
        %v538 = vunpack.c.l.b16 %v403
        %v539 = vunpack.c.l.b16 %v404
        %v540 = vunpack.c.l.b16 %v405
        %v541 = vunpack.c.l.b16 %v406
        %v542 = vunpack.c.l.b16 %v407
        %v543 = vunpack.c.l.b16 %v408
        %v544 = vunpack.c.l.b16 %v409
        %v545 = vunpack.c.l.b16 %v410
        %v546 = vunpack.c.l.b16 %v411
        %v547 = vunpack.c.l.b16 %v412
        %v548 = vpack.c.b16 %v484, %v483
        %v549 = vpack.c.b16 %v486, %v485
        %v550 = vpack.c.b16 %v488, %v487
        %v551 = vpack.c.b16 %v490, %v489
        %v552 = vpack.c.b16 %v492, %v491
        %v553 = vpack.c.b16 %v494, %v493
        %v554 = vpack.c.b16 %v496, %v495
        %v555 = vpack.c.b16 %v498, %v497
        %v556 = vpack.c.b16 %v500, %v499
        %v557 = vpack.c.b16 %v502, %v501
        %v558 = vpack.c.b16 %v504, %v503
        %v559 = vpack.c.b16 %v506, %v505
        %v560 = vpack.c.b16 %v508, %v507
        %v561 = vpack.c.b16 %v510, %v509
        %v562 = vpack.c.b16 %v512, %v511
        %v563 = vpack.c.b16 %v514, %v513
        %v564 = vpack.c.b16 %v516, %v515
        %v565 = vpack.c.b16 %v518, %v517
        %v566 = vpack.c.b16 %v520, %v519
        %v567 = vpack.c.b16 %v522, %v521
        %v568 = vpack.c.b16 %v524, %v523
        %v569 = vpack.c.b16 %v526, %v525
        %v570 = vpack.c.b16 %v528, %v527
        %v571 = vpack.c.b16 %v530, %v529
        %v572 = vpack.c.b16 %v532, %v531
        %v573 = vpack.c.b16 %v534, %v533
        %v574 = vpack.c.b16 %v536, %v535
        %v575 = vpack.c.b16 %v538, %v537
        %v576 = vpack.c.b16 %v540, %v539
        %v577 = vpack.c.b16 %v542, %v541
        %v578 = vpack.c.b16 %v544, %v543
        %v579 = vpack.c.b16 %v546, %v545
        %v580 = vpack.c.b16 %v547, %v547
        %v586 = vunpack.c.l.b16 %v413
        %v587 = vunpack.c.l.b16 %v414
        %v588 = vunpack.c.l.b16 %v415
        %v589 = vunpack.c.l.b16 %v416
        %v590 = vunpack.c.l.b16 %v417
        %v591 = vpack.c.b16 %v586, %v586
        %v592 = vpack.c.b16 %v588, %v587
        %v593 = vpack.c.b16 %v590, %v589
        %vm594 = vcmask 1043456
        %v597 = vsel %vm594, %v580, %v591
        %v598 = vld [vmem:[%s2] sm:$0x3]
        %s599 = scalar_lea.vmem %s2, 2
        %v600 = vld [vmem:[%s599] sm:$0x3]
        %vm601 = vsmask.f32 7424
        %v603 = vshrl.u32 %v548, 16
        %v605 = vshll.u32 %v548, 16
        %v607 = vrot.slane %v605, 1
        %v608 = vor.u32 %v603, %v607
        %v610 = vshll.u32 %v549, 16
        %v612 = vrot.slane %v610, 1
        %v613 = vsel %vm601, %v608, %v612
        %v614 = vshrl.u32 %v549, 16
        %v616 = vor.u32 %v614, %v612
        %v618 = vshll.u32 %v550, 16
        %v620 = vrot.slane %v618, 1
        %v621 = vsel %vm601, %v616, %v620
        %v622 = vshrl.u32 %v550, 16
        %v624 = vor.u32 %v622, %v620
        %v626 = vshll.u32 %v551, 16
        %v628 = vrot.slane %v626, 1
        %v629 = vsel %vm601, %v624, %v628
        %v630 = vshrl.u32 %v551, 16
        %v632 = vor.u32 %v630, %v628
        %v634 = vshll.u32 %v552, 16
        %v636 = vrot.slane %v634, 1
        %v637 = vsel %vm601, %v632, %v636
        %v638 = vshrl.u32 %v552, 16
        %v640 = vor.u32 %v638, %v636
        %v642 = vshll.u32 %v553, 16
        %v644 = vrot.slane %v642, 1
        %v645 = vsel %vm601, %v640, %v644
        %v646 = vshrl.u32 %v553, 16
        %v648 = vor.u32 %v646, %v644
        %v650 = vshll.u32 %v554, 16
        %v652 = vrot.slane %v650, 1
        %v653 = vsel %vm601, %v648, %v652
        %v654 = vshrl.u32 %v554, 16
        %v656 = vor.u32 %v654, %v652
        %v658 = vshll.u32 %v555, 16
        %v660 = vrot.slane %v658, 1
        %v661 = vsel %vm601, %v656, %v660
        %v662 = vshrl.u32 %v555, 16
        %v664 = vor.u32 %v662, %v660
        %v666 = vshll.u32 %v556, 16
        %v668 = vrot.slane %v666, 1
        %v669 = vsel %vm601, %v664, %v668
        %v670 = vshrl.u32 %v556, 16
        %v672 = vor.u32 %v670, %v668
        %v674 = vshll.u32 %v557, 16
        %v676 = vrot.slane %v674, 1
        %v677 = vsel %vm601, %v672, %v676
        %v678 = vshrl.u32 %v557, 16
        %v680 = vor.u32 %v678, %v676
        %v682 = vshll.u32 %v558, 16
        %v684 = vrot.slane %v682, 1
        %v685 = vsel %vm601, %v680, %v684
        %v686 = vshrl.u32 %v558, 16
        %v688 = vor.u32 %v686, %v684
        %v690 = vshll.u32 %v559, 16
        %v692 = vrot.slane %v690, 1
        %v693 = vsel %vm601, %v688, %v692
        %v694 = vshrl.u32 %v559, 16
        %v696 = vor.u32 %v694, %v692
        %v698 = vshll.u32 %v560, 16
        %v700 = vrot.slane %v698, 1
        %v701 = vsel %vm601, %v696, %v700
        %v702 = vshrl.u32 %v560, 16
        %v704 = vor.u32 %v702, %v700
        %v706 = vshll.u32 %v561, 16
        %v708 = vrot.slane %v706, 1
        %v709 = vsel %vm601, %v704, %v708
        %v710 = vshrl.u32 %v561, 16
        %v712 = vor.u32 %v710, %v708
        %v714 = vshll.u32 %v562, 16
        %v716 = vrot.slane %v714, 1
        %v717 = vsel %vm601, %v712, %v716
        %v718 = vshrl.u32 %v562, 16
        %v720 = vor.u32 %v718, %v716
        %v722 = vshll.u32 %v563, 16
        %v724 = vrot.slane %v722, 1
        %v725 = vsel %vm601, %v720, %v724
        %v726 = vshrl.u32 %v563, 16
        %v728 = vor.u32 %v726, %v724
        %v730 = vshll.u32 %v564, 16
        %v732 = vrot.slane %v730, 1
        %v733 = vsel %vm601, %v728, %v732
        %v734 = vshrl.u32 %v564, 16
        %v736 = vor.u32 %v734, %v732
        %v738 = vshll.u32 %v565, 16
        %v740 = vrot.slane %v738, 1
        %v741 = vsel %vm601, %v736, %v740
        %v742 = vshrl.u32 %v565, 16
        %v744 = vor.u32 %v742, %v740
        %v746 = vshll.u32 %v566, 16
        %v748 = vrot.slane %v746, 1
        %v749 = vsel %vm601, %v744, %v748
        %v750 = vshrl.u32 %v566, 16
        %v752 = vor.u32 %v750, %v748
        %v754 = vshll.u32 %v567, 16
        %v756 = vrot.slane %v754, 1
        %v757 = vsel %vm601, %v752, %v756
        %v758 = vshrl.u32 %v567, 16
        %v760 = vor.u32 %v758, %v756
        %v762 = vshll.u32 %v568, 16
        %v764 = vrot.slane %v762, 1
        %v765 = vsel %vm601, %v760, %v764
        %v766 = vshrl.u32 %v568, 16
        %v768 = vor.u32 %v766, %v764
        %v770 = vshll.u32 %v569, 16
        %v772 = vrot.slane %v770, 1
        %v773 = vsel %vm601, %v768, %v772
        %v774 = vshrl.u32 %v569, 16
        %v776 = vor.u32 %v774, %v772
        %v778 = vshll.u32 %v570, 16
        %v780 = vrot.slane %v778, 1
        %v781 = vsel %vm601, %v776, %v780
        %v782 = vshrl.u32 %v570, 16
        %v784 = vor.u32 %v782, %v780
        %v786 = vshll.u32 %v571, 16
        %v788 = vrot.slane %v786, 1
        %v789 = vsel %vm601, %v784, %v788
        %v790 = vshrl.u32 %v571, 16
        %v792 = vor.u32 %v790, %v788
        %v794 = vshll.u32 %v572, 16
        %v796 = vrot.slane %v794, 1
        %v797 = vsel %vm601, %v792, %v796
        %v798 = vshrl.u32 %v572, 16
        %v800 = vor.u32 %v798, %v796
        %v802 = vshll.u32 %v573, 16
        %v804 = vrot.slane %v802, 1
        %v805 = vsel %vm601, %v800, %v804
        %v806 = vshrl.u32 %v573, 16
        %v808 = vor.u32 %v806, %v804
        %v810 = vshll.u32 %v574, 16
        %v812 = vrot.slane %v810, 1
        %v813 = vsel %vm601, %v808, %v812
        %v814 = vshrl.u32 %v574, 16
        %v816 = vor.u32 %v814, %v812
        %v818 = vshll.u32 %v575, 16
        %v820 = vrot.slane %v818, 1
        %v821 = vsel %vm601, %v816, %v820
        %v822 = vshrl.u32 %v575, 16
        %v824 = vor.u32 %v822, %v820
        %v826 = vshll.u32 %v576, 16
        %v828 = vrot.slane %v826, 1
        %v829 = vsel %vm601, %v824, %v828
        %v830 = vshrl.u32 %v576, 16
        %v832 = vor.u32 %v830, %v828
        %v834 = vshll.u32 %v577, 16
        %v836 = vrot.slane %v834, 1
        %v837 = vsel %vm601, %v832, %v836
        %v838 = vshrl.u32 %v577, 16
        %v840 = vor.u32 %v838, %v836
        %v842 = vshll.u32 %v578, 16
        %v844 = vrot.slane %v842, 1
        %v845 = vsel %vm601, %v840, %v844
        %v846 = vshrl.u32 %v578, 16
        %v848 = vor.u32 %v846, %v844
        %v850 = vshll.u32 %v579, 16
        %v852 = vrot.slane %v850, 1
        %v853 = vsel %vm601, %v848, %v852
        %v854 = vshrl.u32 %v579, 16
        %v856 = vor.u32 %v854, %v852
        %v857 = vshll.u32 %v597, 16
        %v859 = vrot.slane %v857, 1
        %v860 = vsel %vm601, %v856, %v859
        %v861 = vshrl.u32 %v597, 16
        %v863 = vor.u32 %v861, %v859
        %vm864 = vcmask 31744
        %v866 = vsel %vm864, %v613, 0
        %v869 = vsel %vm864, %v621, 0
        %v872 = vsel %vm864, %v629, 0
        %v875 = vsel %vm864, %v637, 0
        %v878 = vsel %vm864, %v645, 0
        %v881 = vsel %vm864, %v653, 0
        %v884 = vsel %vm864, %v661, 0
        %v887 = vsel %vm864, %v669, 0
        %v890 = vsel %vm864, %v677, 0
        %v893 = vsel %vm864, %v685, 0
        %v896 = vsel %vm864, %v693, 0
        %v899 = vsel %vm864, %v701, 0
        %v902 = vsel %vm864, %v709, 0
        %v905 = vsel %vm864, %v717, 0
        %v908 = vsel %vm864, %v725, 0
        %v911 = vsel %vm864, %v733, 0
        %v914 = vsel %vm864, %v741, 0
        %v917 = vsel %vm864, %v749, 0
        %v920 = vsel %vm864, %v757, 0
        %v923 = vsel %vm864, %v765, 0
        %v926 = vsel %vm864, %v773, 0
        %v929 = vsel %vm864, %v781, 0
        %v932 = vsel %vm864, %v789, 0
        %v935 = vsel %vm864, %v797, 0
        %v938 = vsel %vm864, %v805, 0
        %v941 = vsel %vm864, %v813, 0
        %v944 = vsel %vm864, %v821, 0
        %v947 = vsel %vm864, %v829, 0
        %v950 = vsel %vm864, %v837, 0
        %v953 = vsel %vm864, %v845, 0
        %v956 = vsel %vm864, %v853, 0
        %v959 = vsel %vm864, %v860, 0
        %v962 = vsel %vm864, %v863, 0
        %vm964 = vcmask 1041408
        %v966 = vsel %vm964, %v600, 0
        %968 = vmatpush.bf16.msra.mxu0 0
        %969 = vmatpush.bf16.msra.mxu0 0
        %970 = vmatpush.bf16.msra.mxu0 0
        %971 = vmatpush.bf16.msra.mxu0 0
        %972 = vmatpush.bf16.msra.mxu0 0
        %973 = vmatpush.bf16.msra.mxu0 0
        %974 = vmatpush.bf16.msra.mxu0 0
        %975 = vmatpush.bf16.msra.mxu0 %v966
        %976 = vmatmul.bf16.gmra.mxu0 %v866
        %v977 = vpop.f32.mrf.mxu0
        %v978 = vadd.f32 0.0, %v977
        %v979 = vpop.f32.mrf.mxu0
        %v980 = vadd.f32 0.0, %v979
        %981 = vmatmul.bf16.gmra.mxu0 %v869
        %v982 = vpop.f32.mrf.mxu0
        %v983 = vadd.f32 0.0, %v982
        %v984 = vpop.f32.mrf.mxu0
        %v985 = vadd.f32 0.0, %v984
        %986 = vmatmul.bf16.gmra.mxu0 %v872
        %v987 = vpop.f32.mrf.mxu0
        %v988 = vadd.f32 0.0, %v987
        %v989 = vpop.f32.mrf.mxu0
        %v990 = vadd.f32 0.0, %v989
        %991 = vmatmul.bf16.gmra.mxu0 %v875
        %v992 = vpop.f32.mrf.mxu0
        %v993 = vadd.f32 0.0, %v992
        %v994 = vpop.f32.mrf.mxu0
        %v995 = vadd.f32 0.0, %v994
        %996 = vmatmul.bf16.gmra.mxu0 %v878
        %v997 = vpop.f32.mrf.mxu0
        %v998 = vadd.f32 0.0, %v997
        %v999 = vpop.f32.mrf.mxu0
        %v1000 = vadd.f32 0.0, %v999
        %1001 = vmatmul.bf16.gmra.mxu0 %v881
        %v1002 = vpop.f32.mrf.mxu0
        %v1003 = vadd.f32 0.0, %v1002
        %v1004 = vpop.f32.mrf.mxu0
        %v1005 = vadd.f32 0.0, %v1004
        %1006 = vmatmul.bf16.gmra.mxu0 %v884
        %v1007 = vpop.f32.mrf.mxu0
        %v1008 = vadd.f32 0.0, %v1007
        %v1009 = vpop.f32.mrf.mxu0
        %v1010 = vadd.f32 0.0, %v1009
        %1011 = vmatmul.bf16.gmra.mxu0 %v887
        %v1012 = vpop.f32.mrf.mxu0
        %v1013 = vadd.f32 0.0, %v1012
        %v1014 = vpop.f32.mrf.mxu0
        %v1015 = vadd.f32 0.0, %v1014
        %1016 = vmatmul.bf16.gmra.mxu0 %v890
        %v1017 = vpop.f32.mrf.mxu0
        %v1018 = vadd.f32 0.0, %v1017
        %v1019 = vpop.f32.mrf.mxu0
        %v1020 = vadd.f32 0.0, %v1019
        %1021 = vmatmul.bf16.gmra.mxu0 %v893
        %v1022 = vpop.f32.mrf.mxu0
        %v1023 = vadd.f32 0.0, %v1022
        %v1024 = vpop.f32.mrf.mxu0
        %v1025 = vadd.f32 0.0, %v1024
        %1026 = vmatmul.bf16.gmra.mxu0 %v896
        %v1027 = vpop.f32.mrf.mxu0
        %v1028 = vadd.f32 0.0, %v1027
        %v1029 = vpop.f32.mrf.mxu0
        %v1030 = vadd.f32 0.0, %v1029
        %1031 = vmatmul.bf16.gmra.mxu0 %v899
        %v1032 = vpop.f32.mrf.mxu0
        %v1033 = vadd.f32 0.0, %v1032
        %v1034 = vpop.f32.mrf.mxu0
        %v1035 = vadd.f32 0.0, %v1034
        %1036 = vmatmul.bf16.gmra.mxu0 %v902
        %v1037 = vpop.f32.mrf.mxu0
        %v1038 = vadd.f32 0.0, %v1037
        %v1039 = vpop.f32.mrf.mxu0
        %v1040 = vadd.f32 0.0, %v1039
        %1041 = vmatmul.bf16.gmra.mxu0 %v905
        %v1042 = vpop.f32.mrf.mxu0
        %v1043 = vadd.f32 0.0, %v1042
        %v1044 = vpop.f32.mrf.mxu0
        %v1045 = vadd.f32 0.0, %v1044
        %1046 = vmatmul.bf16.gmra.mxu0 %v908
        %v1047 = vpop.f32.mrf.mxu0
        %v1048 = vadd.f32 0.0, %v1047
        %v1049 = vpop.f32.mrf.mxu0
        %v1050 = vadd.f32 0.0, %v1049
        %1051 = vmatmul.bf16.gmra.mxu0 %v911
        %v1052 = vpop.f32.mrf.mxu0
        %v1053 = vadd.f32 0.0, %v1052
        %v1054 = vpop.f32.mrf.mxu0
        %v1055 = vadd.f32 0.0, %v1054
        %1056 = vmatmul.bf16.gmra.mxu0 %v914
        %v1057 = vpop.f32.mrf.mxu0
        %v1058 = vadd.f32 0.0, %v1057
        %v1059 = vpop.f32.mrf.mxu0
        %v1060 = vadd.f32 0.0, %v1059
        %1061 = vmatmul.bf16.gmra.mxu0 %v917
        %v1062 = vpop.f32.mrf.mxu0
        %v1063 = vadd.f32 0.0, %v1062
        %v1064 = vpop.f32.mrf.mxu0
        %v1065 = vadd.f32 0.0, %v1064
        %1066 = vmatmul.bf16.gmra.mxu0 %v920
        %v1067 = vpop.f32.mrf.mxu0
        %v1068 = vadd.f32 0.0, %v1067
        %v1069 = vpop.f32.mrf.mxu0
        %v1070 = vadd.f32 0.0, %v1069
        %1071 = vmatmul.bf16.gmra.mxu0 %v923
        %v1072 = vpop.f32.mrf.mxu0
        %v1073 = vadd.f32 0.0, %v1072
        %v1074 = vpop.f32.mrf.mxu0
        %v1075 = vadd.f32 0.0, %v1074
        %1076 = vmatmul.bf16.gmra.mxu0 %v926
        %v1077 = vpop.f32.mrf.mxu0
        %v1078 = vadd.f32 0.0, %v1077
        %v1079 = vpop.f32.mrf.mxu0
        %v1080 = vadd.f32 0.0, %v1079
        %1081 = vmatmul.bf16.gmra.mxu0 %v929
        %v1082 = vpop.f32.mrf.mxu0
        %v1083 = vadd.f32 0.0, %v1082
        %v1084 = vpop.f32.mrf.mxu0
        %v1085 = vadd.f32 0.0, %v1084
        %1086 = vmatmul.bf16.gmra.mxu0 %v932
        %v1087 = vpop.f32.mrf.mxu0
        %v1088 = vadd.f32 0.0, %v1087
        %v1089 = vpop.f32.mrf.mxu0
        %v1090 = vadd.f32 0.0, %v1089
        %1091 = vmatmul.bf16.gmra.mxu0 %v935
        %v1092 = vpop.f32.mrf.mxu0
        %v1093 = vadd.f32 0.0, %v1092
        %v1094 = vpop.f32.mrf.mxu0
        %v1095 = vadd.f32 0.0, %v1094
        %1096 = vmatmul.bf16.gmra.mxu0 %v938
        %v1097 = vpop.f32.mrf.mxu0
        %v1098 = vadd.f32 0.0, %v1097
        %v1099 = vpop.f32.mrf.mxu0
        %v1100 = vadd.f32 0.0, %v1099
        %1101 = vmatmul.bf16.gmra.mxu0 %v941
        %v1102 = vpop.f32.mrf.mxu0
        %v1103 = vadd.f32 0.0, %v1102
        %v1104 = vpop.f32.mrf.mxu0
        %v1105 = vadd.f32 0.0, %v1104
        %1106 = vmatmul.bf16.gmra.mxu0 %v944
        %v1107 = vpop.f32.mrf.mxu0
        %v1108 = vadd.f32 0.0, %v1107
        %v1109 = vpop.f32.mrf.mxu0
        %v1110 = vadd.f32 0.0, %v1109
        %1111 = vmatmul.bf16.gmra.mxu0 %v947
        %v1112 = vpop.f32.mrf.mxu0
        %v1113 = vadd.f32 0.0, %v1112
        %v1114 = vpop.f32.mrf.mxu0
        %v1115 = vadd.f32 0.0, %v1114
        %1116 = vmatmul.bf16.gmra.mxu0 %v950
        %v1117 = vpop.f32.mrf.mxu0
        %v1118 = vadd.f32 0.0, %v1117
        %v1119 = vpop.f32.mrf.mxu0
        %v1120 = vadd.f32 0.0, %v1119
        %1121 = vmatmul.bf16.gmra.mxu0 %v953
        %v1122 = vpop.f32.mrf.mxu0
        %v1123 = vadd.f32 0.0, %v1122
        %v1124 = vpop.f32.mrf.mxu0
        %v1125 = vadd.f32 0.0, %v1124
        %1126 = vmatmul.bf16.gmra.mxu0 %v956
        %v1127 = vpop.f32.mrf.mxu0
        %v1128 = vadd.f32 0.0, %v1127
        %v1129 = vpop.f32.mrf.mxu0
        %v1130 = vadd.f32 0.0, %v1129
        %1131 = vmatmul.bf16.gmra.mxu0 %v959
        %v1132 = vpop.f32.mrf.mxu0
        %v1133 = vadd.f32 0.0, %v1132
        %v1134 = vpop.f32.mrf.mxu0
        %v1135 = vadd.f32 0.0, %v1134
        %1136 = vmatmul.bf16.gmra.mxu0 %v962
        %v1137 = vpop.f32.mrf.mxu0
        %v1138 = vadd.f32 0.0, %v1137
        %v1139 = vpop.f32.mrf.mxu0
        %1140 = vdwg.mxu0
        %v1141 = vsel %vm864, %v548, 0
        %v1143 = vsel %vm864, %v549, 0
        %v1145 = vsel %vm864, %v550, 0
        %v1147 = vsel %vm864, %v551, 0
        %v1149 = vsel %vm864, %v552, 0
        %v1151 = vsel %vm864, %v553, 0
        %v1153 = vsel %vm864, %v554, 0
        %v1155 = vsel %vm864, %v555, 0
        %v1157 = vsel %vm864, %v556, 0
        %v1159 = vsel %vm864, %v557, 0
        %v1161 = vsel %vm864, %v558, 0
        %v1163 = vsel %vm864, %v559, 0
        %v1165 = vsel %vm864, %v560, 0
        %v1167 = vsel %vm864, %v561, 0
        %v1169 = vsel %vm864, %v562, 0
        %v1171 = vsel %vm864, %v563, 0
        %v1173 = vsel %vm864, %v564, 0
        %v1175 = vsel %vm864, %v565, 0
        %v1177 = vsel %vm864, %v566, 0
        %v1179 = vsel %vm864, %v567, 0
        %v1181 = vsel %vm864, %v568, 0
        %v1183 = vsel %vm864, %v569, 0
        %v1185 = vsel %vm864, %v570, 0
        %v1187 = vsel %vm864, %v571, 0
        %v1189 = vsel %vm864, %v572, 0
        %v1191 = vsel %vm864, %v573, 0
        %v1193 = vsel %vm864, %v574, 0
        %v1195 = vsel %vm864, %v575, 0
        %v1197 = vsel %vm864, %v576, 0
        %v1199 = vsel %vm864, %v577, 0
        %v1201 = vsel %vm864, %v578, 0
        %v1203 = vsel %vm864, %v579, 0
        %v1205 = vsel %vm864, %v597, 0
        %v1208 = vsel %vm964, %v598, 0
        %1210 = vmatpush.bf16.msra.mxu0 0
        %1211 = vmatpush.bf16.msra.mxu0 0
        %1212 = vmatpush.bf16.msra.mxu0 0
        %1213 = vmatpush.bf16.msra.mxu0 0
        %1214 = vmatpush.bf16.msra.mxu0 0
        %1215 = vmatpush.bf16.msra.mxu0 0
        %1216 = vmatpush.bf16.msra.mxu0 0
        %1217 = vmatpush.bf16.msra.mxu0 %v1208
        %1218 = vmatmul.bf16.gmra.mxu0 %v1141
        %v1219 = vpop.f32.mrf.mxu0
        %v1220 = vadd.f32 %v978, %v1219
        %v1221 = vpop.f32.mrf.mxu0
        %v1222 = vadd.f32 %v980, %v1221
        %1223 = vmatmul.bf16.gmra.mxu0 %v1143
        %v1224 = vpop.f32.mrf.mxu0
        %v1225 = vadd.f32 %v983, %v1224
        %v1226 = vpop.f32.mrf.mxu0
        %v1227 = vadd.f32 %v985, %v1226
        %1228 = vmatmul.bf16.gmra.mxu0 %v1145
        %v1229 = vpop.f32.mrf.mxu0
        %v1230 = vadd.f32 %v988, %v1229
        %v1231 = vpop.f32.mrf.mxu0
        %v1232 = vadd.f32 %v990, %v1231
        %1233 = vmatmul.bf16.gmra.mxu0 %v1147
        %v1234 = vpop.f32.mrf.mxu0
        %v1235 = vadd.f32 %v993, %v1234
        %v1236 = vpop.f32.mrf.mxu0
        %v1237 = vadd.f32 %v995, %v1236
        %1238 = vmatmul.bf16.gmra.mxu0 %v1149
        %v1239 = vpop.f32.mrf.mxu0
        %v1240 = vadd.f32 %v998, %v1239
        %v1241 = vpop.f32.mrf.mxu0
        %v1242 = vadd.f32 %v1000, %v1241
        %1243 = vmatmul.bf16.gmra.mxu0 %v1151
        %v1244 = vpop.f32.mrf.mxu0
        %v1245 = vadd.f32 %v1003, %v1244
        %v1246 = vpop.f32.mrf.mxu0
        %v1247 = vadd.f32 %v1005, %v1246
        %1248 = vmatmul.bf16.gmra.mxu0 %v1153
        %v1249 = vpop.f32.mrf.mxu0
        %v1250 = vadd.f32 %v1008, %v1249
        %v1251 = vpop.f32.mrf.mxu0
        %v1252 = vadd.f32 %v1010, %v1251
        %1253 = vmatmul.bf16.gmra.mxu0 %v1155
        %v1254 = vpop.f32.mrf.mxu0
        %v1255 = vadd.f32 %v1013, %v1254
        %v1256 = vpop.f32.mrf.mxu0
        %v1257 = vadd.f32 %v1015, %v1256
        %1258 = vmatmul.bf16.gmra.mxu0 %v1157
        %v1259 = vpop.f32.mrf.mxu0
        %v1260 = vadd.f32 %v1018, %v1259
        %v1261 = vpop.f32.mrf.mxu0
        %v1262 = vadd.f32 %v1020, %v1261
        %1263 = vmatmul.bf16.gmra.mxu0 %v1159
        %v1264 = vpop.f32.mrf.mxu0
        %v1265 = vadd.f32 %v1023, %v1264
        %v1266 = vpop.f32.mrf.mxu0
        %v1267 = vadd.f32 %v1025, %v1266
        %1268 = vmatmul.bf16.gmra.mxu0 %v1161
        %v1269 = vpop.f32.mrf.mxu0
        %v1270 = vadd.f32 %v1028, %v1269
        %v1271 = vpop.f32.mrf.mxu0
        %v1272 = vadd.f32 %v1030, %v1271
        %1273 = vmatmul.bf16.gmra.mxu0 %v1163
        %v1274 = vpop.f32.mrf.mxu0
        %v1275 = vadd.f32 %v1033, %v1274
        %v1276 = vpop.f32.mrf.mxu0
        %v1277 = vadd.f32 %v1035, %v1276
        %1278 = vmatmul.bf16.gmra.mxu0 %v1165
        %v1279 = vpop.f32.mrf.mxu0
        %v1280 = vadd.f32 %v1038, %v1279
        %v1281 = vpop.f32.mrf.mxu0
        %v1282 = vadd.f32 %v1040, %v1281
        %1283 = vmatmul.bf16.gmra.mxu0 %v1167
        %v1284 = vpop.f32.mrf.mxu0
        %v1285 = vadd.f32 %v1043, %v1284
        %v1286 = vpop.f32.mrf.mxu0
        %v1287 = vadd.f32 %v1045, %v1286
        %1288 = vmatmul.bf16.gmra.mxu0 %v1169
        %v1289 = vpop.f32.mrf.mxu0
        %v1290 = vadd.f32 %v1048, %v1289
        %v1291 = vpop.f32.mrf.mxu0
        %v1292 = vadd.f32 %v1050, %v1291
        %1293 = vmatmul.bf16.gmra.mxu0 %v1171
        %v1294 = vpop.f32.mrf.mxu0
        %v1295 = vadd.f32 %v1053, %v1294
        %v1296 = vpop.f32.mrf.mxu0
        %v1297 = vadd.f32 %v1055, %v1296
        %1298 = vmatmul.bf16.gmra.mxu0 %v1173
        %v1299 = vpop.f32.mrf.mxu0
        %v1300 = vadd.f32 %v1058, %v1299
        %v1301 = vpop.f32.mrf.mxu0
        %v1302 = vadd.f32 %v1060, %v1301
        %1303 = vmatmul.bf16.gmra.mxu0 %v1175
        %v1304 = vpop.f32.mrf.mxu0
        %v1305 = vadd.f32 %v1063, %v1304
        %v1306 = vpop.f32.mrf.mxu0
        %v1307 = vadd.f32 %v1065, %v1306
        %1308 = vmatmul.bf16.gmra.mxu0 %v1177
        %v1309 = vpop.f32.mrf.mxu0
        %v1310 = vadd.f32 %v1068, %v1309
        %v1311 = vpop.f32.mrf.mxu0
        %v1312 = vadd.f32 %v1070, %v1311
        %1313 = vmatmul.bf16.gmra.mxu0 %v1179
        %v1314 = vpop.f32.mrf.mxu0
        %v1315 = vadd.f32 %v1073, %v1314
        %v1316 = vpop.f32.mrf.mxu0
        %v1317 = vadd.f32 %v1075, %v1316
        %1318 = vmatmul.bf16.gmra.mxu0 %v1181
        %v1319 = vpop.f32.mrf.mxu0
        %v1320 = vadd.f32 %v1078, %v1319
        %v1321 = vpop.f32.mrf.mxu0
        %v1322 = vadd.f32 %v1080, %v1321
        %1323 = vmatmul.bf16.gmra.mxu0 %v1183
        %v1324 = vpop.f32.mrf.mxu0
        %v1325 = vadd.f32 %v1083, %v1324
        %v1326 = vpop.f32.mrf.mxu0
        %v1327 = vadd.f32 %v1085, %v1326
        %1328 = vmatmul.bf16.gmra.mxu0 %v1185
        %v1329 = vpop.f32.mrf.mxu0
        %v1330 = vadd.f32 %v1088, %v1329
        %v1331 = vpop.f32.mrf.mxu0
        %v1332 = vadd.f32 %v1090, %v1331
        %1333 = vmatmul.bf16.gmra.mxu0 %v1187
        %v1334 = vpop.f32.mrf.mxu0
        %v1335 = vadd.f32 %v1093, %v1334
        %v1336 = vpop.f32.mrf.mxu0
        %v1337 = vadd.f32 %v1095, %v1336
        %1338 = vmatmul.bf16.gmra.mxu0 %v1189
        %v1339 = vpop.f32.mrf.mxu0
        %v1340 = vadd.f32 %v1098, %v1339
        %v1341 = vpop.f32.mrf.mxu0
        %v1342 = vadd.f32 %v1100, %v1341
        %1343 = vmatmul.bf16.gmra.mxu0 %v1191
        %v1344 = vpop.f32.mrf.mxu0
        %v1345 = vadd.f32 %v1103, %v1344
        %v1346 = vpop.f32.mrf.mxu0
        %v1347 = vadd.f32 %v1105, %v1346
        %1348 = vmatmul.bf16.gmra.mxu0 %v1193
        %v1349 = vpop.f32.mrf.mxu0
        %v1350 = vadd.f32 %v1108, %v1349
        %v1351 = vpop.f32.mrf.mxu0
        %v1352 = vadd.f32 %v1110, %v1351
        %1353 = vmatmul.bf16.gmra.mxu0 %v1195
        %v1354 = vpop.f32.mrf.mxu0
        %v1355 = vadd.f32 %v1113, %v1354
        %v1356 = vpop.f32.mrf.mxu0
        %v1357 = vadd.f32 %v1115, %v1356
        %1358 = vmatmul.bf16.gmra.mxu0 %v1197
        %v1359 = vpop.f32.mrf.mxu0
        %v1360 = vadd.f32 %v1118, %v1359
        %v1361 = vpop.f32.mrf.mxu0
        %v1362 = vadd.f32 %v1120, %v1361
        %1363 = vmatmul.bf16.gmra.mxu0 %v1199
        %v1364 = vpop.f32.mrf.mxu0
        %v1365 = vadd.f32 %v1123, %v1364
        %v1366 = vpop.f32.mrf.mxu0
        %v1367 = vadd.f32 %v1125, %v1366
        %1368 = vmatmul.bf16.gmra.mxu0 %v1201
        %v1369 = vpop.f32.mrf.mxu0
        %v1370 = vadd.f32 %v1128, %v1369
        %v1371 = vpop.f32.mrf.mxu0
        %v1372 = vadd.f32 %v1130, %v1371
        %1373 = vmatmul.bf16.gmra.mxu0 %v1203
        %v1374 = vpop.f32.mrf.mxu0
        %v1375 = vadd.f32 %v1133, %v1374
        %v1376 = vpop.f32.mrf.mxu0
        %v1377 = vadd.f32 %v1135, %v1376
        %1378 = vmatmul.bf16.gmra.mxu0 %v1205
        %v1379 = vpop.f32.mrf.mxu0
        %v1380 = vadd.f32 %v1138, %v1379
        %v1381 = vpop.f32.mrf.mxu0
        %1382 = vdwg.mxu0
        %s1383 = scalar_lea.vmem %s2, 4
        %v1384 = vld [vmem:[%s1383] sm:$0x3]
        %vm1386 = vcmask 1046528
        %v1387 = vrot.slane %v548, 1
        %v1388 = vrot.slane %v549, 1
        %v1389 = vsel %vm1386, %v1387, %v1388
        %v1390 = vrot.slane %v550, 1
        %v1391 = vsel %vm1386, %v1388, %v1390
        %v1392 = vrot.slane %v551, 1
        %v1393 = vsel %vm1386, %v1390, %v1392
        %v1394 = vrot.slane %v552, 1
        %v1395 = vsel %vm1386, %v1392, %v1394
        %v1396 = vrot.slane %v553, 1
        %v1397 = vsel %vm1386, %v1394, %v1396
        %v1398 = vrot.slane %v554, 1
        %v1399 = vsel %vm1386, %v1396, %v1398
        %v1400 = vrot.slane %v555, 1
        %v1401 = vsel %vm1386, %v1398, %v1400
        %v1402 = vrot.slane %v556, 1
        %v1403 = vsel %vm1386, %v1400, %v1402
        %v1404 = vrot.slane %v557, 1
        %v1405 = vsel %vm1386, %v1402, %v1404
        %v1406 = vrot.slane %v558, 1
        %v1407 = vsel %vm1386, %v1404, %v1406
        %v1408 = vrot.slane %v559, 1
        %v1409 = vsel %vm1386, %v1406, %v1408
        %v1410 = vrot.slane %v560, 1
        %v1411 = vsel %vm1386, %v1408, %v1410
        %v1412 = vrot.slane %v561, 1
        %v1413 = vsel %vm1386, %v1410, %v1412
        %v1414 = vrot.slane %v562, 1
        %v1415 = vsel %vm1386, %v1412, %v1414
        %v1416 = vrot.slane %v563, 1
        %v1417 = vsel %vm1386, %v1414, %v1416
        %v1418 = vrot.slane %v564, 1
        %v1419 = vsel %vm1386, %v1416, %v1418
        %v1420 = vrot.slane %v565, 1
        %v1421 = vsel %vm1386, %v1418, %v1420
        %v1422 = vrot.slane %v566, 1
        %v1423 = vsel %vm1386, %v1420, %v1422
        %v1424 = vrot.slane %v567, 1
        %v1425 = vsel %vm1386, %v1422, %v1424
        %v1426 = vrot.slane %v568, 1
        %v1427 = vsel %vm1386, %v1424, %v1426
        %v1428 = vrot.slane %v569, 1
        %v1429 = vsel %vm1386, %v1426, %v1428
        %v1430 = vrot.slane %v570, 1
        %v1431 = vsel %vm1386, %v1428, %v1430
        %v1432 = vrot.slane %v571, 1
        %v1433 = vsel %vm1386, %v1430, %v1432
        %v1434 = vrot.slane %v572, 1
        %v1435 = vsel %vm1386, %v1432, %v1434
        %v1436 = vrot.slane %v573, 1
        %v1437 = vsel %vm1386, %v1434, %v1436
        %v1438 = vrot.slane %v574, 1
        %v1439 = vsel %vm1386, %v1436, %v1438
        %v1440 = vrot.slane %v575, 1
        %v1441 = vsel %vm1386, %v1438, %v1440
        %v1442 = vrot.slane %v576, 1
        %v1443 = vsel %vm1386, %v1440, %v1442
        %v1444 = vrot.slane %v577, 1
        %v1445 = vsel %vm1386, %v1442, %v1444
        %v1446 = vrot.slane %v578, 1
        %v1447 = vsel %vm1386, %v1444, %v1446
        %v1448 = vrot.slane %v579, 1
        %v1449 = vsel %vm1386, %v1446, %v1448
        %v1450 = vrot.slane %v597, 1
        %v1451 = vsel %vm1386, %v1448, %v1450
        %v1453 = vsel %vm864, %v1389, 0
        %v1456 = vsel %vm864, %v1391, 0
        %v1459 = vsel %vm864, %v1393, 0
        %v1462 = vsel %vm864, %v1395, 0
        %v1465 = vsel %vm864, %v1397, 0
        %v1468 = vsel %vm864, %v1399, 0
        %v1471 = vsel %vm864, %v1401, 0
        %v1474 = vsel %vm864, %v1403, 0
        %v1477 = vsel %vm864, %v1405, 0
        %v1480 = vsel %vm864, %v1407, 0
        %v1483 = vsel %vm864, %v1409, 0
        %v1486 = vsel %vm864, %v1411, 0
        %v1489 = vsel %vm864, %v1413, 0
        %v1492 = vsel %vm864, %v1415, 0
        %v1495 = vsel %vm864, %v1417, 0
        %v1498 = vsel %vm864, %v1419, 0
        %v1501 = vsel %vm864, %v1421, 0
        %v1504 = vsel %vm864, %v1423, 0
        %v1507 = vsel %vm864, %v1425, 0
        %v1510 = vsel %vm864, %v1427, 0
        %v1513 = vsel %vm864, %v1429, 0
        %v1516 = vsel %vm864, %v1431, 0
        %v1519 = vsel %vm864, %v1433, 0
        %v1522 = vsel %vm864, %v1435, 0
        %v1525 = vsel %vm864, %v1437, 0
        %v1528 = vsel %vm864, %v1439, 0
        %v1531 = vsel %vm864, %v1441, 0
        %v1534 = vsel %vm864, %v1443, 0
        %v1537 = vsel %vm864, %v1445, 0
        %v1540 = vsel %vm864, %v1447, 0
        %v1543 = vsel %vm864, %v1449, 0
        %v1546 = vsel %vm864, %v1451, 0
        %v1549 = vsel %vm864, %v1450, 0
        %v1552 = vsel %vm964, %v1384, 0
        %1554 = vmatpush.bf16.msra.mxu0 0
        %1555 = vmatpush.bf16.msra.mxu0 0
        %1556 = vmatpush.bf16.msra.mxu0 0
        %1557 = vmatpush.bf16.msra.mxu0 0
        %1558 = vmatpush.bf16.msra.mxu0 0
        %1559 = vmatpush.bf16.msra.mxu0 0
        %1560 = vmatpush.bf16.msra.mxu0 0
        %1561 = vmatpush.bf16.msra.mxu0 %v1552
        %1562 = vmatmul.bf16.gmra.mxu0 %v1453
        %v1563 = vpop.f32.mrf.mxu0
        %v1564 = vadd.f32 0.0, %v1563
        %v1565 = vpop.f32.mrf.mxu0
        %v1566 = vadd.f32 0.0, %v1565
        %1567 = vmatmul.bf16.gmra.mxu0 %v1456
        %v1568 = vpop.f32.mrf.mxu0
        %v1569 = vadd.f32 0.0, %v1568
        %v1570 = vpop.f32.mrf.mxu0
        %v1571 = vadd.f32 0.0, %v1570
        %1572 = vmatmul.bf16.gmra.mxu0 %v1459
        %v1573 = vpop.f32.mrf.mxu0
        %v1574 = vadd.f32 0.0, %v1573
        %v1575 = vpop.f32.mrf.mxu0
        %v1576 = vadd.f32 0.0, %v1575
        %1577 = vmatmul.bf16.gmra.mxu0 %v1462
        %v1578 = vpop.f32.mrf.mxu0
        %v1579 = vadd.f32 0.0, %v1578
        %v1580 = vpop.f32.mrf.mxu0
        %v1581 = vadd.f32 0.0, %v1580
        %1582 = vmatmul.bf16.gmra.mxu0 %v1465
        %v1583 = vpop.f32.mrf.mxu0
        %v1584 = vadd.f32 0.0, %v1583
        %v1585 = vpop.f32.mrf.mxu0
        %v1586 = vadd.f32 0.0, %v1585
        %1587 = vmatmul.bf16.gmra.mxu0 %v1468
        %v1588 = vpop.f32.mrf.mxu0
        %v1589 = vadd.f32 0.0, %v1588
        %v1590 = vpop.f32.mrf.mxu0
        %v1591 = vadd.f32 0.0, %v1590
        %1592 = vmatmul.bf16.gmra.mxu0 %v1471
        %v1593 = vpop.f32.mrf.mxu0
        %v1594 = vadd.f32 0.0, %v1593
        %v1595 = vpop.f32.mrf.mxu0
        %v1596 = vadd.f32 0.0, %v1595
        %1597 = vmatmul.bf16.gmra.mxu0 %v1474
        %v1598 = vpop.f32.mrf.mxu0
        %v1599 = vadd.f32 0.0, %v1598
        %v1600 = vpop.f32.mrf.mxu0
        %v1601 = vadd.f32 0.0, %v1600
        %1602 = vmatmul.bf16.gmra.mxu0 %v1477
        %v1603 = vpop.f32.mrf.mxu0
        %v1604 = vadd.f32 0.0, %v1603
        %v1605 = vpop.f32.mrf.mxu0
        %v1606 = vadd.f32 0.0, %v1605
        %1607 = vmatmul.bf16.gmra.mxu0 %v1480
        %v1608 = vpop.f32.mrf.mxu0
        %v1609 = vadd.f32 0.0, %v1608
        %v1610 = vpop.f32.mrf.mxu0
        %v1611 = vadd.f32 0.0, %v1610
        %1612 = vmatmul.bf16.gmra.mxu0 %v1483
        %v1613 = vpop.f32.mrf.mxu0
        %v1614 = vadd.f32 0.0, %v1613
        %v1615 = vpop.f32.mrf.mxu0
        %v1616 = vadd.f32 0.0, %v1615
        %1617 = vmatmul.bf16.gmra.mxu0 %v1486
        %v1618 = vpop.f32.mrf.mxu0
        %v1619 = vadd.f32 0.0, %v1618
        %v1620 = vpop.f32.mrf.mxu0
        %v1621 = vadd.f32 0.0, %v1620
        %1622 = vmatmul.bf16.gmra.mxu0 %v1489
        %v1623 = vpop.f32.mrf.mxu0
        %v1624 = vadd.f32 0.0, %v1623
        %v1625 = vpop.f32.mrf.mxu0
        %v1626 = vadd.f32 0.0, %v1625
        %1627 = vmatmul.bf16.gmra.mxu0 %v1492
        %v1628 = vpop.f32.mrf.mxu0
        %v1629 = vadd.f32 0.0, %v1628
        %v1630 = vpop.f32.mrf.mxu0
        %v1631 = vadd.f32 0.0, %v1630
        %1632 = vmatmul.bf16.gmra.mxu0 %v1495
        %v1633 = vpop.f32.mrf.mxu0
        %v1634 = vadd.f32 0.0, %v1633
        %v1635 = vpop.f32.mrf.mxu0
        %v1636 = vadd.f32 0.0, %v1635
        %1637 = vmatmul.bf16.gmra.mxu0 %v1498
        %v1638 = vpop.f32.mrf.mxu0
        %v1639 = vadd.f32 0.0, %v1638
        %v1640 = vpop.f32.mrf.mxu0
        %v1641 = vadd.f32 0.0, %v1640
        %1642 = vmatmul.bf16.gmra.mxu0 %v1501
        %v1643 = vpop.f32.mrf.mxu0
        %v1644 = vadd.f32 0.0, %v1643
        %v1645 = vpop.f32.mrf.mxu0
        %v1646 = vadd.f32 0.0, %v1645
        %1647 = vmatmul.bf16.gmra.mxu0 %v1504
        %v1648 = vpop.f32.mrf.mxu0
        %v1649 = vadd.f32 0.0, %v1648
        %v1650 = vpop.f32.mrf.mxu0
        %v1651 = vadd.f32 0.0, %v1650
        %1652 = vmatmul.bf16.gmra.mxu0 %v1507
        %v1653 = vpop.f32.mrf.mxu0
        %v1654 = vadd.f32 0.0, %v1653
        %v1655 = vpop.f32.mrf.mxu0
        %v1656 = vadd.f32 0.0, %v1655
        %1657 = vmatmul.bf16.gmra.mxu0 %v1510
        %v1658 = vpop.f32.mrf.mxu0
        %v1659 = vadd.f32 0.0, %v1658
        %v1660 = vpop.f32.mrf.mxu0
        %v1661 = vadd.f32 0.0, %v1660
        %1662 = vmatmul.bf16.gmra.mxu0 %v1513
        %v1663 = vpop.f32.mrf.mxu0
        %v1664 = vadd.f32 0.0, %v1663
        %v1665 = vpop.f32.mrf.mxu0
        %v1666 = vadd.f32 0.0, %v1665
        %1667 = vmatmul.bf16.gmra.mxu0 %v1516
        %v1668 = vpop.f32.mrf.mxu0
        %v1669 = vadd.f32 0.0, %v1668
        %v1670 = vpop.f32.mrf.mxu0
        %v1671 = vadd.f32 0.0, %v1670
        %1672 = vmatmul.bf16.gmra.mxu0 %v1519
        %v1673 = vpop.f32.mrf.mxu0
        %v1674 = vadd.f32 0.0, %v1673
        %v1675 = vpop.f32.mrf.mxu0
        %v1676 = vadd.f32 0.0, %v1675
        %1677 = vmatmul.bf16.gmra.mxu0 %v1522
        %v1678 = vpop.f32.mrf.mxu0
        %v1679 = vadd.f32 0.0, %v1678
        %v1680 = vpop.f32.mrf.mxu0
        %v1681 = vadd.f32 0.0, %v1680
        %1682 = vmatmul.bf16.gmra.mxu0 %v1525
        %v1683 = vpop.f32.mrf.mxu0
        %v1684 = vadd.f32 0.0, %v1683
        %v1685 = vpop.f32.mrf.mxu0
        %v1686 = vadd.f32 0.0, %v1685
        %1687 = vmatmul.bf16.gmra.mxu0 %v1528
        %v1688 = vpop.f32.mrf.mxu0
        %v1689 = vadd.f32 0.0, %v1688
        %v1690 = vpop.f32.mrf.mxu0
        %v1691 = vadd.f32 0.0, %v1690
        %1692 = vmatmul.bf16.gmra.mxu0 %v1531
        %v1693 = vpop.f32.mrf.mxu0
        %v1694 = vadd.f32 0.0, %v1693
        %v1695 = vpop.f32.mrf.mxu0
        %v1696 = vadd.f32 0.0, %v1695
        %1697 = vmatmul.bf16.gmra.mxu0 %v1534
        %v1698 = vpop.f32.mrf.mxu0
        %v1699 = vadd.f32 0.0, %v1698
        %v1700 = vpop.f32.mrf.mxu0
        %v1701 = vadd.f32 0.0, %v1700
        %1702 = vmatmul.bf16.gmra.mxu0 %v1537
        %v1703 = vpop.f32.mrf.mxu0
        %v1704 = vadd.f32 0.0, %v1703
        %v1705 = vpop.f32.mrf.mxu0
        %v1706 = vadd.f32 0.0, %v1705
        %1707 = vmatmul.bf16.gmra.mxu0 %v1540
        %v1708 = vpop.f32.mrf.mxu0
        %v1709 = vadd.f32 0.0, %v1708
        %v1710 = vpop.f32.mrf.mxu0
        %v1711 = vadd.f32 0.0, %v1710
        %1712 = vmatmul.bf16.gmra.mxu0 %v1543
        %v1713 = vpop.f32.mrf.mxu0
        %v1714 = vadd.f32 0.0, %v1713
        %v1715 = vpop.f32.mrf.mxu0
        %v1716 = vadd.f32 0.0, %v1715
        %1717 = vmatmul.bf16.gmra.mxu0 %v1546
        %v1718 = vpop.f32.mrf.mxu0
        %v1719 = vadd.f32 0.0, %v1718
        %v1720 = vpop.f32.mrf.mxu0
        %v1721 = vadd.f32 0.0, %v1720
        %1722 = vmatmul.bf16.gmra.mxu0 %v1549
        %v1723 = vpop.f32.mrf.mxu0
        %v1724 = vadd.f32 0.0, %v1723
        %v1725 = vpop.f32.mrf.mxu0
        %1726 = vdwg.mxu0
        %v1727 = vadd.f32 %v1220, %v1564
        %v1728 = vadd.f32 %v1222, %v1566
        %v1729 = vadd.f32 %v1225, %v1569
        %v1730 = vadd.f32 %v1227, %v1571
        %v1731 = vadd.f32 %v1230, %v1574
        %v1732 = vadd.f32 %v1232, %v1576
        %v1733 = vadd.f32 %v1235, %v1579
        %v1734 = vadd.f32 %v1237, %v1581
        %v1735 = vadd.f32 %v1240, %v1584
        %v1736 = vadd.f32 %v1242, %v1586
        %v1737 = vadd.f32 %v1245, %v1589
        %v1738 = vadd.f32 %v1247, %v1591
        %v1739 = vadd.f32 %v1250, %v1594
        %v1740 = vadd.f32 %v1252, %v1596
        %v1741 = vadd.f32 %v1255, %v1599
        %v1742 = vadd.f32 %v1257, %v1601
        %v1743 = vadd.f32 %v1260, %v1604
        %v1744 = vadd.f32 %v1262, %v1606
        %v1745 = vadd.f32 %v1265, %v1609
        %v1746 = vadd.f32 %v1267, %v1611
        %v1747 = vadd.f32 %v1270, %v1614
        %v1748 = vadd.f32 %v1272, %v1616
        %v1749 = vadd.f32 %v1275, %v1619
        %v1750 = vadd.f32 %v1277, %v1621
        %v1751 = vadd.f32 %v1280, %v1624
        %v1752 = vadd.f32 %v1282, %v1626
        %v1753 = vadd.f32 %v1285, %v1629
        %v1754 = vadd.f32 %v1287, %v1631
        %v1755 = vadd.f32 %v1290, %v1634
        %v1756 = vadd.f32 %v1292, %v1636
        %v1757 = vadd.f32 %v1295, %v1639
        %v1758 = vadd.f32 %v1297, %v1641
        %v1759 = vadd.f32 %v1300, %v1644
        %v1760 = vadd.f32 %v1302, %v1646
        %v1761 = vadd.f32 %v1305, %v1649
        %v1762 = vadd.f32 %v1307, %v1651
        %v1763 = vadd.f32 %v1310, %v1654
        %v1764 = vadd.f32 %v1312, %v1656
        %v1765 = vadd.f32 %v1315, %v1659
        %v1766 = vadd.f32 %v1317, %v1661
        %v1767 = vadd.f32 %v1320, %v1664
        %v1768 = vadd.f32 %v1322, %v1666
        %v1769 = vadd.f32 %v1325, %v1669
        %v1770 = vadd.f32 %v1327, %v1671
        %v1771 = vadd.f32 %v1330, %v1674
        %v1772 = vadd.f32 %v1332, %v1676
        %v1773 = vadd.f32 %v1335, %v1679
        %v1774 = vadd.f32 %v1337, %v1681
        %v1775 = vadd.f32 %v1340, %v1684
        %v1776 = vadd.f32 %v1342, %v1686
        %v1777 = vadd.f32 %v1345, %v1689
        %v1778 = vadd.f32 %v1347, %v1691
        %v1779 = vadd.f32 %v1350, %v1694
        %v1780 = vadd.f32 %v1352, %v1696
        %v1781 = vadd.f32 %v1355, %v1699
        %v1782 = vadd.f32 %v1357, %v1701
        %v1783 = vadd.f32 %v1360, %v1704
        %v1784 = vadd.f32 %v1362, %v1706
        %v1785 = vadd.f32 %v1365, %v1709
        %v1786 = vadd.f32 %v1367, %v1711
        %v1787 = vadd.f32 %v1370, %v1714
        %v1788 = vadd.f32 %v1372, %v1716
        %v1789 = vadd.f32 %v1375, %v1719
        %v1790 = vadd.f32 %v1377, %v1721
        %v1791 = vadd.f32 %v1380, %v1724
        %s1792 = scalar_lea.vmem %s2, 6
        %v1793 = vld [vmem:[%s1792] sm:$0x3]
        %v1794 = vrot.slane %v592, 1
        %v1795 = vsel %vm1386, %v1450, %v1794
        %v1797 = vsel %vm864, %v1795, 0
        %v1800 = vsel %vm864, %v1794, 0
        %v1803 = vsel %vm964, %v1793, 0
        %1805 = vmatpush.bf16.msra.mxu0 0
        %1806 = vmatpush.bf16.msra.mxu0 0
        %1807 = vmatpush.bf16.msra.mxu0 0
        %1808 = vmatpush.bf16.msra.mxu0 0
        %1809 = vmatpush.bf16.msra.mxu0 0
        %1810 = vmatpush.bf16.msra.mxu0 0
        %1811 = vmatpush.bf16.msra.mxu0 0
        %1812 = vmatpush.bf16.msra.mxu0 %v1803
        %1813 = vmatmul.bf16.gmra.mxu0 %v1456
        %v1814 = vpop.f32.mrf.mxu0
        %v1815 = vadd.f32 0.0, %v1814
        %v1816 = vpop.f32.mrf.mxu0
        %v1817 = vadd.f32 0.0, %v1816
        %1818 = vmatmul.bf16.gmra.mxu0 %v1459
        %v1819 = vpop.f32.mrf.mxu0
        %v1820 = vadd.f32 0.0, %v1819
        %v1821 = vpop.f32.mrf.mxu0
        %v1822 = vadd.f32 0.0, %v1821
        %1823 = vmatmul.bf16.gmra.mxu0 %v1462
        %v1824 = vpop.f32.mrf.mxu0
        %v1825 = vadd.f32 0.0, %v1824
        %v1826 = vpop.f32.mrf.mxu0
        %v1827 = vadd.f32 0.0, %v1826
        %1828 = vmatmul.bf16.gmra.mxu0 %v1465
        %v1829 = vpop.f32.mrf.mxu0
        %v1830 = vadd.f32 0.0, %v1829
        %v1831 = vpop.f32.mrf.mxu0
        %v1832 = vadd.f32 0.0, %v1831
        %1833 = vmatmul.bf16.gmra.mxu0 %v1468
        %v1834 = vpop.f32.mrf.mxu0
        %v1835 = vadd.f32 0.0, %v1834
        %v1836 = vpop.f32.mrf.mxu0
        %v1837 = vadd.f32 0.0, %v1836
        %1838 = vmatmul.bf16.gmra.mxu0 %v1471
        %v1839 = vpop.f32.mrf.mxu0
        %v1840 = vadd.f32 0.0, %v1839
        %v1841 = vpop.f32.mrf.mxu0
        %v1842 = vadd.f32 0.0, %v1841
        %1843 = vmatmul.bf16.gmra.mxu0 %v1474
        %v1844 = vpop.f32.mrf.mxu0
        %v1845 = vadd.f32 0.0, %v1844
        %v1846 = vpop.f32.mrf.mxu0
        %v1847 = vadd.f32 0.0, %v1846
        %1848 = vmatmul.bf16.gmra.mxu0 %v1477
        %v1849 = vpop.f32.mrf.mxu0
        %v1850 = vadd.f32 0.0, %v1849
        %v1851 = vpop.f32.mrf.mxu0
        %v1852 = vadd.f32 0.0, %v1851
        %1853 = vmatmul.bf16.gmra.mxu0 %v1480
        %v1854 = vpop.f32.mrf.mxu0
        %v1855 = vadd.f32 0.0, %v1854
        %v1856 = vpop.f32.mrf.mxu0
        %v1857 = vadd.f32 0.0, %v1856
        %1858 = vmatmul.bf16.gmra.mxu0 %v1483
        %v1859 = vpop.f32.mrf.mxu0
        %v1860 = vadd.f32 0.0, %v1859
        %v1861 = vpop.f32.mrf.mxu0
        %v1862 = vadd.f32 0.0, %v1861
        %1863 = vmatmul.bf16.gmra.mxu0 %v1486
        %v1864 = vpop.f32.mrf.mxu0
        %v1865 = vadd.f32 0.0, %v1864
        %v1866 = vpop.f32.mrf.mxu0
        %v1867 = vadd.f32 0.0, %v1866
        %1868 = vmatmul.bf16.gmra.mxu0 %v1489
        %v1869 = vpop.f32.mrf.mxu0
        %v1870 = vadd.f32 0.0, %v1869
        %v1871 = vpop.f32.mrf.mxu0
        %v1872 = vadd.f32 0.0, %v1871
        %1873 = vmatmul.bf16.gmra.mxu0 %v1492
        %v1874 = vpop.f32.mrf.mxu0
        %v1875 = vadd.f32 0.0, %v1874
        %v1876 = vpop.f32.mrf.mxu0
        %v1877 = vadd.f32 0.0, %v1876
        %1878 = vmatmul.bf16.gmra.mxu0 %v1495
        %v1879 = vpop.f32.mrf.mxu0
        %v1880 = vadd.f32 0.0, %v1879
        %v1881 = vpop.f32.mrf.mxu0
        %v1882 = vadd.f32 0.0, %v1881
        %1883 = vmatmul.bf16.gmra.mxu0 %v1498
        %v1884 = vpop.f32.mrf.mxu0
        %v1885 = vadd.f32 0.0, %v1884
        %v1886 = vpop.f32.mrf.mxu0
        %v1887 = vadd.f32 0.0, %v1886
        %1888 = vmatmul.bf16.gmra.mxu0 %v1501
        %v1889 = vpop.f32.mrf.mxu0
        %v1890 = vadd.f32 0.0, %v1889
        %v1891 = vpop.f32.mrf.mxu0
        %v1892 = vadd.f32 0.0, %v1891
        %1893 = vmatmul.bf16.gmra.mxu0 %v1504
        %v1894 = vpop.f32.mrf.mxu0
        %v1895 = vadd.f32 0.0, %v1894
        %v1896 = vpop.f32.mrf.mxu0
        %v1897 = vadd.f32 0.0, %v1896
        %1898 = vmatmul.bf16.gmra.mxu0 %v1507
        %v1899 = vpop.f32.mrf.mxu0
        %v1900 = vadd.f32 0.0, %v1899
        %v1901 = vpop.f32.mrf.mxu0
        %v1902 = vadd.f32 0.0, %v1901
        %1903 = vmatmul.bf16.gmra.mxu0 %v1510
        %v1904 = vpop.f32.mrf.mxu0
        %v1905 = vadd.f32 0.0, %v1904
        %v1906 = vpop.f32.mrf.mxu0
        %v1907 = vadd.f32 0.0, %v1906
        %1908 = vmatmul.bf16.gmra.mxu0 %v1513
        %v1909 = vpop.f32.mrf.mxu0
        %v1910 = vadd.f32 0.0, %v1909
        %v1911 = vpop.f32.mrf.mxu0
        %v1912 = vadd.f32 0.0, %v1911
        %1913 = vmatmul.bf16.gmra.mxu0 %v1516
        %v1914 = vpop.f32.mrf.mxu0
        %v1915 = vadd.f32 0.0, %v1914
        %v1916 = vpop.f32.mrf.mxu0
        %v1917 = vadd.f32 0.0, %v1916
        %1918 = vmatmul.bf16.gmra.mxu0 %v1519
        %v1919 = vpop.f32.mrf.mxu0
        %v1920 = vadd.f32 0.0, %v1919
        %v1921 = vpop.f32.mrf.mxu0
        %v1922 = vadd.f32 0.0, %v1921
        %1923 = vmatmul.bf16.gmra.mxu0 %v1522
        %v1924 = vpop.f32.mrf.mxu0
        %v1925 = vadd.f32 0.0, %v1924
        %v1926 = vpop.f32.mrf.mxu0
        %v1927 = vadd.f32 0.0, %v1926
        %1928 = vmatmul.bf16.gmra.mxu0 %v1525
        %v1929 = vpop.f32.mrf.mxu0
        %v1930 = vadd.f32 0.0, %v1929
        %v1931 = vpop.f32.mrf.mxu0
        %v1932 = vadd.f32 0.0, %v1931
        %1933 = vmatmul.bf16.gmra.mxu0 %v1528
        %v1934 = vpop.f32.mrf.mxu0
        %v1935 = vadd.f32 0.0, %v1934
        %v1936 = vpop.f32.mrf.mxu0
        %v1937 = vadd.f32 0.0, %v1936
        %1938 = vmatmul.bf16.gmra.mxu0 %v1531
        %v1939 = vpop.f32.mrf.mxu0
        %v1940 = vadd.f32 0.0, %v1939
        %v1941 = vpop.f32.mrf.mxu0
        %v1942 = vadd.f32 0.0, %v1941
        %1943 = vmatmul.bf16.gmra.mxu0 %v1534
        %v1944 = vpop.f32.mrf.mxu0
        %v1945 = vadd.f32 0.0, %v1944
        %v1946 = vpop.f32.mrf.mxu0
        %v1947 = vadd.f32 0.0, %v1946
        %1948 = vmatmul.bf16.gmra.mxu0 %v1537
        %v1949 = vpop.f32.mrf.mxu0
        %v1950 = vadd.f32 0.0, %v1949
        %v1951 = vpop.f32.mrf.mxu0
        %v1952 = vadd.f32 0.0, %v1951
        %1953 = vmatmul.bf16.gmra.mxu0 %v1540
        %v1954 = vpop.f32.mrf.mxu0
        %v1955 = vadd.f32 0.0, %v1954
        %v1956 = vpop.f32.mrf.mxu0
        %v1957 = vadd.f32 0.0, %v1956
        %1958 = vmatmul.bf16.gmra.mxu0 %v1543
        %v1959 = vpop.f32.mrf.mxu0
        %v1960 = vadd.f32 0.0, %v1959
        %v1961 = vpop.f32.mrf.mxu0
        %v1962 = vadd.f32 0.0, %v1961
        %1963 = vmatmul.bf16.gmra.mxu0 %v1546
        %v1964 = vpop.f32.mrf.mxu0
        %v1965 = vadd.f32 0.0, %v1964
        %v1966 = vpop.f32.mrf.mxu0
        %v1967 = vadd.f32 0.0, %v1966
        %1968 = vmatmul.bf16.gmra.mxu0 %v1797
        %v1969 = vpop.f32.mrf.mxu0
        %v1970 = vadd.f32 0.0, %v1969
        %v1971 = vpop.f32.mrf.mxu0
        %v1972 = vadd.f32 0.0, %v1971
        %1973 = vmatmul.bf16.gmra.mxu0 %v1800
        %v1974 = vpop.f32.mrf.mxu0
        %v1975 = vadd.f32 0.0, %v1974
        %v1976 = vpop.f32.mrf.mxu0
        %1977 = vdwg.mxu0
        %v1978 = vadd.f32 %v1727, %v1815
        %v1979 = vadd.f32 %v1728, %v1817
        %v1980 = vadd.f32 %v1729, %v1820
        %v1981 = vadd.f32 %v1730, %v1822
        %v1982 = vadd.f32 %v1731, %v1825
        %v1983 = vadd.f32 %v1732, %v1827
        %v1984 = vadd.f32 %v1733, %v1830
        %v1985 = vadd.f32 %v1734, %v1832
        %v1986 = vadd.f32 %v1735, %v1835
        %v1987 = vadd.f32 %v1736, %v1837
        %v1988 = vadd.f32 %v1737, %v1840
        %v1989 = vadd.f32 %v1738, %v1842
        %v1990 = vadd.f32 %v1739, %v1845
        %v1991 = vadd.f32 %v1740, %v1847
        %v1992 = vadd.f32 %v1741, %v1850
        %v1993 = vadd.f32 %v1742, %v1852
        %v1994 = vadd.f32 %v1743, %v1855
        %v1995 = vadd.f32 %v1744, %v1857
        %v1996 = vadd.f32 %v1745, %v1860
        %v1997 = vadd.f32 %v1746, %v1862
        %v1998 = vadd.f32 %v1747, %v1865
        %v1999 = vadd.f32 %v1748, %v1867
        %v2000 = vadd.f32 %v1749, %v1870
        %v2001 = vadd.f32 %v1750, %v1872
        %v2002 = vadd.f32 %v1751, %v1875
        %v2003 = vadd.f32 %v1752, %v1877
        %v2004 = vadd.f32 %v1753, %v1880
        %v2005 = vadd.f32 %v1754, %v1882
        %v2006 = vadd.f32 %v1755, %v1885
        %v2007 = vadd.f32 %v1756, %v1887
        %v2008 = vadd.f32 %v1757, %v1890
        %v2009 = vadd.f32 %v1758, %v1892
        %v2010 = vadd.f32 %v1759, %v1895
        %v2011 = vadd.f32 %v1760, %v1897
        %v2012 = vadd.f32 %v1761, %v1900
        %v2013 = vadd.f32 %v1762, %v1902
        %v2014 = vadd.f32 %v1763, %v1905
        %v2015 = vadd.f32 %v1764, %v1907
        %v2016 = vadd.f32 %v1765, %v1910
        %v2017 = vadd.f32 %v1766, %v1912
        %v2018 = vadd.f32 %v1767, %v1915
        %v2019 = vadd.f32 %v1768, %v1917
        %v2020 = vadd.f32 %v1769, %v1920
        %v2021 = vadd.f32 %v1770, %v1922
        %v2022 = vadd.f32 %v1771, %v1925
        %v2023 = vadd.f32 %v1772, %v1927
        %v2024 = vadd.f32 %v1773, %v1930
        %v2025 = vadd.f32 %v1774, %v1932
        %v2026 = vadd.f32 %v1775, %v1935
        %v2027 = vadd.f32 %v1776, %v1937
        %v2028 = vadd.f32 %v1777, %v1940
        %v2029 = vadd.f32 %v1778, %v1942
        %v2030 = vadd.f32 %v1779, %v1945
        %v2031 = vadd.f32 %v1780, %v1947
        %v2032 = vadd.f32 %v1781, %v1950
        %v2033 = vadd.f32 %v1782, %v1952
        %v2034 = vadd.f32 %v1783, %v1955
        %v2035 = vadd.f32 %v1784, %v1957
        %v2036 = vadd.f32 %v1785, %v1960
        %v2037 = vadd.f32 %v1786, %v1962
        %v2038 = vadd.f32 %v1787, %v1965
        %v2039 = vadd.f32 %v1788, %v1967
        %v2040 = vadd.f32 %v1789, %v1970
        %v2041 = vadd.f32 %v1790, %v1972
        %v2042 = vadd.f32 %v1791, %v1975
        %s2043 = scalar_lea.vmem %s2, 8
        %v2044 = vld [vmem:[%s2043] sm:$0x3]
        %vm2045 = vsmask.f32 6400
        %v2046 = vrot.slane %v614, 1
        %v2047 = vrot.slane %v610, 2
        %v2048 = vor.u32 %v2046, %v2047
        %v2049 = vrot.slane %v622, 1
        %v2050 = vrot.slane %v618, 2
        %v2051 = vor.u32 %v2049, %v2050
        %v2052 = vsel %vm2045, %v2048, %v2051
        %v2053 = vrot.slane %v630, 1
        %v2054 = vrot.slane %v626, 2
        %v2055 = vor.u32 %v2053, %v2054
        %v2056 = vsel %vm2045, %v2051, %v2055
        %v2057 = vrot.slane %v638, 1
        %v2058 = vrot.slane %v634, 2
        %v2059 = vor.u32 %v2057, %v2058
        %v2060 = vsel %vm2045, %v2055, %v2059
        %v2061 = vrot.slane %v646, 1
        %v2062 = vrot.slane %v642, 2
        %v2063 = vor.u32 %v2061, %v2062
        %v2064 = vsel %vm2045, %v2059, %v2063
        %v2065 = vrot.slane %v654, 1
        %v2066 = vrot.slane %v650, 2
        %v2067 = vor.u32 %v2065, %v2066
        %v2068 = vsel %vm2045, %v2063, %v2067
        %v2069 = vrot.slane %v662, 1
        %v2070 = vrot.slane %v658, 2
        %v2071 = vor.u32 %v2069, %v2070
        %v2072 = vsel %vm2045, %v2067, %v2071
        %v2073 = vrot.slane %v670, 1
        %v2074 = vrot.slane %v666, 2
        %v2075 = vor.u32 %v2073, %v2074
        %v2076 = vsel %vm2045, %v2071, %v2075
        %v2077 = vrot.slane %v678, 1
        %v2078 = vrot.slane %v674, 2
        %v2079 = vor.u32 %v2077, %v2078
        %v2080 = vsel %vm2045, %v2075, %v2079
        %v2081 = vrot.slane %v686, 1
        %v2082 = vrot.slane %v682, 2
        %v2083 = vor.u32 %v2081, %v2082
        %v2084 = vsel %vm2045, %v2079, %v2083
        %v2085 = vrot.slane %v694, 1
        %v2086 = vrot.slane %v690, 2
        %v2087 = vor.u32 %v2085, %v2086
        %v2088 = vsel %vm2045, %v2083, %v2087
        %v2089 = vrot.slane %v702, 1
        %v2090 = vrot.slane %v698, 2
        %v2091 = vor.u32 %v2089, %v2090
        %v2092 = vsel %vm2045, %v2087, %v2091
        %v2093 = vrot.slane %v710, 1
        %v2094 = vrot.slane %v706, 2
        %v2095 = vor.u32 %v2093, %v2094
        %v2096 = vsel %vm2045, %v2091, %v2095
        %v2097 = vrot.slane %v718, 1
        %v2098 = vrot.slane %v714, 2
        %v2099 = vor.u32 %v2097, %v2098
        %v2100 = vsel %vm2045, %v2095, %v2099
        %v2101 = vrot.slane %v726, 1
        %v2102 = vrot.slane %v722, 2
        %v2103 = vor.u32 %v2101, %v2102
        %v2104 = vsel %vm2045, %v2099, %v2103
        %v2105 = vrot.slane %v734, 1
        %v2106 = vrot.slane %v730, 2
        %v2107 = vor.u32 %v2105, %v2106
        %v2108 = vsel %vm2045, %v2103, %v2107
        %v2109 = vrot.slane %v742, 1
        %v2110 = vrot.slane %v738, 2
        %v2111 = vor.u32 %v2109, %v2110
        %v2112 = vsel %vm2045, %v2107, %v2111
        %v2113 = vrot.slane %v750, 1
        %v2114 = vrot.slane %v746, 2
        %v2115 = vor.u32 %v2113, %v2114
        %v2116 = vsel %vm2045, %v2111, %v2115
        %v2117 = vrot.slane %v758, 1
        %v2118 = vrot.slane %v754, 2
        %v2119 = vor.u32 %v2117, %v2118
        %v2120 = vsel %vm2045, %v2115, %v2119
        %v2121 = vrot.slane %v766, 1
        %v2122 = vrot.slane %v762, 2
        %v2123 = vor.u32 %v2121, %v2122
        %v2124 = vsel %vm2045, %v2119, %v2123
        %v2125 = vrot.slane %v774, 1
        %v2126 = vrot.slane %v770, 2
        %v2127 = vor.u32 %v2125, %v2126
        %v2128 = vsel %vm2045, %v2123, %v2127
        %v2129 = vrot.slane %v782, 1
        %v2130 = vrot.slane %v778, 2
        %v2131 = vor.u32 %v2129, %v2130
        %v2132 = vsel %vm2045, %v2127, %v2131
        %v2133 = vrot.slane %v790, 1
        %v2134 = vrot.slane %v786, 2
        %v2135 = vor.u32 %v2133, %v2134
        %v2136 = vsel %vm2045, %v2131, %v2135
        %v2137 = vrot.slane %v798, 1
        %v2138 = vrot.slane %v794, 2
        %v2139 = vor.u32 %v2137, %v2138
        %v2140 = vsel %vm2045, %v2135, %v2139
        %v2141 = vrot.slane %v806, 1
        %v2142 = vrot.slane %v802, 2
        %v2143 = vor.u32 %v2141, %v2142
        %v2144 = vsel %vm2045, %v2139, %v2143
        %v2145 = vrot.slane %v814, 1
        %v2146 = vrot.slane %v810, 2
        %v2147 = vor.u32 %v2145, %v2146
        %v2148 = vsel %vm2045, %v2143, %v2147
        %v2149 = vrot.slane %v822, 1
        %v2150 = vrot.slane %v818, 2
        %v2151 = vor.u32 %v2149, %v2150
        %v2152 = vsel %vm2045, %v2147, %v2151
        %v2153 = vrot.slane %v830, 1
        %v2154 = vrot.slane %v826, 2
        %v2155 = vor.u32 %v2153, %v2154
        %v2156 = vsel %vm2045, %v2151, %v2155
        %v2157 = vrot.slane %v838, 1
        %v2158 = vrot.slane %v834, 2
        %v2159 = vor.u32 %v2157, %v2158
        %v2160 = vsel %vm2045, %v2155, %v2159
        %v2161 = vrot.slane %v846, 1
        %v2162 = vrot.slane %v842, 2
        %v2163 = vor.u32 %v2161, %v2162
        %v2164 = vsel %vm2045, %v2159, %v2163
        %v2165 = vrot.slane %v854, 1
        %v2166 = vrot.slane %v850, 2
        %v2167 = vor.u32 %v2165, %v2166
        %v2168 = vsel %vm2045, %v2163, %v2167
        %v2169 = vrot.slane %v861, 1
        %v2170 = vrot.slane %v857, 2
        %v2171 = vor.u32 %v2169, %v2170
        %v2172 = vsel %vm2045, %v2167, %v2171
        %v2174 = vshrl.u32 %v592, 16
        %v2176 = vrot.slane %v2174, 1
        %v2177 = vshll.u32 %v592, 16
        %v2179 = vrot.slane %v2177, 2
        %v2180 = vor.u32 %v2176, %v2179
        %v2181 = vsel %vm2045, %v2171, %v2180
        %v2183 = vsel %vm864, %v2052, 0
        %v2186 = vsel %vm864, %v2056, 0
        %v2189 = vsel %vm864, %v2060, 0
        %v2192 = vsel %vm864, %v2064, 0
        %v2195 = vsel %vm864, %v2068, 0
        %v2198 = vsel %vm864, %v2072, 0
        %v2201 = vsel %vm864, %v2076, 0
        %v2204 = vsel %vm864, %v2080, 0
        %v2207 = vsel %vm864, %v2084, 0
        %v2210 = vsel %vm864, %v2088, 0
        %v2213 = vsel %vm864, %v2092, 0
        %v2216 = vsel %vm864, %v2096, 0
        %v2219 = vsel %vm864, %v2100, 0
        %v2222 = vsel %vm864, %v2104, 0
        %v2225 = vsel %vm864, %v2108, 0
        %v2228 = vsel %vm864, %v2112, 0
        %v2231 = vsel %vm864, %v2116, 0
        %v2234 = vsel %vm864, %v2120, 0
        %v2237 = vsel %vm864, %v2124, 0
        %v2240 = vsel %vm864, %v2128, 0
        %v2243 = vsel %vm864, %v2132, 0
        %v2246 = vsel %vm864, %v2136, 0
        %v2249 = vsel %vm864, %v2140, 0
        %v2252 = vsel %vm864, %v2144, 0
        %v2255 = vsel %vm864, %v2148, 0
        %v2258 = vsel %vm864, %v2152, 0
        %v2261 = vsel %vm864, %v2156, 0
        %v2264 = vsel %vm864, %v2160, 0
        %v2267 = vsel %vm864, %v2164, 0
        %v2270 = vsel %vm864, %v2168, 0
        %v2273 = vsel %vm864, %v2172, 0
        %v2276 = vsel %vm864, %v2181, 0
        %v2279 = vsel %vm864, %v2180, 0
        %v2282 = vsel %vm964, %v2044, 0
        %2284 = vmatpush.bf16.msra.mxu0 0
        %2285 = vmatpush.bf16.msra.mxu0 0
        %2286 = vmatpush.bf16.msra.mxu0 0
        %2287 = vmatpush.bf16.msra.mxu0 0
        %2288 = vmatpush.bf16.msra.mxu0 0
        %2289 = vmatpush.bf16.msra.mxu0 0
        %2290 = vmatpush.bf16.msra.mxu0 0
        %2291 = vmatpush.bf16.msra.mxu0 %v2282
        %2292 = vmatmul.bf16.gmra.mxu0 %v2183
        %v2293 = vpop.f32.mrf.mxu0
        %v2294 = vadd.f32 0.0, %v2293
        %v2295 = vpop.f32.mrf.mxu0
        %v2296 = vadd.f32 0.0, %v2295
        %2297 = vmatmul.bf16.gmra.mxu0 %v2186
        %v2298 = vpop.f32.mrf.mxu0
        %v2299 = vadd.f32 0.0, %v2298
        %v2300 = vpop.f32.mrf.mxu0
        %v2301 = vadd.f32 0.0, %v2300
        %2302 = vmatmul.bf16.gmra.mxu0 %v2189
        %v2303 = vpop.f32.mrf.mxu0
        %v2304 = vadd.f32 0.0, %v2303
        %v2305 = vpop.f32.mrf.mxu0
        %v2306 = vadd.f32 0.0, %v2305
        %2307 = vmatmul.bf16.gmra.mxu0 %v2192
        %v2308 = vpop.f32.mrf.mxu0
        %v2309 = vadd.f32 0.0, %v2308
        %v2310 = vpop.f32.mrf.mxu0
        %v2311 = vadd.f32 0.0, %v2310
        %2312 = vmatmul.bf16.gmra.mxu0 %v2195
        %v2313 = vpop.f32.mrf.mxu0
        %v2314 = vadd.f32 0.0, %v2313
        %v2315 = vpop.f32.mrf.mxu0
        %v2316 = vadd.f32 0.0, %v2315
        %2317 = vmatmul.bf16.gmra.mxu0 %v2198
        %v2318 = vpop.f32.mrf.mxu0
        %v2319 = vadd.f32 0.0, %v2318
        %v2320 = vpop.f32.mrf.mxu0
        %v2321 = vadd.f32 0.0, %v2320
        %2322 = vmatmul.bf16.gmra.mxu0 %v2201
        %v2323 = vpop.f32.mrf.mxu0
        %v2324 = vadd.f32 0.0, %v2323
        %v2325 = vpop.f32.mrf.mxu0
        %v2326 = vadd.f32 0.0, %v2325
        %2327 = vmatmul.bf16.gmra.mxu0 %v2204
        %v2328 = vpop.f32.mrf.mxu0
        %v2329 = vadd.f32 0.0, %v2328
        %v2330 = vpop.f32.mrf.mxu0
        %v2331 = vadd.f32 0.0, %v2330
        %2332 = vmatmul.bf16.gmra.mxu0 %v2207
        %v2333 = vpop.f32.mrf.mxu0
        %v2334 = vadd.f32 0.0, %v2333
        %v2335 = vpop.f32.mrf.mxu0
        %v2336 = vadd.f32 0.0, %v2335
        %2337 = vmatmul.bf16.gmra.mxu0 %v2210
        %v2338 = vpop.f32.mrf.mxu0
        %v2339 = vadd.f32 0.0, %v2338
        %v2340 = vpop.f32.mrf.mxu0
        %v2341 = vadd.f32 0.0, %v2340
        %2342 = vmatmul.bf16.gmra.mxu0 %v2213
        %v2343 = vpop.f32.mrf.mxu0
        %v2344 = vadd.f32 0.0, %v2343
        %v2345 = vpop.f32.mrf.mxu0
        %v2346 = vadd.f32 0.0, %v2345
        %2347 = vmatmul.bf16.gmra.mxu0 %v2216
        %v2348 = vpop.f32.mrf.mxu0
        %v2349 = vadd.f32 0.0, %v2348
        %v2350 = vpop.f32.mrf.mxu0
        %v2351 = vadd.f32 0.0, %v2350
        %2352 = vmatmul.bf16.gmra.mxu0 %v2219
        %v2353 = vpop.f32.mrf.mxu0
        %v2354 = vadd.f32 0.0, %v2353
        %v2355 = vpop.f32.mrf.mxu0
        %v2356 = vadd.f32 0.0, %v2355
        %2357 = vmatmul.bf16.gmra.mxu0 %v2222
        %v2358 = vpop.f32.mrf.mxu0
        %v2359 = vadd.f32 0.0, %v2358
        %v2360 = vpop.f32.mrf.mxu0
        %v2361 = vadd.f32 0.0, %v2360
        %2362 = vmatmul.bf16.gmra.mxu0 %v2225
        %v2363 = vpop.f32.mrf.mxu0
        %v2364 = vadd.f32 0.0, %v2363
        %v2365 = vpop.f32.mrf.mxu0
        %v2366 = vadd.f32 0.0, %v2365
        %2367 = vmatmul.bf16.gmra.mxu0 %v2228
        %v2368 = vpop.f32.mrf.mxu0
        %v2369 = vadd.f32 0.0, %v2368
        %v2370 = vpop.f32.mrf.mxu0
        %v2371 = vadd.f32 0.0, %v2370
        %2372 = vmatmul.bf16.gmra.mxu0 %v2231
        %v2373 = vpop.f32.mrf.mxu0
        %v2374 = vadd.f32 0.0, %v2373
        %v2375 = vpop.f32.mrf.mxu0
        %v2376 = vadd.f32 0.0, %v2375
        %2377 = vmatmul.bf16.gmra.mxu0 %v2234
        %v2378 = vpop.f32.mrf.mxu0
        %v2379 = vadd.f32 0.0, %v2378
        %v2380 = vpop.f32.mrf.mxu0
        %v2381 = vadd.f32 0.0, %v2380
        %2382 = vmatmul.bf16.gmra.mxu0 %v2237
        %v2383 = vpop.f32.mrf.mxu0
        %v2384 = vadd.f32 0.0, %v2383
        %v2385 = vpop.f32.mrf.mxu0
        %v2386 = vadd.f32 0.0, %v2385
        %2387 = vmatmul.bf16.gmra.mxu0 %v2240
        %v2388 = vpop.f32.mrf.mxu0
        %v2389 = vadd.f32 0.0, %v2388
        %v2390 = vpop.f32.mrf.mxu0
        %v2391 = vadd.f32 0.0, %v2390
        %2392 = vmatmul.bf16.gmra.mxu0 %v2243
        %v2393 = vpop.f32.mrf.mxu0
        %v2394 = vadd.f32 0.0, %v2393
        %v2395 = vpop.f32.mrf.mxu0
        %v2396 = vadd.f32 0.0, %v2395
        %2397 = vmatmul.bf16.gmra.mxu0 %v2246
        %v2398 = vpop.f32.mrf.mxu0
        %v2399 = vadd.f32 0.0, %v2398
        %v2400 = vpop.f32.mrf.mxu0
        %v2401 = vadd.f32 0.0, %v2400
        %2402 = vmatmul.bf16.gmra.mxu0 %v2249
        %v2403 = vpop.f32.mrf.mxu0
        %v2404 = vadd.f32 0.0, %v2403
        %v2405 = vpop.f32.mrf.mxu0
        %v2406 = vadd.f32 0.0, %v2405
        %2407 = vmatmul.bf16.gmra.mxu0 %v2252
        %v2408 = vpop.f32.mrf.mxu0
        %v2409 = vadd.f32 0.0, %v2408
        %v2410 = vpop.f32.mrf.mxu0
        %v2411 = vadd.f32 0.0, %v2410
        %2412 = vmatmul.bf16.gmra.mxu0 %v2255
        %v2413 = vpop.f32.mrf.mxu0
        %v2414 = vadd.f32 0.0, %v2413
        %v2415 = vpop.f32.mrf.mxu0
        %v2416 = vadd.f32 0.0, %v2415
        %2417 = vmatmul.bf16.gmra.mxu0 %v2258
        %v2418 = vpop.f32.mrf.mxu0
        %v2419 = vadd.f32 0.0, %v2418
        %v2420 = vpop.f32.mrf.mxu0
        %v2421 = vadd.f32 0.0, %v2420
        %2422 = vmatmul.bf16.gmra.mxu0 %v2261
        %v2423 = vpop.f32.mrf.mxu0
        %v2424 = vadd.f32 0.0, %v2423
        %v2425 = vpop.f32.mrf.mxu0
        %v2426 = vadd.f32 0.0, %v2425
        %2427 = vmatmul.bf16.gmra.mxu0 %v2264
        %v2428 = vpop.f32.mrf.mxu0
        %v2429 = vadd.f32 0.0, %v2428
        %v2430 = vpop.f32.mrf.mxu0
        %v2431 = vadd.f32 0.0, %v2430
        %2432 = vmatmul.bf16.gmra.mxu0 %v2267
        %v2433 = vpop.f32.mrf.mxu0
        %v2434 = vadd.f32 0.0, %v2433
        %v2435 = vpop.f32.mrf.mxu0
        %v2436 = vadd.f32 0.0, %v2435
        %2437 = vmatmul.bf16.gmra.mxu0 %v2270
        %v2438 = vpop.f32.mrf.mxu0
        %v2439 = vadd.f32 0.0, %v2438
        %v2440 = vpop.f32.mrf.mxu0
        %v2441 = vadd.f32 0.0, %v2440
        %2442 = vmatmul.bf16.gmra.mxu0 %v2273
        %v2443 = vpop.f32.mrf.mxu0
        %v2444 = vadd.f32 0.0, %v2443
        %v2445 = vpop.f32.mrf.mxu0
        %v2446 = vadd.f32 0.0, %v2445
        %2447 = vmatmul.bf16.gmra.mxu0 %v2276
        %v2448 = vpop.f32.mrf.mxu0
        %v2449 = vadd.f32 0.0, %v2448
        %v2450 = vpop.f32.mrf.mxu0
        %v2451 = vadd.f32 0.0, %v2450
        %2452 = vmatmul.bf16.gmra.mxu0 %v2279
        %v2453 = vpop.f32.mrf.mxu0
        %v2454 = vadd.f32 0.0, %v2453
        %v2455 = vpop.f32.mrf.mxu0
        %2456 = vdwg.mxu0
        %v2457 = vadd.f32 %v1978, %v2294
        %v2458 = vadd.f32 %v1979, %v2296
        %v2459 = vadd.f32 %v1980, %v2299
        %v2460 = vadd.f32 %v1981, %v2301
        %v2461 = vadd.f32 %v1982, %v2304
        %v2462 = vadd.f32 %v1983, %v2306
        %v2463 = vadd.f32 %v1984, %v2309
        %v2464 = vadd.f32 %v1985, %v2311
        %v2465 = vadd.f32 %v1986, %v2314
        %v2466 = vadd.f32 %v1987, %v2316
        %v2467 = vadd.f32 %v1988, %v2319
        %v2468 = vadd.f32 %v1989, %v2321
        %v2469 = vadd.f32 %v1990, %v2324
        %v2470 = vadd.f32 %v1991, %v2326
        %v2471 = vadd.f32 %v1992, %v2329
        %v2472 = vadd.f32 %v1993, %v2331
        %v2473 = vadd.f32 %v1994, %v2334
        %v2474 = vadd.f32 %v1995, %v2336
        %v2475 = vadd.f32 %v1996, %v2339
        %v2476 = vadd.f32 %v1997, %v2341
        %v2477 = vadd.f32 %v1998, %v2344
        %v2478 = vadd.f32 %v1999, %v2346
        %v2479 = vadd.f32 %v2000, %v2349
        %v2480 = vadd.f32 %v2001, %v2351
        %v2481 = vadd.f32 %v2002, %v2354
        %v2482 = vadd.f32 %v2003, %v2356
        %v2483 = vadd.f32 %v2004, %v2359
        %v2484 = vadd.f32 %v2005, %v2361
        %v2485 = vadd.f32 %v2006, %v2364
        %v2486 = vadd.f32 %v2007, %v2366
        %v2487 = vadd.f32 %v2008, %v2369
        %v2488 = vadd.f32 %v2009, %v2371
        %v2489 = vadd.f32 %v2010, %v2374
        %v2490 = vadd.f32 %v2011, %v2376
        %v2491 = vadd.f32 %v2012, %v2379
        %v2492 = vadd.f32 %v2013, %v2381
        %v2493 = vadd.f32 %v2014, %v2384
        %v2494 = vadd.f32 %v2015, %v2386
        %v2495 = vadd.f32 %v2016, %v2389
        %v2496 = vadd.f32 %v2017, %v2391
        %v2497 = vadd.f32 %v2018, %v2394
        %v2498 = vadd.f32 %v2019, %v2396
        %v2499 = vadd.f32 %v2020, %v2399
        %v2500 = vadd.f32 %v2021, %v2401
        %v2501 = vadd.f32 %v2022, %v2404
        %v2502 = vadd.f32 %v2023, %v2406
        %v2503 = vadd.f32 %v2024, %v2409
        %v2504 = vadd.f32 %v2025, %v2411
        %v2505 = vadd.f32 %v2026, %v2414
        %v2506 = vadd.f32 %v2027, %v2416
        %v2507 = vadd.f32 %v2028, %v2419
        %v2508 = vadd.f32 %v2029, %v2421
        %v2509 = vadd.f32 %v2030, %v2424
        %v2510 = vadd.f32 %v2031, %v2426
        %v2511 = vadd.f32 %v2032, %v2429
        %v2512 = vadd.f32 %v2033, %v2431
        %v2513 = vadd.f32 %v2034, %v2434
        %v2514 = vadd.f32 %v2035, %v2436
        %v2515 = vadd.f32 %v2036, %v2439
        %v2516 = vadd.f32 %v2037, %v2441
        %v2517 = vadd.f32 %v2038, %v2444
        %v2518 = vadd.f32 %v2039, %v2446
        %v2519 = vadd.f32 %v2040, %v2449
        %v2520 = vadd.f32 %v2041, %v2451
        %v2521 = vadd.f32 %v2042, %v2454
        %s2522 = scalar_lea.vmem %s2, 10
        %v2523 = vld [vmem:[%s2522] sm:$0x3]
        %vm2524 = vcmask 1045504
        %v2525 = vrot.slane %v549, 2
        %v2526 = vrot.slane %v550, 2
        %v2527 = vsel %vm2524, %v2525, %v2526
        %v2528 = vrot.slane %v551, 2
        %v2529 = vsel %vm2524, %v2526, %v2528
        %v2530 = vrot.slane %v552, 2
        %v2531 = vsel %vm2524, %v2528, %v2530
        %v2532 = vrot.slane %v553, 2
        %v2533 = vsel %vm2524, %v2530, %v2532
        %v2534 = vrot.slane %v554, 2
        %v2535 = vsel %vm2524, %v2532, %v2534
        %v2536 = vrot.slane %v555, 2
        %v2537 = vsel %vm2524, %v2534, %v2536
        %v2538 = vrot.slane %v556, 2
        %v2539 = vsel %vm2524, %v2536, %v2538
        %v2540 = vrot.slane %v557, 2
        %v2541 = vsel %vm2524, %v2538, %v2540
        %v2542 = vrot.slane %v558, 2
        %v2543 = vsel %vm2524, %v2540, %v2542
        %v2544 = vrot.slane %v559, 2
        %v2545 = vsel %vm2524, %v2542, %v2544
        %v2546 = vrot.slane %v560, 2
        %v2547 = vsel %vm2524, %v2544, %v2546
        %v2548 = vrot.slane %v561, 2
        %v2549 = vsel %vm2524, %v2546, %v2548
        %v2550 = vrot.slane %v562, 2
        %v2551 = vsel %vm2524, %v2548, %v2550
        %v2552 = vrot.slane %v563, 2
        %v2553 = vsel %vm2524, %v2550, %v2552
        %v2554 = vrot.slane %v564, 2
        %v2555 = vsel %vm2524, %v2552, %v2554
        %v2556 = vrot.slane %v565, 2
        %v2557 = vsel %vm2524, %v2554, %v2556
        %v2558 = vrot.slane %v566, 2
        %v2559 = vsel %vm2524, %v2556, %v2558
        %v2560 = vrot.slane %v567, 2
        %v2561 = vsel %vm2524, %v2558, %v2560
        %v2562 = vrot.slane %v568, 2
        %v2563 = vsel %vm2524, %v2560, %v2562
        %v2564 = vrot.slane %v569, 2
        %v2565 = vsel %vm2524, %v2562, %v2564
        %v2566 = vrot.slane %v570, 2
        %v2567 = vsel %vm2524, %v2564, %v2566
        %v2568 = vrot.slane %v571, 2
        %v2569 = vsel %vm2524, %v2566, %v2568
        %v2570 = vrot.slane %v572, 2
        %v2571 = vsel %vm2524, %v2568, %v2570
        %v2572 = vrot.slane %v573, 2
        %v2573 = vsel %vm2524, %v2570, %v2572
        %v2574 = vrot.slane %v574, 2
        %v2575 = vsel %vm2524, %v2572, %v2574
        %v2576 = vrot.slane %v575, 2
        %v2577 = vsel %vm2524, %v2574, %v2576
        %v2578 = vrot.slane %v576, 2
        %v2579 = vsel %vm2524, %v2576, %v2578
        %v2580 = vrot.slane %v577, 2
        %v2581 = vsel %vm2524, %v2578, %v2580
        %v2582 = vrot.slane %v578, 2
        %v2583 = vsel %vm2524, %v2580, %v2582
        %v2584 = vrot.slane %v579, 2
        %v2585 = vsel %vm2524, %v2582, %v2584
        %v2586 = vrot.slane %v597, 2
        %v2587 = vsel %vm2524, %v2584, %v2586
        %v2588 = vrot.slane %v592, 2
        %v2589 = vsel %vm2524, %v2586, %v2588
        %v2591 = vsel %vm864, %v2527, 0
        %v2594 = vsel %vm864, %v2529, 0
        %v2597 = vsel %vm864, %v2531, 0
        %v2600 = vsel %vm864, %v2533, 0
        %v2603 = vsel %vm864, %v2535, 0
        %v2606 = vsel %vm864, %v2537, 0
        %v2609 = vsel %vm864, %v2539, 0
        %v2612 = vsel %vm864, %v2541, 0
        %v2615 = vsel %vm864, %v2543, 0
        %v2618 = vsel %vm864, %v2545, 0
        %v2621 = vsel %vm864, %v2547, 0
        %v2624 = vsel %vm864, %v2549, 0
        %v2627 = vsel %vm864, %v2551, 0
        %v2630 = vsel %vm864, %v2553, 0
        %v2633 = vsel %vm864, %v2555, 0
        %v2636 = vsel %vm864, %v2557, 0
        %v2639 = vsel %vm864, %v2559, 0
        %v2642 = vsel %vm864, %v2561, 0
        %v2645 = vsel %vm864, %v2563, 0
        %v2648 = vsel %vm864, %v2565, 0
        %v2651 = vsel %vm864, %v2567, 0
        %v2654 = vsel %vm864, %v2569, 0
        %v2657 = vsel %vm864, %v2571, 0
        %v2660 = vsel %vm864, %v2573, 0
        %v2663 = vsel %vm864, %v2575, 0
        %v2666 = vsel %vm864, %v2577, 0
        %v2669 = vsel %vm864, %v2579, 0
        %v2672 = vsel %vm864, %v2581, 0
        %v2675 = vsel %vm864, %v2583, 0
        %v2678 = vsel %vm864, %v2585, 0
        %v2681 = vsel %vm864, %v2587, 0
        %v2684 = vsel %vm864, %v2589, 0
        %v2687 = vsel %vm864, %v2588, 0
        %v2690 = vsel %vm964, %v2523, 0
        %2692 = vmatpush.bf16.msra.mxu0 0
        %2693 = vmatpush.bf16.msra.mxu0 0
        %2694 = vmatpush.bf16.msra.mxu0 0
        %2695 = vmatpush.bf16.msra.mxu0 0
        %2696 = vmatpush.bf16.msra.mxu0 0
        %2697 = vmatpush.bf16.msra.mxu0 0
        %2698 = vmatpush.bf16.msra.mxu0 0
        %2699 = vmatpush.bf16.msra.mxu0 %v2690
        %2700 = vmatmul.bf16.gmra.mxu0 %v2591
        %v2701 = vpop.f32.mrf.mxu0
        %v2702 = vadd.f32 0.0, %v2701
        %v2703 = vpop.f32.mrf.mxu0
        %v2704 = vadd.f32 0.0, %v2703
        %2705 = vmatmul.bf16.gmra.mxu0 %v2594
        %v2706 = vpop.f32.mrf.mxu0
        %v2707 = vadd.f32 0.0, %v2706
        %v2708 = vpop.f32.mrf.mxu0
        %v2709 = vadd.f32 0.0, %v2708
        %2710 = vmatmul.bf16.gmra.mxu0 %v2597
        %v2711 = vpop.f32.mrf.mxu0
        %v2712 = vadd.f32 0.0, %v2711
        %v2713 = vpop.f32.mrf.mxu0
        %v2714 = vadd.f32 0.0, %v2713
        %2715 = vmatmul.bf16.gmra.mxu0 %v2600
        %v2716 = vpop.f32.mrf.mxu0
        %v2717 = vadd.f32 0.0, %v2716
        %v2718 = vpop.f32.mrf.mxu0
        %v2719 = vadd.f32 0.0, %v2718
        %2720 = vmatmul.bf16.gmra.mxu0 %v2603
        %v2721 = vpop.f32.mrf.mxu0
        %v2722 = vadd.f32 0.0, %v2721
        %v2723 = vpop.f32.mrf.mxu0
        %v2724 = vadd.f32 0.0, %v2723
        %2725 = vmatmul.bf16.gmra.mxu0 %v2606
        %v2726 = vpop.f32.mrf.mxu0
        %v2727 = vadd.f32 0.0, %v2726
        %v2728 = vpop.f32.mrf.mxu0
        %v2729 = vadd.f32 0.0, %v2728
        %2730 = vmatmul.bf16.gmra.mxu0 %v2609
        %v2731 = vpop.f32.mrf.mxu0
        %v2732 = vadd.f32 0.0, %v2731
        %v2733 = vpop.f32.mrf.mxu0
        %v2734 = vadd.f32 0.0, %v2733
        %2735 = vmatmul.bf16.gmra.mxu0 %v2612
        %v2736 = vpop.f32.mrf.mxu0
        %v2737 = vadd.f32 0.0, %v2736
        %v2738 = vpop.f32.mrf.mxu0
        %v2739 = vadd.f32 0.0, %v2738
        %2740 = vmatmul.bf16.gmra.mxu0 %v2615
        %v2741 = vpop.f32.mrf.mxu0
        %v2742 = vadd.f32 0.0, %v2741
        %v2743 = vpop.f32.mrf.mxu0
        %v2744 = vadd.f32 0.0, %v2743
        %2745 = vmatmul.bf16.gmra.mxu0 %v2618
        %v2746 = vpop.f32.mrf.mxu0
        %v2747 = vadd.f32 0.0, %v2746
        %v2748 = vpop.f32.mrf.mxu0
        %v2749 = vadd.f32 0.0, %v2748
        %2750 = vmatmul.bf16.gmra.mxu0 %v2621
        %v2751 = vpop.f32.mrf.mxu0
        %v2752 = vadd.f32 0.0, %v2751
        %v2753 = vpop.f32.mrf.mxu0
        %v2754 = vadd.f32 0.0, %v2753
        %2755 = vmatmul.bf16.gmra.mxu0 %v2624
        %v2756 = vpop.f32.mrf.mxu0
        %v2757 = vadd.f32 0.0, %v2756
        %v2758 = vpop.f32.mrf.mxu0
        %v2759 = vadd.f32 0.0, %v2758
        %2760 = vmatmul.bf16.gmra.mxu0 %v2627
        %v2761 = vpop.f32.mrf.mxu0
        %v2762 = vadd.f32 0.0, %v2761
        %v2763 = vpop.f32.mrf.mxu0
        %v2764 = vadd.f32 0.0, %v2763
        %2765 = vmatmul.bf16.gmra.mxu0 %v2630
        %v2766 = vpop.f32.mrf.mxu0
        %v2767 = vadd.f32 0.0, %v2766
        %v2768 = vpop.f32.mrf.mxu0
        %v2769 = vadd.f32 0.0, %v2768
        %2770 = vmatmul.bf16.gmra.mxu0 %v2633
        %v2771 = vpop.f32.mrf.mxu0
        %v2772 = vadd.f32 0.0, %v2771
        %v2773 = vpop.f32.mrf.mxu0
        %v2774 = vadd.f32 0.0, %v2773
        %2775 = vmatmul.bf16.gmra.mxu0 %v2636
        %v2776 = vpop.f32.mrf.mxu0
        %v2777 = vadd.f32 0.0, %v2776
        %v2778 = vpop.f32.mrf.mxu0
        %v2779 = vadd.f32 0.0, %v2778
        %2780 = vmatmul.bf16.gmra.mxu0 %v2639
        %v2781 = vpop.f32.mrf.mxu0
        %v2782 = vadd.f32 0.0, %v2781
        %v2783 = vpop.f32.mrf.mxu0
        %v2784 = vadd.f32 0.0, %v2783
        %2785 = vmatmul.bf16.gmra.mxu0 %v2642
        %v2786 = vpop.f32.mrf.mxu0
        %v2787 = vadd.f32 0.0, %v2786
        %v2788 = vpop.f32.mrf.mxu0
        %v2789 = vadd.f32 0.0, %v2788
        %2790 = vmatmul.bf16.gmra.mxu0 %v2645
        %v2791 = vpop.f32.mrf.mxu0
        %v2792 = vadd.f32 0.0, %v2791
        %v2793 = vpop.f32.mrf.mxu0
        %v2794 = vadd.f32 0.0, %v2793
        %2795 = vmatmul.bf16.gmra.mxu0 %v2648
        %v2796 = vpop.f32.mrf.mxu0
        %v2797 = vadd.f32 0.0, %v2796
        %v2798 = vpop.f32.mrf.mxu0
        %v2799 = vadd.f32 0.0, %v2798
        %2800 = vmatmul.bf16.gmra.mxu0 %v2651
        %v2801 = vpop.f32.mrf.mxu0
        %v2802 = vadd.f32 0.0, %v2801
        %v2803 = vpop.f32.mrf.mxu0
        %v2804 = vadd.f32 0.0, %v2803
        %2805 = vmatmul.bf16.gmra.mxu0 %v2654
        %v2806 = vpop.f32.mrf.mxu0
        %v2807 = vadd.f32 0.0, %v2806
        %v2808 = vpop.f32.mrf.mxu0
        %v2809 = vadd.f32 0.0, %v2808
        %2810 = vmatmul.bf16.gmra.mxu0 %v2657
        %v2811 = vpop.f32.mrf.mxu0
        %v2812 = vadd.f32 0.0, %v2811
        %v2813 = vpop.f32.mrf.mxu0
        %v2814 = vadd.f32 0.0, %v2813
        %2815 = vmatmul.bf16.gmra.mxu0 %v2660
        %v2816 = vpop.f32.mrf.mxu0
        %v2817 = vadd.f32 0.0, %v2816
        %v2818 = vpop.f32.mrf.mxu0
        %v2819 = vadd.f32 0.0, %v2818
        %2820 = vmatmul.bf16.gmra.mxu0 %v2663
        %v2821 = vpop.f32.mrf.mxu0
        %v2822 = vadd.f32 0.0, %v2821
        %v2823 = vpop.f32.mrf.mxu0
        %v2824 = vadd.f32 0.0, %v2823
        %2825 = vmatmul.bf16.gmra.mxu0 %v2666
        %v2826 = vpop.f32.mrf.mxu0
        %v2827 = vadd.f32 0.0, %v2826
        %v2828 = vpop.f32.mrf.mxu0
        %v2829 = vadd.f32 0.0, %v2828
        %2830 = vmatmul.bf16.gmra.mxu0 %v2669
        %v2831 = vpop.f32.mrf.mxu0
        %v2832 = vadd.f32 0.0, %v2831
        %v2833 = vpop.f32.mrf.mxu0
        %v2834 = vadd.f32 0.0, %v2833
        %2835 = vmatmul.bf16.gmra.mxu0 %v2672
        %v2836 = vpop.f32.mrf.mxu0
        %v2837 = vadd.f32 0.0, %v2836
        %v2838 = vpop.f32.mrf.mxu0
        %v2839 = vadd.f32 0.0, %v2838
        %2840 = vmatmul.bf16.gmra.mxu0 %v2675
        %v2841 = vpop.f32.mrf.mxu0
        %v2842 = vadd.f32 0.0, %v2841
        %v2843 = vpop.f32.mrf.mxu0
        %v2844 = vadd.f32 0.0, %v2843
        %2845 = vmatmul.bf16.gmra.mxu0 %v2678
        %v2846 = vpop.f32.mrf.mxu0
        %v2847 = vadd.f32 0.0, %v2846
        %v2848 = vpop.f32.mrf.mxu0
        %v2849 = vadd.f32 0.0, %v2848
        %2850 = vmatmul.bf16.gmra.mxu0 %v2681
        %v2851 = vpop.f32.mrf.mxu0
        %v2852 = vadd.f32 0.0, %v2851
        %v2853 = vpop.f32.mrf.mxu0
        %v2854 = vadd.f32 0.0, %v2853
        %2855 = vmatmul.bf16.gmra.mxu0 %v2684
        %v2856 = vpop.f32.mrf.mxu0
        %v2857 = vadd.f32 0.0, %v2856
        %v2858 = vpop.f32.mrf.mxu0
        %v2859 = vadd.f32 0.0, %v2858
        %2860 = vmatmul.bf16.gmra.mxu0 %v2687
        %v2861 = vpop.f32.mrf.mxu0
        %v2862 = vadd.f32 0.0, %v2861
        %v2863 = vpop.f32.mrf.mxu0
        %2864 = vdwg.mxu0
        %v2865 = vadd.f32 %v2457, %v2702
        %v2866 = vadd.f32 %v2458, %v2704
        %v2867 = vadd.f32 %v2459, %v2707
        %v2868 = vadd.f32 %v2460, %v2709
        %v2869 = vadd.f32 %v2461, %v2712
        %v2870 = vadd.f32 %v2462, %v2714
        %v2871 = vadd.f32 %v2463, %v2717
        %v2872 = vadd.f32 %v2464, %v2719
        %v2873 = vadd.f32 %v2465, %v2722
        %v2874 = vadd.f32 %v2466, %v2724
        %v2875 = vadd.f32 %v2467, %v2727
        %v2876 = vadd.f32 %v2468, %v2729
        %v2877 = vadd.f32 %v2469, %v2732
        %v2878 = vadd.f32 %v2470, %v2734
        %v2879 = vadd.f32 %v2471, %v2737
        %v2880 = vadd.f32 %v2472, %v2739
        %v2881 = vadd.f32 %v2473, %v2742
        %v2882 = vadd.f32 %v2474, %v2744
        %v2883 = vadd.f32 %v2475, %v2747
        %v2884 = vadd.f32 %v2476, %v2749
        %v2885 = vadd.f32 %v2477, %v2752
        %v2886 = vadd.f32 %v2478, %v2754
        %v2887 = vadd.f32 %v2479, %v2757
        %v2888 = vadd.f32 %v2480, %v2759
        %v2889 = vadd.f32 %v2481, %v2762
        %v2890 = vadd.f32 %v2482, %v2764
        %v2891 = vadd.f32 %v2483, %v2767
        %v2892 = vadd.f32 %v2484, %v2769
        %v2893 = vadd.f32 %v2485, %v2772
        %v2894 = vadd.f32 %v2486, %v2774
        %v2895 = vadd.f32 %v2487, %v2777
        %v2896 = vadd.f32 %v2488, %v2779
        %v2897 = vadd.f32 %v2489, %v2782
        %v2898 = vadd.f32 %v2490, %v2784
        %v2899 = vadd.f32 %v2491, %v2787
        %v2900 = vadd.f32 %v2492, %v2789
        %v2901 = vadd.f32 %v2493, %v2792
        %v2902 = vadd.f32 %v2494, %v2794
        %v2903 = vadd.f32 %v2495, %v2797
        %v2904 = vadd.f32 %v2496, %v2799
        %v2905 = vadd.f32 %v2497, %v2802
        %v2906 = vadd.f32 %v2498, %v2804
        %v2907 = vadd.f32 %v2499, %v2807
        %v2908 = vadd.f32 %v2500, %v2809
        %v2909 = vadd.f32 %v2501, %v2812
        %v2910 = vadd.f32 %v2502, %v2814
        %v2911 = vadd.f32 %v2503, %v2817
        %v2912 = vadd.f32 %v2504, %v2819
        %v2913 = vadd.f32 %v2505, %v2822
        %v2914 = vadd.f32 %v2506, %v2824
        %v2915 = vadd.f32 %v2507, %v2827
        %v2916 = vadd.f32 %v2508, %v2829
        %v2917 = vadd.f32 %v2509, %v2832
        %v2918 = vadd.f32 %v2510, %v2834
        %v2919 = vadd.f32 %v2511, %v2837
        %v2920 = vadd.f32 %v2512, %v2839
        %v2921 = vadd.f32 %v2513, %v2842
        %v2922 = vadd.f32 %v2514, %v2844
        %v2923 = vadd.f32 %v2515, %v2847
        %v2924 = vadd.f32 %v2516, %v2849
        %v2925 = vadd.f32 %v2517, %v2852
        %v2926 = vadd.f32 %v2518, %v2854
        %v2927 = vadd.f32 %v2519, %v2857
        %v2928 = vadd.f32 %v2520, %v2859
        %v2929 = vadd.f32 %v2521, %v2862
        %s2930 = scalar_lea.vmem %s2, 12
        %v2931 = vld [vmem:[%s2930] sm:$0x3]
        %v2932 = vrot.slane %v593, 2
        %v2933 = vsel %vm2524, %v2588, %v2932
        %v2935 = vsel %vm864, %v2933, 0
        %v2938 = vsel %vm864, %v2932, 0
        %v2941 = vsel %vm964, %v2931, 0
        %2943 = vmatpush.bf16.msra.mxu0 0
        %2944 = vmatpush.bf16.msra.mxu0 0
        %2945 = vmatpush.bf16.msra.mxu0 0
        %2946 = vmatpush.bf16.msra.mxu0 0
        %2947 = vmatpush.bf16.msra.mxu0 0
        %2948 = vmatpush.bf16.msra.mxu0 0
        %2949 = vmatpush.bf16.msra.mxu0 0
        %2950 = vmatpush.bf16.msra.mxu0 %v2941
        %2951 = vmatmul.bf16.gmra.mxu0 %v2594
        %v2952 = vpop.f32.mrf.mxu0
        %v2953 = vadd.f32 0.0, %v2952
        %v2954 = vpop.f32.mrf.mxu0
        %v2955 = vadd.f32 0.0, %v2954
        %2956 = vmatmul.bf16.gmra.mxu0 %v2597
        %v2957 = vpop.f32.mrf.mxu0
        %v2958 = vadd.f32 0.0, %v2957
        %v2959 = vpop.f32.mrf.mxu0
        %v2960 = vadd.f32 0.0, %v2959
        %2961 = vmatmul.bf16.gmra.mxu0 %v2600
        %v2962 = vpop.f32.mrf.mxu0
        %v2963 = vadd.f32 0.0, %v2962
        %v2964 = vpop.f32.mrf.mxu0
        %v2965 = vadd.f32 0.0, %v2964
        %2966 = vmatmul.bf16.gmra.mxu0 %v2603
        %v2967 = vpop.f32.mrf.mxu0
        %v2968 = vadd.f32 0.0, %v2967
        %v2969 = vpop.f32.mrf.mxu0
        %v2970 = vadd.f32 0.0, %v2969
        %2971 = vmatmul.bf16.gmra.mxu0 %v2606
        %v2972 = vpop.f32.mrf.mxu0
        %v2973 = vadd.f32 0.0, %v2972
        %v2974 = vpop.f32.mrf.mxu0
        %v2975 = vadd.f32 0.0, %v2974
        %2976 = vmatmul.bf16.gmra.mxu0 %v2609
        %v2977 = vpop.f32.mrf.mxu0
        %v2978 = vadd.f32 0.0, %v2977
        %v2979 = vpop.f32.mrf.mxu0
        %v2980 = vadd.f32 0.0, %v2979
        %2981 = vmatmul.bf16.gmra.mxu0 %v2612
        %v2982 = vpop.f32.mrf.mxu0
        %v2983 = vadd.f32 0.0, %v2982
        %v2984 = vpop.f32.mrf.mxu0
        %v2985 = vadd.f32 0.0, %v2984
        %2986 = vmatmul.bf16.gmra.mxu0 %v2615
        %v2987 = vpop.f32.mrf.mxu0
        %v2988 = vadd.f32 0.0, %v2987
        %v2989 = vpop.f32.mrf.mxu0
        %v2990 = vadd.f32 0.0, %v2989
        %2991 = vmatmul.bf16.gmra.mxu0 %v2618
        %v2992 = vpop.f32.mrf.mxu0
        %v2993 = vadd.f32 0.0, %v2992
        %v2994 = vpop.f32.mrf.mxu0
        %v2995 = vadd.f32 0.0, %v2994
        %2996 = vmatmul.bf16.gmra.mxu0 %v2621
        %v2997 = vpop.f32.mrf.mxu0
        %v2998 = vadd.f32 0.0, %v2997
        %v2999 = vpop.f32.mrf.mxu0
        %v3000 = vadd.f32 0.0, %v2999
        %3001 = vmatmul.bf16.gmra.mxu0 %v2624
        %v3002 = vpop.f32.mrf.mxu0
        %v3003 = vadd.f32 0.0, %v3002
        %v3004 = vpop.f32.mrf.mxu0
        %v3005 = vadd.f32 0.0, %v3004
        %3006 = vmatmul.bf16.gmra.mxu0 %v2627
        %v3007 = vpop.f32.mrf.mxu0
        %v3008 = vadd.f32 0.0, %v3007
        %v3009 = vpop.f32.mrf.mxu0
        %v3010 = vadd.f32 0.0, %v3009
        %3011 = vmatmul.bf16.gmra.mxu0 %v2630
        %v3012 = vpop.f32.mrf.mxu0
        %v3013 = vadd.f32 0.0, %v3012
        %v3014 = vpop.f32.mrf.mxu0
        %v3015 = vadd.f32 0.0, %v3014
        %3016 = vmatmul.bf16.gmra.mxu0 %v2633
        %v3017 = vpop.f32.mrf.mxu0
        %v3018 = vadd.f32 0.0, %v3017
        %v3019 = vpop.f32.mrf.mxu0
        %v3020 = vadd.f32 0.0, %v3019
        %3021 = vmatmul.bf16.gmra.mxu0 %v2636
        %v3022 = vpop.f32.mrf.mxu0
        %v3023 = vadd.f32 0.0, %v3022
        %v3024 = vpop.f32.mrf.mxu0
        %v3025 = vadd.f32 0.0, %v3024
        %3026 = vmatmul.bf16.gmra.mxu0 %v2639
        %v3027 = vpop.f32.mrf.mxu0
        %v3028 = vadd.f32 0.0, %v3027
        %v3029 = vpop.f32.mrf.mxu0
        %v3030 = vadd.f32 0.0, %v3029
        %3031 = vmatmul.bf16.gmra.mxu0 %v2642
        %v3032 = vpop.f32.mrf.mxu0
        %v3033 = vadd.f32 0.0, %v3032
        %v3034 = vpop.f32.mrf.mxu0
        %v3035 = vadd.f32 0.0, %v3034
        %3036 = vmatmul.bf16.gmra.mxu0 %v2645
        %v3037 = vpop.f32.mrf.mxu0
        %v3038 = vadd.f32 0.0, %v3037
        %v3039 = vpop.f32.mrf.mxu0
        %v3040 = vadd.f32 0.0, %v3039
        %3041 = vmatmul.bf16.gmra.mxu0 %v2648
        %v3042 = vpop.f32.mrf.mxu0
        %v3043 = vadd.f32 0.0, %v3042
        %v3044 = vpop.f32.mrf.mxu0
        %v3045 = vadd.f32 0.0, %v3044
        %3046 = vmatmul.bf16.gmra.mxu0 %v2651
        %v3047 = vpop.f32.mrf.mxu0
        %v3048 = vadd.f32 0.0, %v3047
        %v3049 = vpop.f32.mrf.mxu0
        %v3050 = vadd.f32 0.0, %v3049
        %3051 = vmatmul.bf16.gmra.mxu0 %v2654
        %v3052 = vpop.f32.mrf.mxu0
        %v3053 = vadd.f32 0.0, %v3052
        %v3054 = vpop.f32.mrf.mxu0
        %v3055 = vadd.f32 0.0, %v3054
        %3056 = vmatmul.bf16.gmra.mxu0 %v2657
        %v3057 = vpop.f32.mrf.mxu0
        %v3058 = vadd.f32 0.0, %v3057
        %v3059 = vpop.f32.mrf.mxu0
        %v3060 = vadd.f32 0.0, %v3059
        %3061 = vmatmul.bf16.gmra.mxu0 %v2660
        %v3062 = vpop.f32.mrf.mxu0
        %v3063 = vadd.f32 0.0, %v3062
        %v3064 = vpop.f32.mrf.mxu0
        %v3065 = vadd.f32 0.0, %v3064
        %3066 = vmatmul.bf16.gmra.mxu0 %v2663
        %v3067 = vpop.f32.mrf.mxu0
        %v3068 = vadd.f32 0.0, %v3067
        %v3069 = vpop.f32.mrf.mxu0
        %v3070 = vadd.f32 0.0, %v3069
        %3071 = vmatmul.bf16.gmra.mxu0 %v2666
        %v3072 = vpop.f32.mrf.mxu0
        %v3073 = vadd.f32 0.0, %v3072
        %v3074 = vpop.f32.mrf.mxu0
        %v3075 = vadd.f32 0.0, %v3074
        %3076 = vmatmul.bf16.gmra.mxu0 %v2669
        %v3077 = vpop.f32.mrf.mxu0
        %v3078 = vadd.f32 0.0, %v3077
        %v3079 = vpop.f32.mrf.mxu0
        %v3080 = vadd.f32 0.0, %v3079
        %3081 = vmatmul.bf16.gmra.mxu0 %v2672
        %v3082 = vpop.f32.mrf.mxu0
        %v3083 = vadd.f32 0.0, %v3082
        %v3084 = vpop.f32.mrf.mxu0
        %v3085 = vadd.f32 0.0, %v3084
        %3086 = vmatmul.bf16.gmra.mxu0 %v2675
        %v3087 = vpop.f32.mrf.mxu0
        %v3088 = vadd.f32 0.0, %v3087
        %v3089 = vpop.f32.mrf.mxu0
        %v3090 = vadd.f32 0.0, %v3089
        %3091 = vmatmul.bf16.gmra.mxu0 %v2678
        %v3092 = vpop.f32.mrf.mxu0
        %v3093 = vadd.f32 0.0, %v3092
        %v3094 = vpop.f32.mrf.mxu0
        %v3095 = vadd.f32 0.0, %v3094
        %3096 = vmatmul.bf16.gmra.mxu0 %v2681
        %v3097 = vpop.f32.mrf.mxu0
        %v3098 = vadd.f32 0.0, %v3097
        %v3099 = vpop.f32.mrf.mxu0
        %v3100 = vadd.f32 0.0, %v3099
        %3101 = vmatmul.bf16.gmra.mxu0 %v2684
        %v3102 = vpop.f32.mrf.mxu0
        %v3103 = vadd.f32 0.0, %v3102
        %v3104 = vpop.f32.mrf.mxu0
        %v3105 = vadd.f32 0.0, %v3104
        %3106 = vmatmul.bf16.gmra.mxu0 %v2935
        %v3107 = vpop.f32.mrf.mxu0
        %v3108 = vadd.f32 0.0, %v3107
        %v3109 = vpop.f32.mrf.mxu0
        %v3110 = vadd.f32 0.0, %v3109
        %3111 = vmatmul.bf16.gmra.mxu0 %v2938
        %v3112 = vpop.f32.mrf.mxu0
        %v3113 = vadd.f32 0.0, %v3112
        %v3114 = vpop.f32.mrf.mxu0
        %3115 = vdwg.mxu0
        %v3116 = vadd.f32 %v2865, %v2953
        %v3117 = vadd.f32 %v2866, %v2955
        %v3118 = vadd.f32 %v2867, %v2958
        %v3119 = vadd.f32 %v2868, %v2960
        %v3120 = vadd.f32 %v2869, %v2963
        %v3121 = vadd.f32 %v2870, %v2965
        %v3122 = vadd.f32 %v2871, %v2968
        %v3123 = vadd.f32 %v2872, %v2970
        %v3124 = vadd.f32 %v2873, %v2973
        %v3125 = vadd.f32 %v2874, %v2975
        %v3126 = vadd.f32 %v2875, %v2978
        %v3127 = vadd.f32 %v2876, %v2980
        %v3128 = vadd.f32 %v2877, %v2983
        %v3129 = vadd.f32 %v2878, %v2985
        %v3130 = vadd.f32 %v2879, %v2988
        %v3131 = vadd.f32 %v2880, %v2990
        %v3132 = vadd.f32 %v2881, %v2993
        %v3133 = vadd.f32 %v2882, %v2995
        %v3134 = vadd.f32 %v2883, %v2998
        %v3135 = vadd.f32 %v2884, %v3000
        %v3136 = vadd.f32 %v2885, %v3003
        %v3137 = vadd.f32 %v2886, %v3005
        %v3138 = vadd.f32 %v2887, %v3008
        %v3139 = vadd.f32 %v2888, %v3010
        %v3140 = vadd.f32 %v2889, %v3013
        %v3141 = vadd.f32 %v2890, %v3015
        %v3142 = vadd.f32 %v2891, %v3018
        %v3143 = vadd.f32 %v2892, %v3020
        %v3144 = vadd.f32 %v2893, %v3023
        %v3145 = vadd.f32 %v2894, %v3025
        %v3146 = vadd.f32 %v2895, %v3028
        %v3147 = vadd.f32 %v2896, %v3030
        %v3148 = vadd.f32 %v2897, %v3033
        %v3149 = vadd.f32 %v2898, %v3035
        %v3150 = vadd.f32 %v2899, %v3038
        %v3151 = vadd.f32 %v2900, %v3040
        %v3152 = vadd.f32 %v2901, %v3043
        %v3153 = vadd.f32 %v2902, %v3045
        %v3154 = vadd.f32 %v2903, %v3048
        %v3155 = vadd.f32 %v2904, %v3050
        %v3156 = vadd.f32 %v2905, %v3053
        %v3157 = vadd.f32 %v2906, %v3055
        %v3158 = vadd.f32 %v2907, %v3058
        %v3159 = vadd.f32 %v2908, %v3060
        %v3160 = vadd.f32 %v2909, %v3063
        %v3161 = vadd.f32 %v2910, %v3065
        %v3162 = vadd.f32 %v2911, %v3068
        %v3163 = vadd.f32 %v2912, %v3070
        %v3164 = vadd.f32 %v2913, %v3073
        %v3165 = vadd.f32 %v2914, %v3075
        %v3166 = vadd.f32 %v2915, %v3078
        %v3167 = vadd.f32 %v2916, %v3080
        %v3168 = vadd.f32 %v2917, %v3083
        %v3169 = vadd.f32 %v2918, %v3085
        %v3170 = vadd.f32 %v2919, %v3088
        %v3171 = vadd.f32 %v2920, %v3090
        %v3172 = vadd.f32 %v2921, %v3093
        %v3173 = vadd.f32 %v2922, %v3095
        %v3174 = vadd.f32 %v2923, %v3098
        %v3175 = vadd.f32 %v2924, %v3100
        %v3176 = vadd.f32 %v2925, %v3103
        %v3177 = vadd.f32 %v2926, %v3105
        %v3178 = vadd.f32 %v2927, %v3108
        %v3179 = vadd.f32 %v2928, %v3110
        %v3180 = vadd.f32 %v2929, %v3113
        %s3181 = scalar_lea.vmem %s2, 14
        %v3182 = vld [vmem:[%s3181] sm:$0x3]
        %vm3183 = vsmask.f32 5376
        %v3184 = vrot.slane %v622, 2
        %v3185 = vrot.slane %v618, 3
        %v3186 = vor.u32 %v3184, %v3185
        %v3187 = vrot.slane %v630, 2
        %v3188 = vrot.slane %v626, 3
        %v3189 = vor.u32 %v3187, %v3188
        %v3190 = vsel %vm3183, %v3186, %v3189
        %v3191 = vrot.slane %v638, 2
        %v3192 = vrot.slane %v634, 3
        %v3193 = vor.u32 %v3191, %v3192
        %v3194 = vsel %vm3183, %v3189, %v3193
        %v3195 = vrot.slane %v646, 2
        %v3196 = vrot.slane %v642, 3
        %v3197 = vor.u32 %v3195, %v3196
        %v3198 = vsel %vm3183, %v3193, %v3197
        %v3199 = vrot.slane %v654, 2
        %v3200 = vrot.slane %v650, 3
        %v3201 = vor.u32 %v3199, %v3200
        %v3202 = vsel %vm3183, %v3197, %v3201
        %v3203 = vrot.slane %v662, 2
        %v3204 = vrot.slane %v658, 3
        %v3205 = vor.u32 %v3203, %v3204
        %v3206 = vsel %vm3183, %v3201, %v3205
        %v3207 = vrot.slane %v670, 2
        %v3208 = vrot.slane %v666, 3
        %v3209 = vor.u32 %v3207, %v3208
        %v3210 = vsel %vm3183, %v3205, %v3209
        %v3211 = vrot.slane %v678, 2
        %v3212 = vrot.slane %v674, 3
        %v3213 = vor.u32 %v3211, %v3212
        %v3214 = vsel %vm3183, %v3209, %v3213
        %v3215 = vrot.slane %v686, 2
        %v3216 = vrot.slane %v682, 3
        %v3217 = vor.u32 %v3215, %v3216
        %v3218 = vsel %vm3183, %v3213, %v3217
        %v3219 = vrot.slane %v694, 2
        %v3220 = vrot.slane %v690, 3
        %v3221 = vor.u32 %v3219, %v3220
        %v3222 = vsel %vm3183, %v3217, %v3221
        %v3223 = vrot.slane %v702, 2
        %v3224 = vrot.slane %v698, 3
        %v3225 = vor.u32 %v3223, %v3224
        %v3226 = vsel %vm3183, %v3221, %v3225
        %v3227 = vrot.slane %v710, 2
        %v3228 = vrot.slane %v706, 3
        %v3229 = vor.u32 %v3227, %v3228
        %v3230 = vsel %vm3183, %v3225, %v3229
        %v3231 = vrot.slane %v718, 2
        %v3232 = vrot.slane %v714, 3
        %v3233 = vor.u32 %v3231, %v3232
        %v3234 = vsel %vm3183, %v3229, %v3233
        %v3235 = vrot.slane %v726, 2
        %v3236 = vrot.slane %v722, 3
        %v3237 = vor.u32 %v3235, %v3236
        %v3238 = vsel %vm3183, %v3233, %v3237
        %v3239 = vrot.slane %v734, 2
        %v3240 = vrot.slane %v730, 3
        %v3241 = vor.u32 %v3239, %v3240
        %v3242 = vsel %vm3183, %v3237, %v3241
        %v3243 = vrot.slane %v742, 2
        %v3244 = vrot.slane %v738, 3
        %v3245 = vor.u32 %v3243, %v3244
        %v3246 = vsel %vm3183, %v3241, %v3245
        %v3247 = vrot.slane %v750, 2
        %v3248 = vrot.slane %v746, 3
        %v3249 = vor.u32 %v3247, %v3248
        %v3250 = vsel %vm3183, %v3245, %v3249
        %v3251 = vrot.slane %v758, 2
        %v3252 = vrot.slane %v754, 3
        %v3253 = vor.u32 %v3251, %v3252
        %v3254 = vsel %vm3183, %v3249, %v3253
        %v3255 = vrot.slane %v766, 2
        %v3256 = vrot.slane %v762, 3
        %v3257 = vor.u32 %v3255, %v3256
        %v3258 = vsel %vm3183, %v3253, %v3257
        %v3259 = vrot.slane %v774, 2
        %v3260 = vrot.slane %v770, 3
        %v3261 = vor.u32 %v3259, %v3260
        %v3262 = vsel %vm3183, %v3257, %v3261
        %v3263 = vrot.slane %v782, 2
        %v3264 = vrot.slane %v778, 3
        %v3265 = vor.u32 %v3263, %v3264
        %v3266 = vsel %vm3183, %v3261, %v3265
        %v3267 = vrot.slane %v790, 2
        %v3268 = vrot.slane %v786, 3
        %v3269 = vor.u32 %v3267, %v3268
        %v3270 = vsel %vm3183, %v3265, %v3269
        %v3271 = vrot.slane %v798, 2
        %v3272 = vrot.slane %v794, 3
        %v3273 = vor.u32 %v3271, %v3272
        %v3274 = vsel %vm3183, %v3269, %v3273
        %v3275 = vrot.slane %v806, 2
        %v3276 = vrot.slane %v802, 3
        %v3277 = vor.u32 %v3275, %v3276
        %v3278 = vsel %vm3183, %v3273, %v3277
        %v3279 = vrot.slane %v814, 2
        %v3280 = vrot.slane %v810, 3
        %v3281 = vor.u32 %v3279, %v3280
        %v3282 = vsel %vm3183, %v3277, %v3281
        %v3283 = vrot.slane %v822, 2
        %v3284 = vrot.slane %v818, 3
        %v3285 = vor.u32 %v3283, %v3284
        %v3286 = vsel %vm3183, %v3281, %v3285
        %v3287 = vrot.slane %v830, 2
        %v3288 = vrot.slane %v826, 3
        %v3289 = vor.u32 %v3287, %v3288
        %v3290 = vsel %vm3183, %v3285, %v3289
        %v3291 = vrot.slane %v838, 2
        %v3292 = vrot.slane %v834, 3
        %v3293 = vor.u32 %v3291, %v3292
        %v3294 = vsel %vm3183, %v3289, %v3293
        %v3295 = vrot.slane %v846, 2
        %v3296 = vrot.slane %v842, 3
        %v3297 = vor.u32 %v3295, %v3296
        %v3298 = vsel %vm3183, %v3293, %v3297
        %v3299 = vrot.slane %v854, 2
        %v3300 = vrot.slane %v850, 3
        %v3301 = vor.u32 %v3299, %v3300
        %v3302 = vsel %vm3183, %v3297, %v3301
        %v3303 = vrot.slane %v861, 2
        %v3304 = vrot.slane %v857, 3
        %v3305 = vor.u32 %v3303, %v3304
        %v3306 = vsel %vm3183, %v3301, %v3305
        %v3307 = vrot.slane %v2174, 2
        %v3308 = vrot.slane %v2177, 3
        %v3309 = vor.u32 %v3307, %v3308
        %v3310 = vsel %vm3183, %v3305, %v3309
        %v3312 = vshrl.u32 %v593, 16
        %v3314 = vrot.slane %v3312, 2
        %v3315 = vshll.u32 %v593, 16
        %v3317 = vrot.slane %v3315, 3
        %v3318 = vor.u32 %v3314, %v3317
        %v3319 = vsel %vm3183, %v3309, %v3318
        %v3321 = vsel %vm864, %v3190, 0
        %v3324 = vsel %vm864, %v3194, 0
        %v3327 = vsel %vm864, %v3198, 0
        %v3330 = vsel %vm864, %v3202, 0
        %v3333 = vsel %vm864, %v3206, 0
        %v3336 = vsel %vm864, %v3210, 0
        %v3339 = vsel %vm864, %v3214, 0
        %v3342 = vsel %vm864, %v3218, 0
        %v3345 = vsel %vm864, %v3222, 0
        %v3348 = vsel %vm864, %v3226, 0
        %v3351 = vsel %vm864, %v3230, 0
        %v3354 = vsel %vm864, %v3234, 0
        %v3357 = vsel %vm864, %v3238, 0
        %v3360 = vsel %vm864, %v3242, 0
        %v3363 = vsel %vm864, %v3246, 0
        %v3366 = vsel %vm864, %v3250, 0
        %v3369 = vsel %vm864, %v3254, 0
        %v3372 = vsel %vm864, %v3258, 0
        %v3375 = vsel %vm864, %v3262, 0
        %v3378 = vsel %vm864, %v3266, 0
        %v3381 = vsel %vm864, %v3270, 0
        %v3384 = vsel %vm864, %v3274, 0
        %v3387 = vsel %vm864, %v3278, 0
        %v3390 = vsel %vm864, %v3282, 0
        %v3393 = vsel %vm864, %v3286, 0
        %v3396 = vsel %vm864, %v3290, 0
        %v3399 = vsel %vm864, %v3294, 0
        %v3402 = vsel %vm864, %v3298, 0
        %v3405 = vsel %vm864, %v3302, 0
        %v3408 = vsel %vm864, %v3306, 0
        %v3411 = vsel %vm864, %v3310, 0
        %v3414 = vsel %vm864, %v3319, 0
        %v3417 = vsel %vm864, %v3318, 0
        %v3420 = vsel %vm964, %v3182, 0
        %3422 = vmatpush.bf16.msra.mxu0 0
        %3423 = vmatpush.bf16.msra.mxu0 0
        %3424 = vmatpush.bf16.msra.mxu0 0
        %3425 = vmatpush.bf16.msra.mxu0 0
        %3426 = vmatpush.bf16.msra.mxu0 0
        %3427 = vmatpush.bf16.msra.mxu0 0
        %3428 = vmatpush.bf16.msra.mxu0 0
        %3429 = vmatpush.bf16.msra.mxu0 %v3420
        %3430 = vmatmul.bf16.gmra.mxu0 %v3321
        %v3431 = vpop.f32.mrf.mxu0
        %v3432 = vadd.f32 0.0, %v3431
        %v3433 = vpop.f32.mrf.mxu0
        %v3434 = vadd.f32 0.0, %v3433
        %3435 = vmatmul.bf16.gmra.mxu0 %v3324
        %v3436 = vpop.f32.mrf.mxu0
        %v3437 = vadd.f32 0.0, %v3436
        %v3438 = vpop.f32.mrf.mxu0
        %v3439 = vadd.f32 0.0, %v3438
        %3440 = vmatmul.bf16.gmra.mxu0 %v3327
        %v3441 = vpop.f32.mrf.mxu0
        %v3442 = vadd.f32 0.0, %v3441
        %v3443 = vpop.f32.mrf.mxu0
        %v3444 = vadd.f32 0.0, %v3443
        %3445 = vmatmul.bf16.gmra.mxu0 %v3330
        %v3446 = vpop.f32.mrf.mxu0
        %v3447 = vadd.f32 0.0, %v3446
        %v3448 = vpop.f32.mrf.mxu0
        %v3449 = vadd.f32 0.0, %v3448
        %3450 = vmatmul.bf16.gmra.mxu0 %v3333
        %v3451 = vpop.f32.mrf.mxu0
        %v3452 = vadd.f32 0.0, %v3451
        %v3453 = vpop.f32.mrf.mxu0
        %v3454 = vadd.f32 0.0, %v3453
        %3455 = vmatmul.bf16.gmra.mxu0 %v3336
        %v3456 = vpop.f32.mrf.mxu0
        %v3457 = vadd.f32 0.0, %v3456
        %v3458 = vpop.f32.mrf.mxu0
        %v3459 = vadd.f32 0.0, %v3458
        %3460 = vmatmul.bf16.gmra.mxu0 %v3339
        %v3461 = vpop.f32.mrf.mxu0
        %v3462 = vadd.f32 0.0, %v3461
        %v3463 = vpop.f32.mrf.mxu0
        %v3464 = vadd.f32 0.0, %v3463
        %3465 = vmatmul.bf16.gmra.mxu0 %v3342
        %v3466 = vpop.f32.mrf.mxu0
        %v3467 = vadd.f32 0.0, %v3466
        %v3468 = vpop.f32.mrf.mxu0
        %v3469 = vadd.f32 0.0, %v3468
        %3470 = vmatmul.bf16.gmra.mxu0 %v3345
        %v3471 = vpop.f32.mrf.mxu0
        %v3472 = vadd.f32 0.0, %v3471
        %v3473 = vpop.f32.mrf.mxu0
        %v3474 = vadd.f32 0.0, %v3473
        %3475 = vmatmul.bf16.gmra.mxu0 %v3348
        %v3476 = vpop.f32.mrf.mxu0
        %v3477 = vadd.f32 0.0, %v3476
        %v3478 = vpop.f32.mrf.mxu0
        %v3479 = vadd.f32 0.0, %v3478
        %3480 = vmatmul.bf16.gmra.mxu0 %v3351
        %v3481 = vpop.f32.mrf.mxu0
        %v3482 = vadd.f32 0.0, %v3481
        %v3483 = vpop.f32.mrf.mxu0
        %v3484 = vadd.f32 0.0, %v3483
        %3485 = vmatmul.bf16.gmra.mxu0 %v3354
        %v3486 = vpop.f32.mrf.mxu0
        %v3487 = vadd.f32 0.0, %v3486
        %v3488 = vpop.f32.mrf.mxu0
        %v3489 = vadd.f32 0.0, %v3488
        %3490 = vmatmul.bf16.gmra.mxu0 %v3357
        %v3491 = vpop.f32.mrf.mxu0
        %v3492 = vadd.f32 0.0, %v3491
        %v3493 = vpop.f32.mrf.mxu0
        %v3494 = vadd.f32 0.0, %v3493
        %3495 = vmatmul.bf16.gmra.mxu0 %v3360
        %v3496 = vpop.f32.mrf.mxu0
        %v3497 = vadd.f32 0.0, %v3496
        %v3498 = vpop.f32.mrf.mxu0
        %v3499 = vadd.f32 0.0, %v3498
        %3500 = vmatmul.bf16.gmra.mxu0 %v3363
        %v3501 = vpop.f32.mrf.mxu0
        %v3502 = vadd.f32 0.0, %v3501
        %v3503 = vpop.f32.mrf.mxu0
        %v3504 = vadd.f32 0.0, %v3503
        %3505 = vmatmul.bf16.gmra.mxu0 %v3366
        %v3506 = vpop.f32.mrf.mxu0
        %v3507 = vadd.f32 0.0, %v3506
        %v3508 = vpop.f32.mrf.mxu0
        %v3509 = vadd.f32 0.0, %v3508
        %3510 = vmatmul.bf16.gmra.mxu0 %v3369
        %v3511 = vpop.f32.mrf.mxu0
        %v3512 = vadd.f32 0.0, %v3511
        %v3513 = vpop.f32.mrf.mxu0
        %v3514 = vadd.f32 0.0, %v3513
        %3515 = vmatmul.bf16.gmra.mxu0 %v3372
        %v3516 = vpop.f32.mrf.mxu0
        %v3517 = vadd.f32 0.0, %v3516
        %v3518 = vpop.f32.mrf.mxu0
        %v3519 = vadd.f32 0.0, %v3518
        %3520 = vmatmul.bf16.gmra.mxu0 %v3375
        %v3521 = vpop.f32.mrf.mxu0
        %v3522 = vadd.f32 0.0, %v3521
        %v3523 = vpop.f32.mrf.mxu0
        %v3524 = vadd.f32 0.0, %v3523
        %3525 = vmatmul.bf16.gmra.mxu0 %v3378
        %v3526 = vpop.f32.mrf.mxu0
        %v3527 = vadd.f32 0.0, %v3526
        %v3528 = vpop.f32.mrf.mxu0
        %v3529 = vadd.f32 0.0, %v3528
        %3530 = vmatmul.bf16.gmra.mxu0 %v3381
        %v3531 = vpop.f32.mrf.mxu0
        %v3532 = vadd.f32 0.0, %v3531
        %v3533 = vpop.f32.mrf.mxu0
        %v3534 = vadd.f32 0.0, %v3533
        %3535 = vmatmul.bf16.gmra.mxu0 %v3384
        %v3536 = vpop.f32.mrf.mxu0
        %v3537 = vadd.f32 0.0, %v3536
        %v3538 = vpop.f32.mrf.mxu0
        %v3539 = vadd.f32 0.0, %v3538
        %3540 = vmatmul.bf16.gmra.mxu0 %v3387
        %v3541 = vpop.f32.mrf.mxu0
        %v3542 = vadd.f32 0.0, %v3541
        %v3543 = vpop.f32.mrf.mxu0
        %v3544 = vadd.f32 0.0, %v3543
        %3545 = vmatmul.bf16.gmra.mxu0 %v3390
        %v3546 = vpop.f32.mrf.mxu0
        %v3547 = vadd.f32 0.0, %v3546
        %v3548 = vpop.f32.mrf.mxu0
        %v3549 = vadd.f32 0.0, %v3548
        %3550 = vmatmul.bf16.gmra.mxu0 %v3393
        %v3551 = vpop.f32.mrf.mxu0
        %v3552 = vadd.f32 0.0, %v3551
        %v3553 = vpop.f32.mrf.mxu0
        %v3554 = vadd.f32 0.0, %v3553
        %3555 = vmatmul.bf16.gmra.mxu0 %v3396
        %v3556 = vpop.f32.mrf.mxu0
        %v3557 = vadd.f32 0.0, %v3556
        %v3558 = vpop.f32.mrf.mxu0
        %v3559 = vadd.f32 0.0, %v3558
        %3560 = vmatmul.bf16.gmra.mxu0 %v3399
        %v3561 = vpop.f32.mrf.mxu0
        %v3562 = vadd.f32 0.0, %v3561
        %v3563 = vpop.f32.mrf.mxu0
        %v3564 = vadd.f32 0.0, %v3563
        %3565 = vmatmul.bf16.gmra.mxu0 %v3402
        %v3566 = vpop.f32.mrf.mxu0
        %v3567 = vadd.f32 0.0, %v3566
        %v3568 = vpop.f32.mrf.mxu0
        %v3569 = vadd.f32 0.0, %v3568
        %3570 = vmatmul.bf16.gmra.mxu0 %v3405
        %v3571 = vpop.f32.mrf.mxu0
        %v3572 = vadd.f32 0.0, %v3571
        %v3573 = vpop.f32.mrf.mxu0
        %v3574 = vadd.f32 0.0, %v3573
        %3575 = vmatmul.bf16.gmra.mxu0 %v3408
        %v3576 = vpop.f32.mrf.mxu0
        %v3577 = vadd.f32 0.0, %v3576
        %v3578 = vpop.f32.mrf.mxu0
        %v3579 = vadd.f32 0.0, %v3578
        %3580 = vmatmul.bf16.gmra.mxu0 %v3411
        %v3581 = vpop.f32.mrf.mxu0
        %v3582 = vadd.f32 0.0, %v3581
        %v3583 = vpop.f32.mrf.mxu0
        %v3584 = vadd.f32 0.0, %v3583
        %3585 = vmatmul.bf16.gmra.mxu0 %v3414
        %v3586 = vpop.f32.mrf.mxu0
        %v3587 = vadd.f32 0.0, %v3586
        %v3588 = vpop.f32.mrf.mxu0
        %v3589 = vadd.f32 0.0, %v3588
        %3590 = vmatmul.bf16.gmra.mxu0 %v3417
        %v3591 = vpop.f32.mrf.mxu0
        %v3592 = vadd.f32 0.0, %v3591
        %v3593 = vpop.f32.mrf.mxu0
        %3594 = vdwg.mxu0
        %v3595 = vadd.f32 %v3116, %v3432
        %v3596 = vadd.f32 %v3117, %v3434
        %v3597 = vadd.f32 %v3118, %v3437
        %v3598 = vadd.f32 %v3119, %v3439
        %v3599 = vadd.f32 %v3120, %v3442
        %v3600 = vadd.f32 %v3121, %v3444
        %v3601 = vadd.f32 %v3122, %v3447
        %v3602 = vadd.f32 %v3123, %v3449
        %v3603 = vadd.f32 %v3124, %v3452
        %v3604 = vadd.f32 %v3125, %v3454
        %v3605 = vadd.f32 %v3126, %v3457
        %v3606 = vadd.f32 %v3127, %v3459
        %v3607 = vadd.f32 %v3128, %v3462
        %v3608 = vadd.f32 %v3129, %v3464
        %v3609 = vadd.f32 %v3130, %v3467
        %v3610 = vadd.f32 %v3131, %v3469
        %v3611 = vadd.f32 %v3132, %v3472
        %v3612 = vadd.f32 %v3133, %v3474
        %v3613 = vadd.f32 %v3134, %v3477
        %v3614 = vadd.f32 %v3135, %v3479
        %v3615 = vadd.f32 %v3136, %v3482
        %v3616 = vadd.f32 %v3137, %v3484
        %v3617 = vadd.f32 %v3138, %v3487
        %v3618 = vadd.f32 %v3139, %v3489
        %v3619 = vadd.f32 %v3140, %v3492
        %v3620 = vadd.f32 %v3141, %v3494
        %v3621 = vadd.f32 %v3142, %v3497
        %v3622 = vadd.f32 %v3143, %v3499
        %v3623 = vadd.f32 %v3144, %v3502
        %v3624 = vadd.f32 %v3145, %v3504
        %v3625 = vadd.f32 %v3146, %v3507
        %v3626 = vadd.f32 %v3147, %v3509
        %v3627 = vadd.f32 %v3148, %v3512
        %v3628 = vadd.f32 %v3149, %v3514
        %v3629 = vadd.f32 %v3150, %v3517
        %v3630 = vadd.f32 %v3151, %v3519
        %v3631 = vadd.f32 %v3152, %v3522
        %v3632 = vadd.f32 %v3153, %v3524
        %v3633 = vadd.f32 %v3154, %v3527
        %v3634 = vadd.f32 %v3155, %v3529
        %v3635 = vadd.f32 %v3156, %v3532
        %v3636 = vadd.f32 %v3157, %v3534
        %v3637 = vadd.f32 %v3158, %v3537
        %v3638 = vadd.f32 %v3159, %v3539
        %v3639 = vadd.f32 %v3160, %v3542
        %v3640 = vadd.f32 %v3161, %v3544
        %v3641 = vadd.f32 %v3162, %v3547
        %v3642 = vadd.f32 %v3163, %v3549
        %v3643 = vadd.f32 %v3164, %v3552
        %v3644 = vadd.f32 %v3165, %v3554
        %v3645 = vadd.f32 %v3166, %v3557
        %v3646 = vadd.f32 %v3167, %v3559
        %v3647 = vadd.f32 %v3168, %v3562
        %v3648 = vadd.f32 %v3169, %v3564
        %v3649 = vadd.f32 %v3170, %v3567
        %v3650 = vadd.f32 %v3171, %v3569
        %v3651 = vadd.f32 %v3172, %v3572
        %v3652 = vadd.f32 %v3173, %v3574
        %v3653 = vadd.f32 %v3174, %v3577
        %v3654 = vadd.f32 %v3175, %v3579
        %v3655 = vadd.f32 %v3176, %v3582
        %v3656 = vadd.f32 %v3177, %v3584
        %v3657 = vadd.f32 %v3178, %v3587
        %v3658 = vadd.f32 %v3179, %v3589
        %v3659 = vadd.f32 %v3180, %v3592
        %s3660 = scalar_lea.vmem %s2, 16
        %v3661 = vld [vmem:[%s3660] sm:$0x3]
        %vm3662 = vcmask 1044480
        %v3663 = vrot.slane %v550, 3
        %v3664 = vrot.slane %v551, 3
        %v3665 = vsel %vm3662, %v3663, %v3664
        %v3666 = vrot.slane %v552, 3
        %v3667 = vsel %vm3662, %v3664, %v3666
        %v3668 = vrot.slane %v553, 3
        %v3669 = vsel %vm3662, %v3666, %v3668
        %v3670 = vrot.slane %v554, 3
        %v3671 = vsel %vm3662, %v3668, %v3670
        %v3672 = vrot.slane %v555, 3
        %v3673 = vsel %vm3662, %v3670, %v3672
        %v3674 = vrot.slane %v556, 3
        %v3675 = vsel %vm3662, %v3672, %v3674
        %v3676 = vrot.slane %v557, 3
        %v3677 = vsel %vm3662, %v3674, %v3676
        %v3678 = vrot.slane %v558, 3
        %v3679 = vsel %vm3662, %v3676, %v3678
        %v3680 = vrot.slane %v559, 3
        %v3681 = vsel %vm3662, %v3678, %v3680
        %v3682 = vrot.slane %v560, 3
        %v3683 = vsel %vm3662, %v3680, %v3682
        %v3684 = vrot.slane %v561, 3
        %v3685 = vsel %vm3662, %v3682, %v3684
        %v3686 = vrot.slane %v562, 3
        %v3687 = vsel %vm3662, %v3684, %v3686
        %v3688 = vrot.slane %v563, 3
        %v3689 = vsel %vm3662, %v3686, %v3688
        %v3690 = vrot.slane %v564, 3
        %v3691 = vsel %vm3662, %v3688, %v3690
        %v3692 = vrot.slane %v565, 3
        %v3693 = vsel %vm3662, %v3690, %v3692
        %v3694 = vrot.slane %v566, 3
        %v3695 = vsel %vm3662, %v3692, %v3694
        %v3696 = vrot.slane %v567, 3
        %v3697 = vsel %vm3662, %v3694, %v3696
        %v3698 = vrot.slane %v568, 3
        %v3699 = vsel %vm3662, %v3696, %v3698
        %v3700 = vrot.slane %v569, 3
        %v3701 = vsel %vm3662, %v3698, %v3700
        %v3702 = vrot.slane %v570, 3
        %v3703 = vsel %vm3662, %v3700, %v3702
        %v3704 = vrot.slane %v571, 3
        %v3705 = vsel %vm3662, %v3702, %v3704
        %v3706 = vrot.slane %v572, 3
        %v3707 = vsel %vm3662, %v3704, %v3706
        %v3708 = vrot.slane %v573, 3
        %v3709 = vsel %vm3662, %v3706, %v3708
        %v3710 = vrot.slane %v574, 3
        %v3711 = vsel %vm3662, %v3708, %v3710
        %v3712 = vrot.slane %v575, 3
        %v3713 = vsel %vm3662, %v3710, %v3712
        %v3714 = vrot.slane %v576, 3
        %v3715 = vsel %vm3662, %v3712, %v3714
        %v3716 = vrot.slane %v577, 3
        %v3717 = vsel %vm3662, %v3714, %v3716
        %v3718 = vrot.slane %v578, 3
        %v3719 = vsel %vm3662, %v3716, %v3718
        %v3720 = vrot.slane %v579, 3
        %v3721 = vsel %vm3662, %v3718, %v3720
        %v3722 = vrot.slane %v597, 3
        %v3723 = vsel %vm3662, %v3720, %v3722
        %v3724 = vrot.slane %v592, 3
        %v3725 = vsel %vm3662, %v3722, %v3724
        %v3726 = vrot.slane %v593, 3
        %v3727 = vsel %vm3662, %v3724, %v3726
        %v3729 = vsel %vm864, %v3665, 0
        %v3732 = vsel %vm864, %v3667, 0
        %v3735 = vsel %vm864, %v3669, 0
        %v3738 = vsel %vm864, %v3671, 0
        %v3741 = vsel %vm864, %v3673, 0
        %v3744 = vsel %vm864, %v3675, 0
        %v3747 = vsel %vm864, %v3677, 0
        %v3750 = vsel %vm864, %v3679, 0
        %v3753 = vsel %vm864, %v3681, 0
        %v3756 = vsel %vm864, %v3683, 0
        %v3759 = vsel %vm864, %v3685, 0
        %v3762 = vsel %vm864, %v3687, 0
        %v3765 = vsel %vm864, %v3689, 0
        %v3768 = vsel %vm864, %v3691, 0
        %v3771 = vsel %vm864, %v3693, 0
        %v3774 = vsel %vm864, %v3695, 0
        %v3777 = vsel %vm864, %v3697, 0
        %v3780 = vsel %vm864, %v3699, 0
        %v3783 = vsel %vm864, %v3701, 0
        %v3786 = vsel %vm864, %v3703, 0
        %v3789 = vsel %vm864, %v3705, 0
        %v3792 = vsel %vm864, %v3707, 0
        %v3795 = vsel %vm864, %v3709, 0
        %v3798 = vsel %vm864, %v3711, 0
        %v3801 = vsel %vm864, %v3713, 0
        %v3804 = vsel %vm864, %v3715, 0
        %v3807 = vsel %vm864, %v3717, 0
        %v3810 = vsel %vm864, %v3719, 0
        %v3813 = vsel %vm864, %v3721, 0
        %v3816 = vsel %vm864, %v3723, 0
        %v3819 = vsel %vm864, %v3725, 0
        %v3822 = vsel %vm864, %v3727, 0
        %v3825 = vsel %vm864, %v3726, 0
        %v3828 = vsel %vm964, %v3661, 0
        %3830 = vmatpush.bf16.msra.mxu0 0
        %3831 = vmatpush.bf16.msra.mxu0 0
        %3832 = vmatpush.bf16.msra.mxu0 0
        %3833 = vmatpush.bf16.msra.mxu0 0
        %3834 = vmatpush.bf16.msra.mxu0 0
        %3835 = vmatpush.bf16.msra.mxu0 0
        %3836 = vmatpush.bf16.msra.mxu0 0
        %3837 = vmatpush.bf16.msra.mxu0 %v3828
        %3838 = vmatmul.bf16.gmra.mxu0 %v3729
        %v3839 = vpop.f32.mrf.mxu0
        %v3840 = vadd.f32 0.0, %v3839
        %v3841 = vpop.f32.mrf.mxu0
        %v3842 = vadd.f32 0.0, %v3841
        %3843 = vmatmul.bf16.gmra.mxu0 %v3732
        %v3844 = vpop.f32.mrf.mxu0
        %v3845 = vadd.f32 0.0, %v3844
        %v3846 = vpop.f32.mrf.mxu0
        %v3847 = vadd.f32 0.0, %v3846
        %3848 = vmatmul.bf16.gmra.mxu0 %v3735
        %v3849 = vpop.f32.mrf.mxu0
        %v3850 = vadd.f32 0.0, %v3849
        %v3851 = vpop.f32.mrf.mxu0
        %v3852 = vadd.f32 0.0, %v3851
        %3853 = vmatmul.bf16.gmra.mxu0 %v3738
        %v3854 = vpop.f32.mrf.mxu0
        %v3855 = vadd.f32 0.0, %v3854
        %v3856 = vpop.f32.mrf.mxu0
        %v3857 = vadd.f32 0.0, %v3856
        %3858 = vmatmul.bf16.gmra.mxu0 %v3741
        %v3859 = vpop.f32.mrf.mxu0
        %v3860 = vadd.f32 0.0, %v3859
        %v3861 = vpop.f32.mrf.mxu0
        %v3862 = vadd.f32 0.0, %v3861
        %3863 = vmatmul.bf16.gmra.mxu0 %v3744
        %v3864 = vpop.f32.mrf.mxu0
        %v3865 = vadd.f32 0.0, %v3864
        %v3866 = vpop.f32.mrf.mxu0
        %v3867 = vadd.f32 0.0, %v3866
        %3868 = vmatmul.bf16.gmra.mxu0 %v3747
        %v3869 = vpop.f32.mrf.mxu0
        %v3870 = vadd.f32 0.0, %v3869
        %v3871 = vpop.f32.mrf.mxu0
        %v3872 = vadd.f32 0.0, %v3871
        %3873 = vmatmul.bf16.gmra.mxu0 %v3750
        %v3874 = vpop.f32.mrf.mxu0
        %v3875 = vadd.f32 0.0, %v3874
        %v3876 = vpop.f32.mrf.mxu0
        %v3877 = vadd.f32 0.0, %v3876
        %3878 = vmatmul.bf16.gmra.mxu0 %v3753
        %v3879 = vpop.f32.mrf.mxu0
        %v3880 = vadd.f32 0.0, %v3879
        %v3881 = vpop.f32.mrf.mxu0
        %v3882 = vadd.f32 0.0, %v3881
        %3883 = vmatmul.bf16.gmra.mxu0 %v3756
        %v3884 = vpop.f32.mrf.mxu0
        %v3885 = vadd.f32 0.0, %v3884
        %v3886 = vpop.f32.mrf.mxu0
        %v3887 = vadd.f32 0.0, %v3886
        %3888 = vmatmul.bf16.gmra.mxu0 %v3759
        %v3889 = vpop.f32.mrf.mxu0
        %v3890 = vadd.f32 0.0, %v3889
        %v3891 = vpop.f32.mrf.mxu0
        %v3892 = vadd.f32 0.0, %v3891
        %3893 = vmatmul.bf16.gmra.mxu0 %v3762
        %v3894 = vpop.f32.mrf.mxu0
        %v3895 = vadd.f32 0.0, %v3894
        %v3896 = vpop.f32.mrf.mxu0
        %v3897 = vadd.f32 0.0, %v3896
        %3898 = vmatmul.bf16.gmra.mxu0 %v3765
        %v3899 = vpop.f32.mrf.mxu0
        %v3900 = vadd.f32 0.0, %v3899
        %v3901 = vpop.f32.mrf.mxu0
        %v3902 = vadd.f32 0.0, %v3901
        %3903 = vmatmul.bf16.gmra.mxu0 %v3768
        %v3904 = vpop.f32.mrf.mxu0
        %v3905 = vadd.f32 0.0, %v3904
        %v3906 = vpop.f32.mrf.mxu0
        %v3907 = vadd.f32 0.0, %v3906
        %3908 = vmatmul.bf16.gmra.mxu0 %v3771
        %v3909 = vpop.f32.mrf.mxu0
        %v3910 = vadd.f32 0.0, %v3909
        %v3911 = vpop.f32.mrf.mxu0
        %v3912 = vadd.f32 0.0, %v3911
        %3913 = vmatmul.bf16.gmra.mxu0 %v3774
        %v3914 = vpop.f32.mrf.mxu0
        %v3915 = vadd.f32 0.0, %v3914
        %v3916 = vpop.f32.mrf.mxu0
        %v3917 = vadd.f32 0.0, %v3916
        %3918 = vmatmul.bf16.gmra.mxu0 %v3777
        %v3919 = vpop.f32.mrf.mxu0
        %v3920 = vadd.f32 0.0, %v3919
        %v3921 = vpop.f32.mrf.mxu0
        %v3922 = vadd.f32 0.0, %v3921
        %3923 = vmatmul.bf16.gmra.mxu0 %v3780
        %v3924 = vpop.f32.mrf.mxu0
        %v3925 = vadd.f32 0.0, %v3924
        %v3926 = vpop.f32.mrf.mxu0
        %v3927 = vadd.f32 0.0, %v3926
        %3928 = vmatmul.bf16.gmra.mxu0 %v3783
        %v3929 = vpop.f32.mrf.mxu0
        %v3930 = vadd.f32 0.0, %v3929
        %v3931 = vpop.f32.mrf.mxu0
        %v3932 = vadd.f32 0.0, %v3931
        %3933 = vmatmul.bf16.gmra.mxu0 %v3786
        %v3934 = vpop.f32.mrf.mxu0
        %v3935 = vadd.f32 0.0, %v3934
        %v3936 = vpop.f32.mrf.mxu0
        %v3937 = vadd.f32 0.0, %v3936
        %3938 = vmatmul.bf16.gmra.mxu0 %v3789
        %v3939 = vpop.f32.mrf.mxu0
        %v3940 = vadd.f32 0.0, %v3939
        %v3941 = vpop.f32.mrf.mxu0
        %v3942 = vadd.f32 0.0, %v3941
        %3943 = vmatmul.bf16.gmra.mxu0 %v3792
        %v3944 = vpop.f32.mrf.mxu0
        %v3945 = vadd.f32 0.0, %v3944
        %v3946 = vpop.f32.mrf.mxu0
        %v3947 = vadd.f32 0.0, %v3946
        %3948 = vmatmul.bf16.gmra.mxu0 %v3795
        %v3949 = vpop.f32.mrf.mxu0
        %v3950 = vadd.f32 0.0, %v3949
        %v3951 = vpop.f32.mrf.mxu0
        %v3952 = vadd.f32 0.0, %v3951
        %3953 = vmatmul.bf16.gmra.mxu0 %v3798
        %v3954 = vpop.f32.mrf.mxu0
        %v3955 = vadd.f32 0.0, %v3954
        %v3956 = vpop.f32.mrf.mxu0
        %v3957 = vadd.f32 0.0, %v3956
        %3958 = vmatmul.bf16.gmra.mxu0 %v3801
        %v3959 = vpop.f32.mrf.mxu0
        %v3960 = vadd.f32 0.0, %v3959
        %v3961 = vpop.f32.mrf.mxu0
        %v3962 = vadd.f32 0.0, %v3961
        %3963 = vmatmul.bf16.gmra.mxu0 %v3804
        %v3964 = vpop.f32.mrf.mxu0
        %v3965 = vadd.f32 0.0, %v3964
        %v3966 = vpop.f32.mrf.mxu0
        %v3967 = vadd.f32 0.0, %v3966
        %3968 = vmatmul.bf16.gmra.mxu0 %v3807
        %v3969 = vpop.f32.mrf.mxu0
        %v3970 = vadd.f32 0.0, %v3969
        %v3971 = vpop.f32.mrf.mxu0
        %v3972 = vadd.f32 0.0, %v3971
        %3973 = vmatmul.bf16.gmra.mxu0 %v3810
        %v3974 = vpop.f32.mrf.mxu0
        %v3975 = vadd.f32 0.0, %v3974
        %v3976 = vpop.f32.mrf.mxu0
        %v3977 = vadd.f32 0.0, %v3976
        %3978 = vmatmul.bf16.gmra.mxu0 %v3813
        %v3979 = vpop.f32.mrf.mxu0
        %v3980 = vadd.f32 0.0, %v3979
        %v3981 = vpop.f32.mrf.mxu0
        %v3982 = vadd.f32 0.0, %v3981
        %3983 = vmatmul.bf16.gmra.mxu0 %v3816
        %v3984 = vpop.f32.mrf.mxu0
        %v3985 = vadd.f32 0.0, %v3984
        %v3986 = vpop.f32.mrf.mxu0
        %v3987 = vadd.f32 0.0, %v3986
        %3988 = vmatmul.bf16.gmra.mxu0 %v3819
        %v3989 = vpop.f32.mrf.mxu0
        %v3990 = vadd.f32 0.0, %v3989
        %v3991 = vpop.f32.mrf.mxu0
        %v3992 = vadd.f32 0.0, %v3991
        %3993 = vmatmul.bf16.gmra.mxu0 %v3822
        %v3994 = vpop.f32.mrf.mxu0
        %v3995 = vadd.f32 0.0, %v3994
        %v3996 = vpop.f32.mrf.mxu0
        %v3997 = vadd.f32 0.0, %v3996
        %3998 = vmatmul.bf16.gmra.mxu0 %v3825
        %v3999 = vpop.f32.mrf.mxu0
        %v4000 = vadd.f32 0.0, %v3999
        %v4001 = vpop.f32.mrf.mxu0
        %4002 = vdwg.mxu0
        %v4003 = vadd.f32 %v3595, %v3840
        %v4004 = vadd.f32 %v3596, %v3842
        %v4005 = vadd.f32 %v3597, %v3845
        %v4006 = vadd.f32 %v3598, %v3847
        %v4007 = vadd.f32 %v3599, %v3850
        %v4008 = vadd.f32 %v3600, %v3852
        %v4009 = vadd.f32 %v3601, %v3855
        %v4010 = vadd.f32 %v3602, %v3857
        %v4011 = vadd.f32 %v3603, %v3860
        %v4012 = vadd.f32 %v3604, %v3862
        %v4013 = vadd.f32 %v3605, %v3865
        %v4014 = vadd.f32 %v3606, %v3867
        %v4015 = vadd.f32 %v3607, %v3870
        %v4016 = vadd.f32 %v3608, %v3872
        %v4017 = vadd.f32 %v3609, %v3875
        %v4018 = vadd.f32 %v3610, %v3877
        %v4019 = vadd.f32 %v3611, %v3880
        %v4020 = vadd.f32 %v3612, %v3882
        %v4021 = vadd.f32 %v3613, %v3885
        %v4022 = vadd.f32 %v3614, %v3887
        %v4023 = vadd.f32 %v3615, %v3890
        %v4024 = vadd.f32 %v3616, %v3892
        %v4025 = vadd.f32 %v3617, %v3895
        %v4026 = vadd.f32 %v3618, %v3897
        %v4027 = vadd.f32 %v3619, %v3900
        %v4028 = vadd.f32 %v3620, %v3902
        %v4029 = vadd.f32 %v3621, %v3905
        %v4030 = vadd.f32 %v3622, %v3907
        %v4031 = vadd.f32 %v3623, %v3910
        %v4032 = vadd.f32 %v3624, %v3912
        %v4033 = vadd.f32 %v3625, %v3915
        %v4034 = vadd.f32 %v3626, %v3917
        %v4035 = vadd.f32 %v3627, %v3920
        %v4036 = vadd.f32 %v3628, %v3922
        %v4037 = vadd.f32 %v3629, %v3925
        %v4038 = vadd.f32 %v3630, %v3927
        %v4039 = vadd.f32 %v3631, %v3930
        %v4040 = vadd.f32 %v3632, %v3932
        %v4041 = vadd.f32 %v3633, %v3935
        %v4042 = vadd.f32 %v3634, %v3937
        %v4043 = vadd.f32 %v3635, %v3940
        %v4044 = vadd.f32 %v3636, %v3942
        %v4045 = vadd.f32 %v3637, %v3945
        %v4046 = vadd.f32 %v3638, %v3947
        %v4047 = vadd.f32 %v3639, %v3950
        %v4048 = vadd.f32 %v3640, %v3952
        %v4049 = vadd.f32 %v3641, %v3955
        %v4050 = vadd.f32 %v3642, %v3957
        %v4051 = vadd.f32 %v3643, %v3960
        %v4052 = vadd.f32 %v3644, %v3962
        %v4053 = vadd.f32 %v3645, %v3965
        %v4054 = vadd.f32 %v3646, %v3967
        %v4055 = vadd.f32 %v3647, %v3970
        %v4056 = vadd.f32 %v3648, %v3972
        %v4057 = vadd.f32 %v3649, %v3975
        %v4058 = vadd.f32 %v3650, %v3977
        %v4059 = vadd.f32 %v3651, %v3980
        %v4060 = vadd.f32 %v3652, %v3982
        %v4061 = vadd.f32 %v3653, %v3985
        %v4062 = vadd.f32 %v3654, %v3987
        %v4063 = vadd.f32 %v3655, %v3990
        %v4064 = vadd.f32 %v3656, %v3992
        %v4065 = vadd.f32 %v3657, %v3995
        %v4066 = vadd.f32 %v3658, %v3997
        %v4067 = vadd.f32 %v3659, %v4000
        %v4068 = vpack.c.bf16 %v4003, %v4003
        %v4069 = vpack.c.bf16 %v4004, %v4004
        %v4070 = vpack.c.bf16 %v4005, %v4005
        %v4071 = vpack.c.bf16 %v4006, %v4006
        %v4072 = vpack.c.bf16 %v4007, %v4007
        %v4073 = vpack.c.bf16 %v4008, %v4008
        %v4074 = vpack.c.bf16 %v4009, %v4009
        %v4075 = vpack.c.bf16 %v4010, %v4010
        %v4076 = vpack.c.bf16 %v4011, %v4011
        %v4077 = vpack.c.bf16 %v4012, %v4012
        %v4078 = vpack.c.bf16 %v4013, %v4013
        %v4079 = vpack.c.bf16 %v4014, %v4014
        %v4080 = vpack.c.bf16 %v4015, %v4015
        %v4081 = vpack.c.bf16 %v4016, %v4016
        %v4082 = vpack.c.bf16 %v4017, %v4017
        %v4083 = vpack.c.bf16 %v4018, %v4018
        %v4084 = vpack.c.bf16 %v4019, %v4019
        %v4085 = vpack.c.bf16 %v4020, %v4020
        %v4086 = vpack.c.bf16 %v4021, %v4021
        %v4087 = vpack.c.bf16 %v4022, %v4022
        %v4088 = vpack.c.bf16 %v4023, %v4023
        %v4089 = vpack.c.bf16 %v4024, %v4024
        %v4090 = vpack.c.bf16 %v4025, %v4025
        %v4091 = vpack.c.bf16 %v4026, %v4026
        %v4092 = vpack.c.bf16 %v4027, %v4027
        %v4093 = vpack.c.bf16 %v4028, %v4028
        %v4094 = vpack.c.bf16 %v4029, %v4029
        %v4095 = vpack.c.bf16 %v4030, %v4030
        %v4096 = vpack.c.bf16 %v4031, %v4031
        %v4097 = vpack.c.bf16 %v4032, %v4032
        %v4098 = vpack.c.bf16 %v4033, %v4033
        %v4099 = vpack.c.bf16 %v4034, %v4034
        %v4100 = vpack.c.bf16 %v4035, %v4035
        %v4101 = vpack.c.bf16 %v4036, %v4036
        %v4102 = vpack.c.bf16 %v4037, %v4037
        %v4103 = vpack.c.bf16 %v4038, %v4038
        %v4104 = vpack.c.bf16 %v4039, %v4039
        %v4105 = vpack.c.bf16 %v4040, %v4040
        %v4106 = vpack.c.bf16 %v4041, %v4041
        %v4107 = vpack.c.bf16 %v4042, %v4042
        %v4108 = vpack.c.bf16 %v4043, %v4043
        %v4109 = vpack.c.bf16 %v4044, %v4044
        %v4110 = vpack.c.bf16 %v4045, %v4045
        %v4111 = vpack.c.bf16 %v4046, %v4046
        %v4112 = vpack.c.bf16 %v4047, %v4047
        %v4113 = vpack.c.bf16 %v4048, %v4048
        %v4114 = vpack.c.bf16 %v4049, %v4049
        %v4115 = vpack.c.bf16 %v4050, %v4050
        %v4116 = vpack.c.bf16 %v4051, %v4051
        %v4117 = vpack.c.bf16 %v4052, %v4052
        %v4118 = vpack.c.bf16 %v4053, %v4053
        %v4119 = vpack.c.bf16 %v4054, %v4054
        %v4120 = vpack.c.bf16 %v4055, %v4055
        %v4121 = vpack.c.bf16 %v4056, %v4056
        %v4122 = vpack.c.bf16 %v4057, %v4057
        %v4123 = vpack.c.bf16 %v4058, %v4058
        %v4124 = vpack.c.bf16 %v4059, %v4059
        %v4125 = vpack.c.bf16 %v4060, %v4060
        %v4126 = vpack.c.bf16 %v4061, %v4061
        %v4127 = vpack.c.bf16 %v4062, %v4062
        %v4128 = vpack.c.bf16 %v4063, %v4063
        %v4129 = vpack.c.bf16 %v4064, %v4064
        %v4130 = vpack.c.bf16 %v4065, %v4065
        %v4131 = vpack.c.bf16 %v4066, %v4066
        %v4132 = vpack.c.bf16 %v4067, %v4067
        %4133 = vst [vmem:[%s303] sm:$0xf] %v4068
        %4134 = vst [vmem:[%s303 + $0x4] sm:$0xf] %v4069
        %4135 = vst [vmem:[%s303 + $0x8] sm:$0xf] %v4070
        %4136 = vst [vmem:[%s303 + $0xc] sm:$0xf] %v4071
        %4137 = vst [vmem:[%s303 + $0x10] sm:$0xf] %v4072
        %4138 = vst [vmem:[%s303 + $0x14] sm:$0xf] %v4073
        %4139 = vst [vmem:[%s303 + $0x18] sm:$0xf] %v4074
        %4140 = vst [vmem:[%s303 + $0x1c] sm:$0xf] %v4075
        %4141 = vst [vmem:[%s303 + $0x20] sm:$0xf] %v4076
        %4142 = vst [vmem:[%s303 + $0x24] sm:$0xf] %v4077
        %4143 = vst [vmem:[%s303 + $0x28] sm:$0xf] %v4078
        %4144 = vst [vmem:[%s303 + $0x2c] sm:$0xf] %v4079
        %4145 = vst [vmem:[%s303 + $0x30] sm:$0xf] %v4080
        %4146 = vst [vmem:[%s303 + $0x34] sm:$0xf] %v4081
        %4147 = vst [vmem:[%s303 + $0x38] sm:$0xf] %v4082
        %4148 = vst [vmem:[%s303 + $0x3c] sm:$0xf] %v4083
        %4149 = vst [vmem:[%s303 + $0x40] sm:$0xf] %v4084
        %4150 = vst [vmem:[%s303 + $0x44] sm:$0xf] %v4085
        %4151 = vst [vmem:[%s303 + $0x48] sm:$0xf] %v4086
        %4152 = vst [vmem:[%s303 + $0x4c] sm:$0xf] %v4087
        %4153 = vst [vmem:[%s303 + $0x50] sm:$0xf] %v4088
        %4154 = vst [vmem:[%s303 + $0x54] sm:$0xf] %v4089
        %4155 = vst [vmem:[%s303 + $0x58] sm:$0xf] %v4090
        %4156 = vst [vmem:[%s303 + $0x5c] sm:$0xf] %v4091
        %4157 = vst [vmem:[%s303 + $0x60] sm:$0xf] %v4092
        %4158 = vst [vmem:[%s303 + $0x64] sm:$0xf] %v4093
        %4159 = vst [vmem:[%s303 + $0x68] sm:$0xf] %v4094
        %4160 = vst [vmem:[%s303 + $0x6c] sm:$0xf] %v4095
        %4161 = vst [vmem:[%s303 + $0x70] sm:$0xf] %v4096
        %4162 = vst [vmem:[%s303 + $0x74] sm:$0xf] %v4097
        %4163 = vst [vmem:[%s303 + $0x78] sm:$0xf] %v4098
        %4164 = vst [vmem:[%s303 + $0x7c] sm:$0xf] %v4099
        %4165 = vst [vmem:[%s303 + $0x80] sm:$0xf] %v4100
        %4166 = vst [vmem:[%s303 + $0x84] sm:$0xf] %v4101
        %4167 = vst [vmem:[%s303 + $0x88] sm:$0xf] %v4102
        %4168 = vst [vmem:[%s303 + $0x8c] sm:$0xf] %v4103
        %4169 = vst [vmem:[%s303 + $0x90] sm:$0xf] %v4104
        %4170 = vst [vmem:[%s303 + $0x94] sm:$0xf] %v4105
        %4171 = vst [vmem:[%s303 + $0x98] sm:$0xf] %v4106
        %4172 = vst [vmem:[%s303 + $0x9c] sm:$0xf] %v4107
        %4173 = vst [vmem:[%s303 + $0xa0] sm:$0xf] %v4108
        %4174 = vst [vmem:[%s303 + $0xa4] sm:$0xf] %v4109
        %4175 = vst [vmem:[%s303 + $0xa8] sm:$0xf] %v4110
        %4176 = vst [vmem:[%s303 + $0xac] sm:$0xf] %v4111
        %4177 = vst [vmem:[%s303 + $0xb0] sm:$0xf] %v4112
        %4178 = vst [vmem:[%s303 + $0xb4] sm:$0xf] %v4113
        %4179 = vst [vmem:[%s303 + $0xb8] sm:$0xf] %v4114
        %4180 = vst [vmem:[%s303 + $0xbc] sm:$0xf] %v4115
        %4181 = vst [vmem:[%s303 + $0xc0] sm:$0xf] %v4116
        %4182 = vst [vmem:[%s303 + $0xc4] sm:$0xf] %v4117
        %4183 = vst [vmem:[%s303 + $0xc8] sm:$0xf] %v4118
        %4184 = vst [vmem:[%s303 + $0xcc] sm:$0xf] %v4119
        %4185 = vst [vmem:[%s303 + $0xd0] sm:$0xf] %v4120
        %4186 = vst [vmem:[%s303 + $0xd4] sm:$0xf] %v4121
        %4187 = vst [vmem:[%s303 + $0xd8] sm:$0xf] %v4122
        %4188 = vst [vmem:[%s303 + $0xdc] sm:$0xf] %v4123
        %4189 = vst [vmem:[%s303 + $0xe0] sm:$0xf] %v4124
        %4190 = vst [vmem:[%s303 + $0xe4] sm:$0xf] %v4125
        %4191 = vst [vmem:[%s303 + $0xe8] sm:$0xf] %v4126
        %4192 = vst [vmem:[%s303 + $0xec] sm:$0xf] %v4127
        %4193 = vst [vmem:[%s303 + $0xf0] sm:$0xf] %v4128
        %4194 = vst [vmem:[%s303 + $0xf4] sm:$0xf] %v4129
        %4195 = vst [vmem:[%s303 + $0xf8] sm:$0xf] %v4130
        %4196 = vst [vmem:[%s303 + $0xfc] sm:$0xf] %v4131
        %4197 = vst [vmem:[%s303 + $0x100] sm:$0xf] %v4132
        %v4198 = vld [vmem:[%s344] sm:$0xff]
        %v4199 = vld [vmem:[%s344 + $0x8] sm:$0xff]
        %v4200 = vld [vmem:[%s344 + $0x10] sm:$0xff]
        %v4201 = vld [vmem:[%s344 + $0x18] sm:$0xff]
        %v4202 = vld [vmem:[%s344 + $0x20] sm:$0xff]
        %v4203 = vld [vmem:[%s344 + $0x28] sm:$0xff]
        %v4204 = vld [vmem:[%s344 + $0x30] sm:$0xff]
        %v4205 = vld [vmem:[%s344 + $0x38] sm:$0xff]
        %v4206 = vld [vmem:[%s344 + $0x40] sm:$0xff]
        %v4207 = vld [vmem:[%s344 + $0x48] sm:$0xff]
        %v4208 = vld [vmem:[%s344 + $0x50] sm:$0xff]
        %v4209 = vld [vmem:[%s344 + $0x58] sm:$0xff]
        %v4210 = vld [vmem:[%s344 + $0x60] sm:$0xff]
        %v4211 = vld [vmem:[%s344 + $0x68] sm:$0xff]
        %v4212 = vld [vmem:[%s344 + $0x70] sm:$0xff]
        %v4213 = vld [vmem:[%s344 + $0x78] sm:$0xff]
        %v4214 = vld [vmem:[%s344 + $0x80] sm:$0xff]
        %v4215 = vld [vmem:[%s344 + $0x88] sm:$0xff]
        %v4216 = vld [vmem:[%s344 + $0x90] sm:$0xff]
        %v4217 = vld [vmem:[%s344 + $0x98] sm:$0xff]
        %v4218 = vld [vmem:[%s344 + $0xa0] sm:$0xff]
        %v4219 = vld [vmem:[%s344 + $0xa8] sm:$0xff]
        %v4220 = vld [vmem:[%s344 + $0xb0] sm:$0xff]
        %v4221 = vld [vmem:[%s344 + $0xb8] sm:$0xff]
        %v4222 = vld [vmem:[%s344 + $0xc0] sm:$0xff]
        %v4223 = vld [vmem:[%s344 + $0xc8] sm:$0xff]
        %v4224 = vld [vmem:[%s344 + $0xd0] sm:$0xff]
        %v4225 = vld [vmem:[%s344 + $0xd8] sm:$0xff]
        %v4226 = vld [vmem:[%s344 + $0xe0] sm:$0xff]
        %v4227 = vld [vmem:[%s344 + $0xe8] sm:$0xff]
        %v4228 = vld [vmem:[%s344 + $0xf0] sm:$0xff]
        %v4229 = vld [vmem:[%s344 + $0xf8] sm:$0xff]
        %v4230 = vld [vmem:[%s344 + $0x100] sm:$0xff]
        %v4231 = vld [vmem:[%s344 + $0x108] sm:$0xff]
        %v4232 = vld [vmem:[%s344 + $0x110] sm:$0xff]
        %v4233 = vld [vmem:[%s344 + $0x118] sm:$0xff]
        %v4234 = vld [vmem:[%s344 + $0x120] sm:$0xff]
        %v4235 = vld [vmem:[%s344 + $0x128] sm:$0xff]
        %v4236 = vld [vmem:[%s344 + $0x130] sm:$0xff]
        %v4237 = vld [vmem:[%s344 + $0x138] sm:$0xff]
        %v4238 = vld [vmem:[%s344 + $0x140] sm:$0xff]
        %v4239 = vld [vmem:[%s344 + $0x148] sm:$0xff]
        %v4240 = vld [vmem:[%s344 + $0x150] sm:$0xff]
        %v4241 = vld [vmem:[%s344 + $0x158] sm:$0xff]
        %v4242 = vld [vmem:[%s344 + $0x160] sm:$0xff]
        %v4243 = vld [vmem:[%s344 + $0x168] sm:$0xff]
        %v4244 = vld [vmem:[%s344 + $0x170] sm:$0xff]
        %v4245 = vld [vmem:[%s344 + $0x178] sm:$0xff]
        %v4246 = vld [vmem:[%s344 + $0x180] sm:$0xff]
        %v4247 = vld [vmem:[%s344 + $0x188] sm:$0xff]
        %v4248 = vld [vmem:[%s344 + $0x190] sm:$0xff]
        %v4249 = vld [vmem:[%s344 + $0x198] sm:$0xff]
        %v4250 = vld [vmem:[%s344 + $0x1a0] sm:$0xff]
        %v4251 = vld [vmem:[%s344 + $0x1a8] sm:$0xff]
        %v4252 = vld [vmem:[%s344 + $0x1b0] sm:$0xff]
        %v4253 = vld [vmem:[%s344 + $0x1b8] sm:$0xff]
        %v4254 = vld [vmem:[%s344 + $0x1c0] sm:$0xff]
        %v4255 = vld [vmem:[%s344 + $0x1c8] sm:$0xff]
        %v4256 = vld [vmem:[%s344 + $0x1d0] sm:$0xff]
        %v4257 = vld [vmem:[%s344 + $0x1d8] sm:$0xff]
        %v4258 = vld [vmem:[%s344 + $0x1e0] sm:$0xff]
        %v4259 = vld [vmem:[%s344 + $0x1e8] sm:$0xff]
        %v4260 = vld [vmem:[%s344 + $0x1f0] sm:$0xff]
        %v4261 = vld [vmem:[%s344 + $0x1f8] sm:$0xff]
        %v4262 = vld [vmem:[%s344 + $0x200] sm:$0xff]
        %4264 = vset.pattern.permute.xlu0 0
        %4265 = vperm.xlu0 %4264, %v4198
        %v4266 = vpop.permute.xlu0 %4265
        %4269 = vset.pattern.permute.xlu0 0
        %4270 = vperm.xlu0 %4269, %v4199
        %v4271 = vpop.permute.xlu0 %4270
        %4274 = vset.pattern.permute.xlu0 0
        %4275 = vperm.xlu0 %4274, %v4200
        %v4276 = vpop.permute.xlu0 %4275
        %4279 = vset.pattern.permute.xlu0 0
        %4280 = vperm.xlu0 %4279, %v4201
        %v4281 = vpop.permute.xlu0 %4280
        %4284 = vset.pattern.permute.xlu0 0
        %4285 = vperm.xlu0 %4284, %v4202
        %v4286 = vpop.permute.xlu0 %4285
        %4289 = vset.pattern.permute.xlu0 0
        %4290 = vperm.xlu0 %4289, %v4203
        %v4291 = vpop.permute.xlu0 %4290
        %4294 = vset.pattern.permute.xlu0 0
        %4295 = vperm.xlu0 %4294, %v4204
        %v4296 = vpop.permute.xlu0 %4295
        %4299 = vset.pattern.permute.xlu0 0
        %4300 = vperm.xlu0 %4299, %v4205
        %v4301 = vpop.permute.xlu0 %4300
        %4304 = vset.pattern.permute.xlu0 0
        %4305 = vperm.xlu0 %4304, %v4206
        %v4306 = vpop.permute.xlu0 %4305
        %4309 = vset.pattern.permute.xlu0 0
        %4310 = vperm.xlu0 %4309, %v4207
        %v4311 = vpop.permute.xlu0 %4310
        %4314 = vset.pattern.permute.xlu0 0
        %4315 = vperm.xlu0 %4314, %v4208
        %v4316 = vpop.permute.xlu0 %4315
        %4319 = vset.pattern.permute.xlu0 0
        %4320 = vperm.xlu0 %4319, %v4209
        %v4321 = vpop.permute.xlu0 %4320
        %4324 = vset.pattern.permute.xlu0 0
        %4325 = vperm.xlu0 %4324, %v4210
        %v4326 = vpop.permute.xlu0 %4325
        %4329 = vset.pattern.permute.xlu0 0
        %4330 = vperm.xlu0 %4329, %v4211
        %v4331 = vpop.permute.xlu0 %4330
        %4334 = vset.pattern.permute.xlu0 0
        %4335 = vperm.xlu0 %4334, %v4212
        %v4336 = vpop.permute.xlu0 %4335
        %4339 = vset.pattern.permute.xlu0 0
        %4340 = vperm.xlu0 %4339, %v4213
        %v4341 = vpop.permute.xlu0 %4340
        %4344 = vset.pattern.permute.xlu0 0
        %4345 = vperm.xlu0 %4344, %v4214
        %v4346 = vpop.permute.xlu0 %4345
        %4349 = vset.pattern.permute.xlu0 0
        %4350 = vperm.xlu0 %4349, %v4215
        %v4351 = vpop.permute.xlu0 %4350
        %4354 = vset.pattern.permute.xlu0 0
        %4355 = vperm.xlu0 %4354, %v4216
        %v4356 = vpop.permute.xlu0 %4355
        %4359 = vset.pattern.permute.xlu0 0
        %4360 = vperm.xlu0 %4359, %v4217
        %v4361 = vpop.permute.xlu0 %4360
        %4364 = vset.pattern.permute.xlu0 0
        %4365 = vperm.xlu0 %4364, %v4218
        %v4366 = vpop.permute.xlu0 %4365
        %4369 = vset.pattern.permute.xlu0 0
        %4370 = vperm.xlu0 %4369, %v4219
        %v4371 = vpop.permute.xlu0 %4370
        %4374 = vset.pattern.permute.xlu0 0
        %4375 = vperm.xlu0 %4374, %v4220
        %v4376 = vpop.permute.xlu0 %4375
        %4379 = vset.pattern.permute.xlu0 0
        %4380 = vperm.xlu0 %4379, %v4221
        %v4381 = vpop.permute.xlu0 %4380
        %4384 = vset.pattern.permute.xlu0 0
        %4385 = vperm.xlu0 %4384, %v4222
        %v4386 = vpop.permute.xlu0 %4385
        %4389 = vset.pattern.permute.xlu0 0
        %4390 = vperm.xlu0 %4389, %v4223
        %v4391 = vpop.permute.xlu0 %4390
        %4394 = vset.pattern.permute.xlu0 0
        %4395 = vperm.xlu0 %4394, %v4224
        %v4396 = vpop.permute.xlu0 %4395
        %4399 = vset.pattern.permute.xlu0 0
        %4400 = vperm.xlu0 %4399, %v4225
        %v4401 = vpop.permute.xlu0 %4400
        %4404 = vset.pattern.permute.xlu0 0
        %4405 = vperm.xlu0 %4404, %v4226
        %v4406 = vpop.permute.xlu0 %4405
        %4409 = vset.pattern.permute.xlu0 0
        %4410 = vperm.xlu0 %4409, %v4227
        %v4411 = vpop.permute.xlu0 %4410
        %4414 = vset.pattern.permute.xlu0 0
        %4415 = vperm.xlu0 %4414, %v4228
        %v4416 = vpop.permute.xlu0 %4415
        %4419 = vset.pattern.permute.xlu0 0
        %4420 = vperm.xlu0 %4419, %v4229
        %v4421 = vpop.permute.xlu0 %4420
        %4424 = vset.pattern.permute.xlu0 0
        %4425 = vperm.xlu0 %4424, %v4230
        %v4426 = vpop.permute.xlu0 %4425
        %4429 = vset.pattern.permute.xlu0 0
        %4430 = vperm.xlu0 %4429, %v4231
        %v4431 = vpop.permute.xlu0 %4430
        %4434 = vset.pattern.permute.xlu0 0
        %4435 = vperm.xlu0 %4434, %v4232
        %v4436 = vpop.permute.xlu0 %4435
        %4439 = vset.pattern.permute.xlu0 0
        %4440 = vperm.xlu0 %4439, %v4233
        %v4441 = vpop.permute.xlu0 %4440
        %4444 = vset.pattern.permute.xlu0 0
        %4445 = vperm.xlu0 %4444, %v4234
        %v4446 = vpop.permute.xlu0 %4445
        %4449 = vset.pattern.permute.xlu0 0
        %4450 = vperm.xlu0 %4449, %v4235
        %v4451 = vpop.permute.xlu0 %4450
        %4454 = vset.pattern.permute.xlu0 0
        %4455 = vperm.xlu0 %4454, %v4236
        %v4456 = vpop.permute.xlu0 %4455
        %4459 = vset.pattern.permute.xlu0 0
        %4460 = vperm.xlu0 %4459, %v4237
        %v4461 = vpop.permute.xlu0 %4460
        %4464 = vset.pattern.permute.xlu0 0
        %4465 = vperm.xlu0 %4464, %v4238
        %v4466 = vpop.permute.xlu0 %4465
        %4469 = vset.pattern.permute.xlu0 0
        %4470 = vperm.xlu0 %4469, %v4239
        %v4471 = vpop.permute.xlu0 %4470
        %4474 = vset.pattern.permute.xlu0 0
        %4475 = vperm.xlu0 %4474, %v4240
        %v4476 = vpop.permute.xlu0 %4475
        %4479 = vset.pattern.permute.xlu0 0
        %4480 = vperm.xlu0 %4479, %v4241
        %v4481 = vpop.permute.xlu0 %4480
        %4484 = vset.pattern.permute.xlu0 0
        %4485 = vperm.xlu0 %4484, %v4242
        %v4486 = vpop.permute.xlu0 %4485
        %4489 = vset.pattern.permute.xlu0 0
        %4490 = vperm.xlu0 %4489, %v4243
        %v4491 = vpop.permute.xlu0 %4490
        %4494 = vset.pattern.permute.xlu0 0
        %4495 = vperm.xlu0 %4494, %v4244
        %v4496 = vpop.permute.xlu0 %4495
        %4499 = vset.pattern.permute.xlu0 0
        %4500 = vperm.xlu0 %4499, %v4245
        %v4501 = vpop.permute.xlu0 %4500
        %4504 = vset.pattern.permute.xlu0 0
        %4505 = vperm.xlu0 %4504, %v4246
        %v4506 = vpop.permute.xlu0 %4505
        %4509 = vset.pattern.permute.xlu0 0
        %4510 = vperm.xlu0 %4509, %v4247
        %v4511 = vpop.permute.xlu0 %4510
        %4514 = vset.pattern.permute.xlu0 0
        %4515 = vperm.xlu0 %4514, %v4248
        %v4516 = vpop.permute.xlu0 %4515
        %4519 = vset.pattern.permute.xlu0 0
        %4520 = vperm.xlu0 %4519, %v4249
        %v4521 = vpop.permute.xlu0 %4520
        %4524 = vset.pattern.permute.xlu0 0
        %4525 = vperm.xlu0 %4524, %v4250
        %v4526 = vpop.permute.xlu0 %4525
        %4529 = vset.pattern.permute.xlu0 0
        %4530 = vperm.xlu0 %4529, %v4251
        %v4531 = vpop.permute.xlu0 %4530
        %4534 = vset.pattern.permute.xlu0 0
        %4535 = vperm.xlu0 %4534, %v4252
        %v4536 = vpop.permute.xlu0 %4535
        %4539 = vset.pattern.permute.xlu0 0
        %4540 = vperm.xlu0 %4539, %v4253
        %v4541 = vpop.permute.xlu0 %4540
        %4544 = vset.pattern.permute.xlu0 0
        %4545 = vperm.xlu0 %4544, %v4254
        %v4546 = vpop.permute.xlu0 %4545
        %4549 = vset.pattern.permute.xlu0 0
        %4550 = vperm.xlu0 %4549, %v4255
        %v4551 = vpop.permute.xlu0 %4550
        %4554 = vset.pattern.permute.xlu0 0
        %4555 = vperm.xlu0 %4554, %v4256
        %v4556 = vpop.permute.xlu0 %4555
        %4559 = vset.pattern.permute.xlu0 0
        %4560 = vperm.xlu0 %4559, %v4257
        %v4561 = vpop.permute.xlu0 %4560
        %4564 = vset.pattern.permute.xlu0 0
        %4565 = vperm.xlu0 %4564, %v4258
        %v4566 = vpop.permute.xlu0 %4565
        %4569 = vset.pattern.permute.xlu0 0
        %4570 = vperm.xlu0 %4569, %v4259
        %v4571 = vpop.permute.xlu0 %4570
        %4574 = vset.pattern.permute.xlu0 0
        %4575 = vperm.xlu0 %4574, %v4260
        %v4576 = vpop.permute.xlu0 %4575
        %4579 = vset.pattern.permute.xlu0 0
        %4580 = vperm.xlu0 %4579, %v4261
        %v4581 = vpop.permute.xlu0 %4580
        %4584 = vset.pattern.permute.xlu0 0
        %4585 = vperm.xlu0 %4584, %v4262
        %v4586 = vpop.permute.xlu0 %4585
        %v4588 = vmul.f32 %v4003, %v4266
        %v4589 = vmul.f32 %v4004, %v4271
        %v4590 = vmul.f32 %v4005, %v4276
        %v4591 = vmul.f32 %v4006, %v4281
        %v4592 = vmul.f32 %v4007, %v4286
        %v4593 = vmul.f32 %v4008, %v4291
        %v4594 = vmul.f32 %v4009, %v4296
        %v4595 = vmul.f32 %v4010, %v4301
        %v4596 = vmul.f32 %v4011, %v4306
        %v4597 = vmul.f32 %v4012, %v4311
        %v4598 = vmul.f32 %v4013, %v4316
        %v4599 = vmul.f32 %v4014, %v4321
        %v4600 = vmul.f32 %v4015, %v4326
        %v4601 = vmul.f32 %v4016, %v4331
        %v4602 = vmul.f32 %v4017, %v4336
        %v4603 = vmul.f32 %v4018, %v4341
        %v4604 = vmul.f32 %v4019, %v4346
        %v4605 = vmul.f32 %v4020, %v4351
        %v4606 = vmul.f32 %v4021, %v4356
        %v4607 = vmul.f32 %v4022, %v4361
        %v4608 = vmul.f32 %v4023, %v4366
        %v4609 = vmul.f32 %v4024, %v4371
        %v4610 = vmul.f32 %v4025, %v4376
        %v4611 = vmul.f32 %v4026, %v4381
        %v4612 = vmul.f32 %v4027, %v4386
        %v4613 = vmul.f32 %v4028, %v4391
        %v4614 = vmul.f32 %v4029, %v4396
        %v4615 = vmul.f32 %v4030, %v4401
        %v4616 = vmul.f32 %v4031, %v4406
        %v4617 = vmul.f32 %v4032, %v4411
        %v4618 = vmul.f32 %v4033, %v4416
        %v4619 = vmul.f32 %v4034, %v4421
        %v4620 = vmul.f32 %v4035, %v4426
        %v4621 = vmul.f32 %v4036, %v4431
        %v4622 = vmul.f32 %v4037, %v4436
        %v4623 = vmul.f32 %v4038, %v4441
        %v4624 = vmul.f32 %v4039, %v4446
        %v4625 = vmul.f32 %v4040, %v4451
        %v4626 = vmul.f32 %v4041, %v4456
        %v4627 = vmul.f32 %v4042, %v4461
        %v4628 = vmul.f32 %v4043, %v4466
        %v4629 = vmul.f32 %v4044, %v4471
        %v4630 = vmul.f32 %v4045, %v4476
        %v4631 = vmul.f32 %v4046, %v4481
        %v4632 = vmul.f32 %v4047, %v4486
        %v4633 = vmul.f32 %v4048, %v4491
        %v4634 = vmul.f32 %v4049, %v4496
        %v4635 = vmul.f32 %v4050, %v4501
        %v4636 = vmul.f32 %v4051, %v4506
        %v4637 = vmul.f32 %v4052, %v4511
        %v4638 = vmul.f32 %v4053, %v4516
        %v4639 = vmul.f32 %v4054, %v4521
        %v4640 = vmul.f32 %v4055, %v4526
        %v4641 = vmul.f32 %v4056, %v4531
        %v4642 = vmul.f32 %v4057, %v4536
        %v4643 = vmul.f32 %v4058, %v4541
        %v4644 = vmul.f32 %v4059, %v4546
        %v4645 = vmul.f32 %v4060, %v4551
        %v4646 = vmul.f32 %v4061, %v4556
        %v4647 = vmul.f32 %v4062, %v4561
        %v4648 = vmul.f32 %v4063, %v4566
        %v4649 = vmul.f32 %v4064, %v4571
        %v4650 = vmul.f32 %v4065, %v4576
        %v4651 = vmul.f32 %v4066, %v4581
        %v4652 = vmul.f32 %v4067, %v4586
        %v4653 = vadd.f32 %v4588, %v4589
        %v4654 = vadd.f32 %v4653, %v4590
        %v4655 = vadd.f32 %v4654, %v4591
        %v4656 = vadd.f32 %v4655, %v4592
        %v4657 = vadd.f32 %v4656, %v4593
        %v4658 = vadd.f32 %v4657, %v4594
        %v4659 = vadd.f32 %v4658, %v4595
        %v4660 = vadd.f32 %v4659, %v4596
        %v4661 = vadd.f32 %v4660, %v4597
        %v4662 = vadd.f32 %v4661, %v4598
        %v4663 = vadd.f32 %v4662, %v4599
        %v4664 = vadd.f32 %v4663, %v4600
        %v4665 = vadd.f32 %v4664, %v4601
        %v4666 = vadd.f32 %v4665, %v4602
        %v4667 = vadd.f32 %v4666, %v4603
        %v4668 = vadd.f32 %v4667, %v4604
        %v4669 = vadd.f32 %v4668, %v4605
        %v4670 = vadd.f32 %v4669, %v4606
        %v4671 = vadd.f32 %v4670, %v4607
        %v4672 = vadd.f32 %v4671, %v4608
        %v4673 = vadd.f32 %v4672, %v4609
        %v4674 = vadd.f32 %v4673, %v4610
        %v4675 = vadd.f32 %v4674, %v4611
        %v4676 = vadd.f32 %v4675, %v4612
        %v4677 = vadd.f32 %v4676, %v4613
        %v4678 = vadd.f32 %v4677, %v4614
        %v4679 = vadd.f32 %v4678, %v4615
        %v4680 = vadd.f32 %v4679, %v4616
        %v4681 = vadd.f32 %v4680, %v4617
        %v4682 = vadd.f32 %v4681, %v4618
        %v4683 = vadd.f32 %v4682, %v4619
        %v4684 = vadd.f32 %v4683, %v4620
        %v4685 = vadd.f32 %v4684, %v4621
        %v4686 = vadd.f32 %v4685, %v4622
        %v4687 = vadd.f32 %v4686, %v4623
        %v4688 = vadd.f32 %v4687, %v4624
        %v4689 = vadd.f32 %v4688, %v4625
        %v4690 = vadd.f32 %v4689, %v4626
        %v4691 = vadd.f32 %v4690, %v4627
        %v4692 = vadd.f32 %v4691, %v4628
        %v4693 = vadd.f32 %v4692, %v4629
        %v4694 = vadd.f32 %v4693, %v4630
        %v4695 = vadd.f32 %v4694, %v4631
        %v4696 = vadd.f32 %v4695, %v4632
        %v4697 = vadd.f32 %v4696, %v4633
        %v4698 = vadd.f32 %v4697, %v4634
        %v4699 = vadd.f32 %v4698, %v4635
        %v4700 = vadd.f32 %v4699, %v4636
        %v4701 = vadd.f32 %v4700, %v4637
        %v4702 = vadd.f32 %v4701, %v4638
        %v4703 = vadd.f32 %v4702, %v4639
        %v4704 = vadd.f32 %v4703, %v4640
        %v4705 = vadd.f32 %v4704, %v4641
        %v4706 = vadd.f32 %v4705, %v4642
        %v4707 = vadd.f32 %v4706, %v4643
        %v4708 = vadd.f32 %v4707, %v4644
        %v4709 = vadd.f32 %v4708, %v4645
        %v4710 = vadd.f32 %v4709, %v4646
        %v4711 = vadd.f32 %v4710, %v4647
        %v4712 = vadd.f32 %v4711, %v4648
        %v4713 = vadd.f32 %v4712, %v4649
        %v4714 = vadd.f32 %v4713, %v4650
        %v4715 = vadd.f32 %v4714, %v4651
        %v4716 = vadd.f32 %v4715, %v4652
        %v4717 = vrot.slane %v4716, 4
        %v4718 = vadd.f32 %v4716, %v4717
        %v4719 = vrot.slane %v4718, 2
        %v4720 = vadd.f32 %v4718, %v4719
        %v4721 = vrot.slane %v4720, 1
        %v4722 = vadd.f32 %v4720, %v4721
        %4723 = vst [vmem:[%s309] sm:$0x1] %v4722
        %v4724 = vmul.f32 %v4588, %v4003
        %v4725 = vmul.f32 %v4589, %v4004
        %v4726 = vmul.f32 %v4590, %v4005
        %v4727 = vmul.f32 %v4591, %v4006
        %v4728 = vmul.f32 %v4592, %v4007
        %v4729 = vmul.f32 %v4593, %v4008
        %v4730 = vmul.f32 %v4594, %v4009
        %v4731 = vmul.f32 %v4595, %v4010
        %v4732 = vmul.f32 %v4596, %v4011
        %v4733 = vmul.f32 %v4597, %v4012
        %v4734 = vmul.f32 %v4598, %v4013
        %v4735 = vmul.f32 %v4599, %v4014
        %v4736 = vmul.f32 %v4600, %v4015
        %v4737 = vmul.f32 %v4601, %v4016
        %v4738 = vmul.f32 %v4602, %v4017
        %v4739 = vmul.f32 %v4603, %v4018
        %v4740 = vmul.f32 %v4604, %v4019
        %v4741 = vmul.f32 %v4605, %v4020
        %v4742 = vmul.f32 %v4606, %v4021
        %v4743 = vmul.f32 %v4607, %v4022
        %v4744 = vmul.f32 %v4608, %v4023
        %v4745 = vmul.f32 %v4609, %v4024
        %v4746 = vmul.f32 %v4610, %v4025
        %v4747 = vmul.f32 %v4611, %v4026
        %v4748 = vmul.f32 %v4612, %v4027
        %v4749 = vmul.f32 %v4613, %v4028
        %v4750 = vmul.f32 %v4614, %v4029
        %v4751 = vmul.f32 %v4615, %v4030
        %v4752 = vmul.f32 %v4616, %v4031
        %v4753 = vmul.f32 %v4617, %v4032
        %v4754 = vmul.f32 %v4618, %v4033
        %v4755 = vmul.f32 %v4619, %v4034
        %v4756 = vmul.f32 %v4620, %v4035
        %v4757 = vmul.f32 %v4621, %v4036
        %v4758 = vmul.f32 %v4622, %v4037
        %v4759 = vmul.f32 %v4623, %v4038
        %v4760 = vmul.f32 %v4624, %v4039
        %v4761 = vmul.f32 %v4625, %v4040
        %v4762 = vmul.f32 %v4626, %v4041
        %v4763 = vmul.f32 %v4627, %v4042
        %v4764 = vmul.f32 %v4628, %v4043
        %v4765 = vmul.f32 %v4629, %v4044
        %v4766 = vmul.f32 %v4630, %v4045
        %v4767 = vmul.f32 %v4631, %v4046
        %v4768 = vmul.f32 %v4632, %v4047
        %v4769 = vmul.f32 %v4633, %v4048
        %v4770 = vmul.f32 %v4634, %v4049
        %v4771 = vmul.f32 %v4635, %v4050
        %v4772 = vmul.f32 %v4636, %v4051
        %v4773 = vmul.f32 %v4637, %v4052
        %v4774 = vmul.f32 %v4638, %v4053
        %v4775 = vmul.f32 %v4639, %v4054
        %v4776 = vmul.f32 %v4640, %v4055
        %v4777 = vmul.f32 %v4641, %v4056
        %v4778 = vmul.f32 %v4642, %v4057
        %v4779 = vmul.f32 %v4643, %v4058
        %v4780 = vmul.f32 %v4644, %v4059
        %v4781 = vmul.f32 %v4645, %v4060
        %v4782 = vmul.f32 %v4646, %v4061
        %v4783 = vmul.f32 %v4647, %v4062
        %v4784 = vmul.f32 %v4648, %v4063
        %v4785 = vmul.f32 %v4649, %v4064
        %v4786 = vmul.f32 %v4650, %v4065
        %v4787 = vmul.f32 %v4651, %v4066
        %v4788 = vmul.f32 %v4652, %v4067
        %v4789 = vadd.f32 %v4724, %v4725
        %v4790 = vadd.f32 %v4789, %v4726
        %v4791 = vadd.f32 %v4790, %v4727
        %v4792 = vadd.f32 %v4791, %v4728
        %v4793 = vadd.f32 %v4792, %v4729
        %v4794 = vadd.f32 %v4793, %v4730
        %v4795 = vadd.f32 %v4794, %v4731
        %v4796 = vadd.f32 %v4795, %v4732
        %v4797 = vadd.f32 %v4796, %v4733
        %v4798 = vadd.f32 %v4797, %v4734
        %v4799 = vadd.f32 %v4798, %v4735
        %v4800 = vadd.f32 %v4799, %v4736
        %v4801 = vadd.f32 %v4800, %v4737
        %v4802 = vadd.f32 %v4801, %v4738
        %v4803 = vadd.f32 %v4802, %v4739
        %v4804 = vadd.f32 %v4803, %v4740
        %v4805 = vadd.f32 %v4804, %v4741
        %v4806 = vadd.f32 %v4805, %v4742
        %v4807 = vadd.f32 %v4806, %v4743
        %v4808 = vadd.f32 %v4807, %v4744
        %v4809 = vadd.f32 %v4808, %v4745
        %v4810 = vadd.f32 %v4809, %v4746
        %v4811 = vadd.f32 %v4810, %v4747
        %v4812 = vadd.f32 %v4811, %v4748
        %v4813 = vadd.f32 %v4812, %v4749
        %v4814 = vadd.f32 %v4813, %v4750
        %v4815 = vadd.f32 %v4814, %v4751
        %v4816 = vadd.f32 %v4815, %v4752
        %v4817 = vadd.f32 %v4816, %v4753
        %v4818 = vadd.f32 %v4817, %v4754
        %v4819 = vadd.f32 %v4818, %v4755
        %v4820 = vadd.f32 %v4819, %v4756
        %v4821 = vadd.f32 %v4820, %v4757
        %v4822 = vadd.f32 %v4821, %v4758
        %v4823 = vadd.f32 %v4822, %v4759
        %v4824 = vadd.f32 %v4823, %v4760
        %v4825 = vadd.f32 %v4824, %v4761
        %v4826 = vadd.f32 %v4825, %v4762
        %v4827 = vadd.f32 %v4826, %v4763
        %v4828 = vadd.f32 %v4827, %v4764
        %v4829 = vadd.f32 %v4828, %v4765
        %v4830 = vadd.f32 %v4829, %v4766
        %v4831 = vadd.f32 %v4830, %v4767
        %v4832 = vadd.f32 %v4831, %v4768
        %v4833 = vadd.f32 %v4832, %v4769
        %v4834 = vadd.f32 %v4833, %v4770
        %v4835 = vadd.f32 %v4834, %v4771
        %v4836 = vadd.f32 %v4835, %v4772
        %v4837 = vadd.f32 %v4836, %v4773
        %v4838 = vadd.f32 %v4837, %v4774
        %v4839 = vadd.f32 %v4838, %v4775
        %v4840 = vadd.f32 %v4839, %v4776
        %v4841 = vadd.f32 %v4840, %v4777
        %v4842 = vadd.f32 %v4841, %v4778
        %v4843 = vadd.f32 %v4842, %v4779
        %v4844 = vadd.f32 %v4843, %v4780
        %v4845 = vadd.f32 %v4844, %v4781
        %v4846 = vadd.f32 %v4845, %v4782
        %v4847 = vadd.f32 %v4846, %v4783
        %v4848 = vadd.f32 %v4847, %v4784
        %v4849 = vadd.f32 %v4848, %v4785
        %v4850 = vadd.f32 %v4849, %v4786
        %v4851 = vadd.f32 %v4850, %v4787
        %v4852 = vadd.f32 %v4851, %v4788
        %v4853 = vrot.slane %v4852, 4
        %v4854 = vadd.f32 %v4852, %v4853
        %v4855 = vrot.slane %v4854, 2
        %v4856 = vadd.f32 %v4854, %v4855
        %v4857 = vrot.slane %v4856, 1
        %v4858 = vadd.f32 %v4856, %v4857
        %4859 = vst [vmem:[%s315] sm:$0x1] %v4858
        %s4860 = sand.u32 %s135, 1
        %s4861 = scalar_lea.sflag [#allocation3], %s4860
        %s4862 = sand.u32 %s135, 1
        %s4863 = smul.addr %s4862, 260
        %s4864 = scalar_lea.vmem [#allocation2], %s4863
        %s4865 = sand.u32 %s24, 1
        %s4866 = scalar_lea.sflag [#allocation5], %s4865
        %s4867 = sand.u32 %s161, 1
        %s4868 = scalar_lea.vmem [#allocation4], %s4867
        %s4869 = sand.u32 %s24, 1
        %s4870 = scalar_lea.sflag [#allocation5], %s4869
        %s4871 = sand.u32 %s187, 1
        %s4872 = scalar_lea.vmem [#allocation6], %s4871
        // Predicated region
        $region37: #{tpu_custom_call.1} parent=35 // pred_check
          %p4873 = pneg %p145
        $region38: #{tpu_custom_call.1} parent=35 // pred_check_branch
          %4875 = sbr.rel (%p4873) target = $region40
        $region39: #{tpu_custom_call.1} parent=35 // pred_region
          %s4876 = smul.u32 65, %s24
          %4878 = vsyncadd %s4861, 0
          %s4879 = smul.addr %s4876, 4
          %s4880 = scalar_lea.hbm %s4, %s4879
          %s4881 = sshll.u32 %s4864, 4
          %s4882 = int_to_ptr.vmem [resolvable:$true] %s4881
          %s4883 = sshll.u32 %s4880, 4
          %s4884 = int_to_ptr.hbm [resolvable:$true] %s4883
          %4889 = dma.vmem_to_hbm [thread:$0]  %s4882, 4160, %s4884, %s4861, 64, 64, 4
        $region40: #{tpu_custom_call.1} parent=35 // pred_fallthru
          _
        // Predicated region
        $region41: #{tpu_custom_call.1} parent=35 // pred_check
          %p4890 = pneg %p171
        $region42: #{tpu_custom_call.1} parent=35 // pred_check_branch
          %4892 = sbr.rel (%p4890) target = $region44
        $region43: #{tpu_custom_call.1} parent=35 // pred_region
          %4894 = vsyncadd %s4866, 0
          %s4895 = scalar_lea.hbm %s5, %s24
          %s4897 = sshll.u32 %s4868, 4
          %s4898 = int_to_ptr.vmem [resolvable:$true] %s4897
          %s4899 = sshll.u32 %s4895, 4
          %s4900 = int_to_ptr.hbm [resolvable:$true] %s4899
          %4902 = dma.vmem_to_hbm [thread:$0]  %s4898, 16, %s4900, %s4866
        $region44: #{tpu_custom_call.1} parent=35 // pred_fallthru
          _
        // Predicated region
        $region45: #{tpu_custom_call.1} parent=35 // pred_check
          %p4903 = pneg %p197
        $region46: #{tpu_custom_call.1} parent=35 // pred_check_branch
          %4905 = sbr.rel (%p4903) target = $region48
        $region47: #{tpu_custom_call.1} parent=35 // pred_region
          %4907 = vsyncadd %s4870, 0
          %s4908 = scalar_lea.hbm %s6, %s24
          %s4910 = sshll.u32 %s4872, 4
          %s4911 = int_to_ptr.vmem [resolvable:$true] %s4910
          %s4912 = sshll.u32 %s4908, 4
          %s4913 = int_to_ptr.hbm [resolvable:$true] %s4912
          %4915 = dma.vmem_to_hbm [thread:$0]  %s4911, 16, %s4913, %s4870
        $region48: #{tpu_custom_call.1} parent=35 // pred_fallthru
          _
      $region36: #{tpu_custom_call.1} parent=5 // pred_fallthru
        _
      %p4916 = scmp.le.s32.totalorder 2, %s19
      // Predicated region
      $region49: #{tpu_custom_call.1} parent=5 // pred_check
        %p4917 = pneg %p4916
      $region50: #{tpu_custom_call.1} parent=5 // pred_check_branch
        %4919 = sbr.rel (%p4917) target = $region52
      $region51: #{tpu_custom_call.1} parent=5 // pred_region
        %s4920 = ssub.s32 %s19, 2
        // Predicated region
        $region53: #{tpu_custom_call.1} parent=51 // pred_check
          %p4921 = pneg %p151
        $region54: #{tpu_custom_call.1} parent=51 // pred_check_branch
          %4923 = sbr.rel (%p4921) target = $region56
        $region55: #{tpu_custom_call.1} parent=51 // pred_region
          %s4924 = sand.u32 %s136, 1
          %s4925 = scalar_lea.sflag [#allocation3], %s4924
          %s4926 = sand.u32 %s136, 1
          %s4927 = smul.addr %s4926, 260
          %s4928 = scalar_lea.vmem [#allocation2], %s4927
          %4930 = dma.done %s4925, 4160
        $region56: #{tpu_custom_call.1} parent=51 // pred_fallthru
          _
        // Predicated region
        $region57: #{tpu_custom_call.1} parent=51 // pred_check
          %p4931 = pneg %p177
        $region58: #{tpu_custom_call.1} parent=51 // pred_check_branch
          %4933 = sbr.rel (%p4931) target = $region60
        $region59: #{tpu_custom_call.1} parent=51 // pred_region
          %s4934 = sand.u32 %s25, 1
          %s4935 = scalar_lea.sflag [#allocation5], %s4934
          %s4936 = sand.u32 %s162, 1
          %s4937 = scalar_lea.vmem [#allocation4], %s4936
          %4939 = dma.done %s4935, 16
        $region60: #{tpu_custom_call.1} parent=51 // pred_fallthru
          _
        // Predicated region
        $region61: #{tpu_custom_call.1} parent=51 // pred_check
          %p4940 = pneg %p203
        $region62: #{tpu_custom_call.1} parent=51 // pred_check_branch
          %4942 = sbr.rel (%p4940) target = $region64
        $region63: #{tpu_custom_call.1} parent=51 // pred_region
          %s4943 = sand.u32 %s25, 1
          %s4944 = scalar_lea.sflag [#allocation5], %s4943
          %s4945 = sand.u32 %s188, 1
          %s4946 = scalar_lea.vmem [#allocation6], %s4945
          %4948 = dma.done %s4944, 16
        $region64: #{tpu_custom_call.1} parent=51 // pred_fallthru
          _
      $region52: #{tpu_custom_call.1} parent=5 // pred_fallthru
        _
    $region6: #{tpu_custom_call.1} parent=1 // loop_footer
      %s23 = sadd.s32 1, %s19
    $region7: #{tpu_custom_call.1} parent=1 // loop_footer_branch
      %18 = sbr.rel target = $region3
    $region8: #{tpu_custom_call.1} parent=1 // loop_exit
      _
    %4949 = vsyncpa [#allocation3], 1
    %s4950 = scalar_lea.sflag [#allocation3], 1
    %4951 = vsyncpa %s4950, 1
    %4952 = vsyncpa [#allocation5], 1
    %s4953 = scalar_lea.sflag [#allocation5], 1
    %4954 = vsyncpa %s4953, 1

</llo_original>
